<compile_context>
chip_gen: v6e
topology: v6e:2x2x1
jax: 0.10.0
libtpu: 0.0.40
codegen_flags: <defaults>
</compile_context>

<pallas_src>
import functools

import jax
import jax.numpy as jnp
from jax import lax
from jax.experimental import pallas as pl
from jax.experimental.pallas import tpu as pltpu

DIM_W = 5                      # 5x5 one-hot diff masks -> 25 pure shifts
NUM_SHIFTS = DIM_W * DIM_W     # 25
PAD = DIM_W // 2               # 2
LAMBDA = 2.0
PARAM_SIGMA = 12.0
CHAN_PAD = 128                 # lane width; all channel dims padded to this


def _round_up(x, m):
    return (x + m - 1) // m * m


# -----------------------------------------------------------------------------
# Per-layer tiling geometry (all Python ints, trace-time)
# -----------------------------------------------------------------------------
class _Geom:
    def __init__(self, h, w):
        self.h, self.w = h, w
        self.wp = _round_up(w + 2 * PAD, 8)           # flattened row width
        self.mq = h * self.wp                         # true output rows
        # Row-block size: big enough to amortize the 4-image-row halo, small
        # enough to bound VMEM; always a multiple of 8 and >=2 blocks if we can.
        tq_cap = max(512, min(1024, _round_up(4 * self.wp, 8)))
        self.tq = min(tq_cap, max(8, _round_up(pl.cdiv(self.mq, 2), 8)))
        self.mq_pad = _round_up(self.mq, self.tq)
        self.nblocks = self.mq_pad // self.tq
        halo = 4 * self.wp + 2 * PAD                  # largest shift offset
        self.tw = _round_up(self.tq + halo, 8)        # DMA window rows
        self.rows = self.mq_pad - self.tq + self.tw   # flattened input rows
        self.center = 2 * self.wp + 2                 # un-shifted pixel offset


def _pad_flatten(x_img, g):
    """(N,H,W,C) bf16 -> (N, g.rows, C): zero-pad spatially (2 top/left, enough
    bottom/right for the 8-aligned row width), flatten the rows, and add
    front/back slack so every shifted window slice stays in bounds."""
    n, h, w, c = x_img.shape
    xp = jnp.pad(x_img, ((0, 0), (PAD, PAD), (PAD, g.wp - w - PAD), (0, 0)))
    xf = xp.reshape(n, (h + 2 * PAD) * g.wp, c)
    back = g.rows - ((h + 2 * PAD) * g.wp + PAD)
    return jnp.pad(xf, ((0, 0), (PAD, back), (0, 0)))


# -----------------------------------------------------------------------------
# Pallas kernel: one INRF layer, grid = (batch, output-row-block)
#   x_hbm  : (N, rows, 128) bf16, left in HBM; a (tw, 128) window is manually
#            DMA'd per step into a double-buffered VMEM scratch (prefetched).
#   w_ref  : (25*128, 128)  bf16 weights, shifts stacked along K, VMEM-resident.
#   res_ref: (1, tq, 128)   bf16 streamed residual block (optional).
#   o_ref  : (1, tq, 128)   bf16 output row block.
# -----------------------------------------------------------------------------
def _inrf_kernel(*refs, tq, tw, wp, cinp, lam, relu_out, fuse_res):
    if fuse_res:
        x_hbm, w_ref, res_ref, o_ref, xwin, sub_buf, sem = refs
    else:
        x_hbm, w_ref, o_ref, xwin, sub_buf, sem = refs
        res_ref = None

    b = pl.program_id(0)
    i = pl.program_id(1)
    nb = pl.num_programs(1)
    slot = lax.rem(i, 2)

    def window_copy(blk, s):
        start = pl.multiple_of(blk * tq, 8)
        return pltpu.make_async_copy(
            x_hbm.at[b, pl.ds(start, tw), :], xwin.at[s], sem.at[s])

    @pl.when(i == 0)                       # prime the first window of image b
    def _():
        window_copy(i, slot).start()

    window_copy(i, slot).wait()            # current window is ready

    @pl.when(i + 1 < nb)                   # prefetch the next row-block
    def _():
        window_copy(i + 1, 1 - slot).start()

    xw = xwin.at[slot]
    center = 2 * wp + 2
    xc = xw[pl.ds(center, tq), :].astype(jnp.float32)
    xc_l = lam * xc

    # Stage the 25 INRF "sub" operands (sigma==1: sub = xs + lam*relu(xc - xs),
    # rewritten as max(lam*xc + (1-lam)*xs, xs)) into one bf16 buffer so a
    # single K = 25*Cin matmul consumes them at full MXU depth.
    for k in range(NUM_SHIFTS):
        r, c = divmod(k, DIM_W)
        off = r * wp + c
        if off == center:                  # xs == xc  ->  sub == xc
            sub = xc
        else:
            xs = xw[pl.ds(off, tq), :].astype(jnp.float32)
            if lam == 2.0:
                sub = jnp.maximum(xc_l - xs, xs)
            else:
                sub = jnp.maximum(xc_l + (1.0 - lam) * xs, xs)
        sub_buf[:, k * cinp:(k + 1) * cinp] = sub.astype(jnp.bfloat16)

    acc = jnp.dot(sub_buf[...], w_ref[...], preferred_element_type=jnp.float32)

    if fuse_res:                           # fused residual add (ResidualBlock)
        acc = acc + res_ref[0].astype(jnp.float32)
    if relu_out:                           # fused inter-INRF ReLU
        acc = jnp.maximum(acc, 0.0)
    o_ref[0] = acc.astype(o_ref.dtype)


# -----------------------------------------------------------------------------
# Host-side wrappers
# -----------------------------------------------------------------------------
def _inrf_from_flat(xf, w_flat, g, h, w, cout, *, relu_out=False,
                    res_flat=None, lam=LAMBDA):
    """One INRF layer from the padded+flattened bf16 input. Returns NHWC bf16."""
    n, rows, cinp = xf.shape
    assert rows == g.rows and cinp == CHAN_PAD
    coutp = w_flat.shape[-1]
    assert w_flat.shape == (NUM_SHIFTS * cinp, coutp)

    in_specs = [
        pl.BlockSpec(memory_space=pl.ANY),                          # xf in HBM
        pl.BlockSpec((NUM_SHIFTS * cinp, coutp), lambda b, i: (0, 0)),
    ]
    args = [xf, w_flat]
    fuse_res = res_flat is not None
    if fuse_res:
        assert res_flat.shape == (n, g.mq_pad, coutp)
        in_specs.append(pl.BlockSpec((1, g.tq, coutp), lambda b, i: (b, i, 0)))
        args.append(res_flat)

    kernel = functools.partial(
        _inrf_kernel, tq=g.tq, tw=g.tw, wp=g.wp, cinp=cinp, lam=lam,
        relu_out=relu_out, fuse_res=fuse_res)

    # VMEM budget: window double-buffer + staging + weights + streamed blocks.
    vmem_bytes = (2 * g.tw * cinp * 2 +
                  g.tq * NUM_SHIFTS * cinp * 2 +
                  2 * NUM_SHIFTS * cinp * coutp * 2 +
                  (2 + (2 if fuse_res else 0)) * g.tq * coutp * 2 +
                  g.tq * coutp * 4)
    vmem_limit = min(max(2 * vmem_bytes + (8 << 20), 24 << 20), 48 << 20)

    out = pl.pallas_call(
        kernel,
        out_shape=jax.ShapeDtypeStruct((n, g.mq_pad, coutp), jnp.bfloat16),
        grid_spec=pltpu.PrefetchScalarGridSpec(
            num_scalar_prefetch=0,
            grid=(n, g.nblocks),
            in_specs=in_specs,
            out_specs=pl.BlockSpec((1, g.tq, coutp), lambda b, i: (b, i, 0)),
            scratch_shapes=[
                pltpu.VMEM((2, g.tw, cinp), jnp.bfloat16),       # halo window
                pltpu.VMEM((g.tq, NUM_SHIFTS * cinp), jnp.bfloat16),  # staging
                pltpu.SemaphoreType.DMA((2,)),
            ]),
        compiler_params=pltpu.CompilerParams(
            dimension_semantics=("parallel", "arbitrary"),
            vmem_limit_bytes=vmem_limit),
    )(*args)

    # (N, mq_pad, 128) -> crop pad rows, pad columns and padded out-channels.
    out = out[:, :g.mq, :].reshape(n, h, g.wp, coutp)
    return out[:, :, PAD:PAD + w, :cout]


def _inrf_layer(x_img, w_flat, cout, relu_out=False):
    _, h, w, _ = x_img.shape
    g = _Geom(h, w)
    return _inrf_from_flat(_pad_flatten(x_img, g), w_flat, g, h, w, cout,
                           relu_out=relu_out)


def _residual_block(x_img, w_a, w_b):
    n, h, w, _ = x_img.shape
    g = _Geom(h, w)
    xf_in = _pad_flatten(x_img, g)
    # inrf1 with the inter-INRF ReLU fused into the epilogue
    y = _inrf_from_flat(xf_in, w_a, g, h, w, CHAN_PAD, relu_out=True)
    # inrf2 with the residual add fused; the residual is streamed per block
    # from the block input restricted to the output-row window.
    res = xf_in[:, g.center:g.center + g.mq_pad, :]
    return _inrf_from_flat(_pad_flatten(y, g), w_b, g, h, w, CHAN_PAD,
                           res_flat=res)


def _upsample2(x):
    # nn.Upsample(scale_factor=2, mode='nearest') in NHWC (bf16).
    # TODO(synk): fuse into the consuming INRF's window DMA instead of
    # materializing the 4x activation in HBM.
    return jnp.repeat(jnp.repeat(x, 2, axis=1), 2, axis=2)


# -----------------------------------------------------------------------------
# Parameters
# -----------------------------------------------------------------------------
# channel specs (Cin, Cout) for the 21 INRF layers, in order of use
_LAYER_SPECS = ([(64, 128)] + [(128, 128)] * 4 + [(128, 128)] +
                [(128, 128)] * 4 + [(128, 128)] + [(128, 128)] * 4 +
                [(128, 128)] + [(128, 128)] * 4 + [(128, 3)])


def init_raw_params(key):
    """Raw f32 weights mirroring torch.randn(25, Cout, Cin, 1, 1)/paramSigma.
    (self.g and self.pandQ are unused in the forward pass and not created.)"""
    keys = jax.random.split(key, len(_LAYER_SPECS))
    return [jax.random.normal(k, (NUM_SHIFTS, co, ci), jnp.float32) / PARAM_SIGMA
            for k, (ci, co) in zip(keys, _LAYER_SPECS)]


def _pack_weight(w_pt):
    """(25, Cout, Cin) f32 -> (25*CinP, CoutP) bf16: channel dims padded to
    128 lanes, shifts stacked along the contraction axis."""
    kk, cout, cin = w_pt.shape
    assert kk == NUM_SHIFTS
    cinp = _round_up(cin, CHAN_PAD)
    coutp = _round_up(cout, CHAN_PAD)
    wt = jnp.transpose(w_pt, (0, 2, 1))                      # (25, Cin, Cout)
    wt = jnp.pad(wt, ((0, 0), (0, cinp - cin), (0, coutp - cout)))
    return wt.reshape(NUM_SHIFTS * cinp, coutp).astype(jnp.bfloat16)


def pack_params(raw_params):
    return [_pack_weight(w) for w in raw_params]


# -----------------------------------------------------------------------------
# Full forward pass
# -----------------------------------------------------------------------------
def synthesis_transformer(img_nchw, params):
    """Forward pass. img_nchw: (N, 64, H, W); returns (N, 3, 16H, 16W) f32."""
    x = jnp.transpose(img_nchw, (0, 2, 3, 1)).astype(jnp.bfloat16)   # NHWC bf16
    cin0 = x.shape[-1]
    if cin0 != CHAN_PAD:   # lane-dense input; the zero channels contribute 0
        x = jnp.pad(x, ((0, 0), (0, 0), (0, 0), (0, CHAN_PAD - cin0)))
    p = params

    x = _inrf_layer(x, p[0], CHAN_PAD)                       # inrf1
    x = _residual_block(x, p[1], p[2])                       # residualBlock1
    x = _residual_block(x, p[3], p[4])                       # residualBlock2
    x = _inrf_layer(_upsample2(x), p[5], CHAN_PAD)           # inrf2
    x = _residual_block(x, p[6], p[7])                       # residualBlock3
    x = _residual_block(x, p[8], p[9])                       # residualBlock4
    x = _inrf_layer(_upsample2(x), p[10], CHAN_PAD)          # inrf3
    x = _residual_block(x, p[11], p[12])                     # residualBlock5
    x = _residual_block(x, p[13], p[14])                     # residualBlock6
    x = _inrf_layer(_upsample2(x), p[15], CHAN_PAD)          # inrf4
    x = _residual_block(x, p[16], p[17])                     # residualBlock7
    x = _residual_block(x, p[18], p[19])                     # residualBlock8
    x = _inrf_layer(_upsample2(x), p[20], 3)                 # inrf5 (Cout=3)

    return jnp.transpose(x.astype(jnp.float32), (0, 3, 1, 2))


# -----------------------------------------------------------------------------
# Pure-JAX references (correctness checks)
# -----------------------------------------------------------------------------
def _inrf_reference(x, w_pt, lam=LAMBDA, cast=None):
    """Single INRF layer (NHWC). `cast` optionally mimics the kernel's bf16
    rounding of the matmul operands / weights."""
    n, h, w, cin = x.shape
    xpad = jnp.pad(x, ((0, 0), (PAD, PAD), (PAD, PAD), (0, 0)))
    wk = w_pt if cast is None else cast(w_pt)
    out = 0.0
    for k in range(NUM_SHIFTS):
        r, c = divmod(k, DIM_W)
        xs = xpad[:, r:r + h, c:c + w, :]
        sub = xs + lam * jnp.maximum(x - xs, 0.0)
        if cast is not None:
            sub = cast(sub)
        out = out + jnp.einsum('nhwc,oc->nhwo', sub, wk[k],
                               precision=jax.lax.Precision.HIGHEST)
    return out


def _forward_reference(img_nchw, raw_params, mimic_bf16=True):
    """Full SynthesisTransformer forward in plain JAX. With mimic_bf16=True the
    same bf16 storage/operand rounding as the kernel path is applied, so the
    comparison isolates kernel correctness from the dtype policy."""
    cast = ((lambda a: a.astype(jnp.bfloat16).astype(jnp.float32))
            if mimic_bf16 else (lambda a: a))
    x = cast(jnp.transpose(img_nchw, (0, 2, 3, 1)).astype(jnp.float32))
    p = raw_params
    opcast = cast if mimic_bf16 else None

    def inrf(v, w, relu=False):
        y = _inrf_reference(v, w, cast=opcast)
        if relu:
            y = jnp.maximum(y, 0.0)
        return cast(y)

    def resblock(v, wa, wb):
        y = inrf(v, wa, relu=True)
        return cast(_inrf_reference(y, wb, cast=opcast) + v)

    def up(v):
        return jnp.repeat(jnp.repeat(v, 2, axis=1), 2, axis=2)

    x = inrf(x, p[0])
    x = resblock(x, p[1], p[2]); x = resblock(x, p[3], p[4])
    x = inrf(up(x), p[5])
    x = resblock(x, p[6], p[7]); x = resblock(x, p[8], p[9])
    x = inrf(up(x), p[10])
    x = resblock(x, p[11], p[12]); x = resblock(x, p[13], p[14])
    x = inrf(up(x), p[15])
    x = resblock(x, p[16], p[17]); x = resblock(x, p[18], p[19])
    x = inrf(up(x), p[20])
    return jnp.transpose(x, (0, 3, 1, 2))


if __name__ == "__main__":
    key = jax.random.PRNGKey(0)
    k_params, k_img, k_w, k_x = jax.random.split(key, 4)

    # --- single-layer spot check vs a pure-f32 reference --------------------
    w_chk = jax.random.normal(k_w, (NUM_SHIFTS, 16, 64), jnp.float32) / PARAM_SIGMA
    x_chk = jax.random.normal(k_x, (2, 4, 4, 64), jnp.float32)
    x_chk_b = jnp.pad(x_chk.astype(jnp.bfloat16),
                      ((0, 0), (0, 0), (0, 0), (0, 64)))
    got = _inrf_layer(x_chk_b, _pack_weight(w_chk), 16).astype(jnp.float32)
    want = _inrf_reference(x_chk, w_chk)
    rel = float(jnp.max(jnp.abs(got - want)) / (jnp.max(jnp.abs(want)) + 1e-6))
    assert rel < 5e-2, f"single-layer mismatch: rel={rel}"

    # --- full forward pass ---------------------------------------------------
    raw = init_raw_params(k_params)
    params = pack_params(raw)
    # small input: batch=2, 64 channels, 4x4 spatial (4x upsample -> 64x64 out)
    img = jax.random.normal(k_img, (2, 64, 4, 4), jnp.float32)

    out = jax.jit(synthesis_transformer)(img, params)
    out = jax.block_until_ready(out)
    assert out.shape == (2, 3, 64, 64), out.shape
    assert bool(jnp.all(jnp.isfinite(out)))

    # Full-forward check (all 21 INRF layers + 4 upsamples) against a
    # dtype-matched pure-JAX reference; generous tolerance absorbs residual
    # bf16 rounding/accumulation-order divergence across the deep stack while
    # still catching any structural / indexing / fusion bug.
    ref = _forward_reference(img, raw, mimic_bf16=True)
    rel_full = float(jnp.max(jnp.abs(out - ref)) /
                     (jnp.max(jnp.abs(ref)) + 1e-6))
    assert rel_full < 0.25, f"full-forward mismatch: rel={rel_full}"

    print("KERNEL_OK")
</pallas_src>

<mosaic_0001>
module attributes {stable_mosaic.version = 11 : i64} {
  func.func @_inrf_kernel(%arg0: i32, %arg1: i32, %arg2: memref<2x72x128xbf16, #tpu.memory_space<any>>, %arg3: memref<3200x128xbf16, #tpu.memory_space<vmem>>, %arg4: memref<1x16x128xbf16, #tpu.memory_space<vmem>>, %arg5: memref<2x56x128xbf16, #tpu.memory_space<vmem>>, %arg6: memref<16x3200xbf16, #tpu.memory_space<vmem>>, %arg7: memref<2x!tpu.dma_semaphore, #tpu.memory_space<semaphore_mem>>) attributes {dimension_semantics = [#tpu.dimension_semantics<parallel>, #tpu.dimension_semantics<arbitrary>], iteration_bounds = array<i64: 2, 2>, scalar_prefetch = 0 : i64, scratch_operands = 3 : i64, tpu.core_type = #tpu.core_type<tc>, window_params = [{}, {pipeline_mode = #tpu.pipeline_mode<synchronous>, transform_indices = @transform_1, window_bounds = array<i64: 3200, 128>}, {transform_indices = @transform_2, window_bounds = array<i64: 1, 16, 128>}]} {
    %c2_i32 = arith.constant 2 : i32
    %0 = arith.remsi %arg1, %c2_i32 : i32
    %c0_i32 = arith.constant 0 : i32
    %1 = arith.cmpi eq, %arg1, %c0_i32 : i32
    %2 = arith.extui %1 : i1 to i32
    %c0_i32_0 = arith.constant 0 : i32
    %3 = arith.cmpi ne, %2, %c0_i32_0 : i32
    scf.if %3 {
      %c16_i32_115 = arith.constant 16 : i32
      %223 = arith.muli %arg1, %c16_i32_115 : i32
      %224 = tpu.assume_multiple %223, 8 : i32
      %c0_i32_116 = arith.constant 0 : i32
      %225 = tpu.memref_slice %arg2[%arg0, %224, %c0_i32_116] : memref<2x72x128xbf16, #tpu.memory_space<any>> -> memref<1x56x128xbf16, #tpu.memory_space<any>>
      %226 = tpu.memref_squeeze %225 : memref<1x56x128xbf16, #tpu.memory_space<any>> -> memref<56x128xbf16, #tpu.memory_space<any>>
      %c0_i32_117 = arith.constant 0 : i32
      %c0_i32_118 = arith.constant 0 : i32
      %227 = tpu.memref_slice %arg5[%0, %c0_i32_117, %c0_i32_118] : memref<2x56x128xbf16, #tpu.memory_space<vmem>> -> memref<1x56x128xbf16, #tpu.memory_space<vmem>>
      %228 = tpu.memref_squeeze %227 : memref<1x56x128xbf16, #tpu.memory_space<vmem>> -> memref<56x128xbf16, #tpu.memory_space<vmem>>
      %229 = tpu.memref_slice %arg7[%0] : memref<2x!tpu.dma_semaphore, #tpu.memory_space<semaphore_mem>> -> memref<1x!tpu.dma_semaphore, #tpu.memory_space<semaphore_mem>>
      %230 = tpu.memref_squeeze %229 : memref<1x!tpu.dma_semaphore, #tpu.memory_space<semaphore_mem>> -> memref<!tpu.dma_semaphore, #tpu.memory_space<semaphore_mem>>
      tpu.enqueue_dma source(%226 : memref<56x128xbf16, #tpu.memory_space<any>>) target(%228 : memref<56x128xbf16, #tpu.memory_space<vmem>>) target_semaphore(%230 : memref<!tpu.dma_semaphore, #tpu.memory_space<semaphore_mem>>)
    } else {
    }
    %c16_i32 = arith.constant 16 : i32
    %4 = arith.muli %arg1, %c16_i32 : i32
    %5 = tpu.assume_multiple %4, 8 : i32
    %c0_i32_1 = arith.constant 0 : i32
    %6 = tpu.memref_slice %arg2[%arg0, %5, %c0_i32_1] : memref<2x72x128xbf16, #tpu.memory_space<any>> -> memref<1x56x128xbf16, #tpu.memory_space<any>>
    %7 = tpu.memref_squeeze %6 : memref<1x56x128xbf16, #tpu.memory_space<any>> -> memref<56x128xbf16, #tpu.memory_space<any>>
    %c0_i32_2 = arith.constant 0 : i32
    %c0_i32_3 = arith.constant 0 : i32
    %8 = tpu.memref_slice %arg5[%0, %c0_i32_2, %c0_i32_3] : memref<2x56x128xbf16, #tpu.memory_space<vmem>> -> memref<1x56x128xbf16, #tpu.memory_space<vmem>>
    %9 = tpu.memref_squeeze %8 : memref<1x56x128xbf16, #tpu.memory_space<vmem>> -> memref<56x128xbf16, #tpu.memory_space<vmem>>
    %10 = tpu.memref_slice %arg7[%0] : memref<2x!tpu.dma_semaphore, #tpu.memory_space<semaphore_mem>> -> memref<1x!tpu.dma_semaphore, #tpu.memory_space<semaphore_mem>>
    %11 = tpu.memref_squeeze %10 : memref<1x!tpu.dma_semaphore, #tpu.memory_space<semaphore_mem>> -> memref<!tpu.dma_semaphore, #tpu.memory_space<semaphore_mem>>
    tpu.wait_dma2 semaphore(%11 : memref<!tpu.dma_semaphore, #tpu.memory_space<semaphore_mem>>) src(%7 : memref<56x128xbf16, #tpu.memory_space<any>>) dst(%9 : memref<56x128xbf16, #tpu.memory_space<vmem>>)
    %c1_i32 = arith.constant 1 : i32
    %12 = arith.addi %arg1, %c1_i32 : i32
    %c2_i32_4 = arith.constant 2 : i32
    %13 = arith.cmpi slt, %12, %c2_i32_4 : i32
    %14 = arith.extui %13 : i1 to i32
    %c0_i32_5 = arith.constant 0 : i32
    %15 = arith.cmpi ne, %14, %c0_i32_5 : i32
    scf.if %15 {
      %c1_i32_115 = arith.constant 1 : i32
      %223 = arith.addi %arg1, %c1_i32_115 : i32
      %c1_i32_116 = arith.constant 1 : i32
      %224 = arith.subi %c1_i32_116, %0 : i32
      %c16_i32_117 = arith.constant 16 : i32
      %225 = arith.muli %223, %c16_i32_117 : i32
      %226 = tpu.assume_multiple %225, 8 : i32
      %c0_i32_118 = arith.constant 0 : i32
      %227 = tpu.memref_slice %arg2[%arg0, %226, %c0_i32_118] : memref<2x72x128xbf16, #tpu.memory_space<any>> -> memref<1x56x128xbf16, #tpu.memory_space<any>>
      %228 = tpu.memref_squeeze %227 : memref<1x56x128xbf16, #tpu.memory_space<any>> -> memref<56x128xbf16, #tpu.memory_space<any>>
      %c0_i32_119 = arith.constant 0 : i32
      %c0_i32_120 = arith.constant 0 : i32
      %229 = tpu.memref_slice %arg5[%224, %c0_i32_119, %c0_i32_120] : memref<2x56x128xbf16, #tpu.memory_space<vmem>> -> memref<1x56x128xbf16, #tpu.memory_space<vmem>>
      %230 = tpu.memref_squeeze %229 : memref<1x56x128xbf16, #tpu.memory_space<vmem>> -> memref<56x128xbf16, #tpu.memory_space<vmem>>
      %231 = tpu.memref_slice %arg7[%224] : memref<2x!tpu.dma_semaphore, #tpu.memory_space<semaphore_mem>> -> memref<1x!tpu.dma_semaphore, #tpu.memory_space<semaphore_mem>>
      %232 = tpu.memref_squeeze %231 : memref<1x!tpu.dma_semaphore, #tpu.memory_space<semaphore_mem>> -> memref<!tpu.dma_semaphore, #tpu.memory_space<semaphore_mem>>
      tpu.enqueue_dma source(%228 : memref<56x128xbf16, #tpu.memory_space<any>>) target(%230 : memref<56x128xbf16, #tpu.memory_space<vmem>>) target_semaphore(%232 : memref<!tpu.dma_semaphore, #tpu.memory_space<semaphore_mem>>)
    } else {
    }
    %c0_i32_6 = arith.constant 0 : i32
    %c0_i32_7 = arith.constant 0 : i32
    %16 = tpu.memref_slice %arg5[%0, %c0_i32_6, %c0_i32_7] : memref<2x56x128xbf16, #tpu.memory_space<vmem>> -> memref<1x56x128xbf16, #tpu.memory_space<vmem>>
    %17 = tpu.memref_squeeze %16 : memref<1x56x128xbf16, #tpu.memory_space<vmem>> -> memref<56x128xbf16, #tpu.memory_space<vmem>>
    %c18 = arith.constant 18 : index
    %c0 = arith.constant 0 : index
    %18 = vector.load %17[%c18, %c0] : memref<56x128xbf16, #tpu.memory_space<vmem>>, vector<16x128xbf16>
    %19 = arith.extf %18 : vector<16x128xbf16> to vector<16x128xf32>
    %cst = arith.constant 2.000000e+00 : f32
    %20 = vector.broadcast %cst : f32 to vector<16x128xf32>
    %21 = arith.mulf %20, %19 : vector<16x128xf32>
    %c0_i32_8 = arith.constant 0 : i32
    %c0_i32_9 = arith.constant 0 : i32
    %22 = tpu.memref_slice %arg5[%0, %c0_i32_8, %c0_i32_9] : memref<2x56x128xbf16, #tpu.memory_space<vmem>> -> memref<1x56x128xbf16, #tpu.memory_space<vmem>>
    %23 = tpu.memref_squeeze %22 : memref<1x56x128xbf16, #tpu.memory_space<vmem>> -> memref<56x128xbf16, #tpu.memory_space<vmem>>
    %c0_10 = arith.constant 0 : index
    %c0_11 = arith.constant 0 : index
    %24 = vector.load %23[%c0_10, %c0_11] : memref<56x128xbf16, #tpu.memory_space<vmem>>, vector<16x128xbf16>
    %25 = arith.extf %24 : vector<16x128xbf16> to vector<16x128xf32>
    %26 = arith.subf %21, %25 : vector<16x128xf32>
    %27 = arith.maximumf %26, %25 : vector<16x128xf32>
    %28 = arith.truncf %27 : vector<16x128xf32> to vector<16x128xbf16>
    %c0_12 = arith.constant 0 : index
    %c0_13 = arith.constant 0 : index
    %29 = vector.load %arg6[%c0_12, %c0_13] : memref<16x3200xbf16, #tpu.memory_space<vmem>>, vector<16x128xbf16>
    tpu.vector_store %arg6[%c0_12, %c0_13], %28 {strides = array<i32>} : memref<16x3200xbf16, #tpu.memory_space<vmem>>, vector<16x128xbf16>,
    %c0_i32_14 = arith.constant 0 : i32
    %c0_i32_15 = arith.constant 0 : i32
    %30 = tpu.memref_slice %arg5[%0, %c0_i32_14, %c0_i32_15] : memref<2x56x128xbf16, #tpu.memory_space<vmem>> -> memref<1x56x128xbf16, #tpu.memory_space<vmem>>
    %31 = tpu.memref_squeeze %30 : memref<1x56x128xbf16, #tpu.memory_space<vmem>> -> memref<56x128xbf16, #tpu.memory_space<vmem>>
    %c1 = arith.constant 1 : index
    %c0_16 = arith.constant 0 : index
    %32 = vector.load %31[%c1, %c0_16] : memref<56x128xbf16, #tpu.memory_space<vmem>>, vector<16x128xbf16>
    %33 = arith.extf %32 : vector<16x128xbf16> to vector<16x128xf32>
    %34 = arith.subf %21, %33 : vector<16x128xf32>
    %35 = arith.maximumf %34, %33 : vector<16x128xf32>
    %36 = arith.truncf %35 : vector<16x128xf32> to vector<16x128xbf16>
    %c0_17 = arith.constant 0 : index
    %c128 = arith.constant 128 : index
    %37 = vector.load %arg6[%c0_17, %c128] : memref<16x3200xbf16, #tpu.memory_space<vmem>>, vector<16x128xbf16>
    tpu.vector_store %arg6[%c0_17, %c128], %36 {strides = array<i32>} : memref<16x3200xbf16, #tpu.memory_space<vmem>>, vector<16x128xbf16>,
    %c0_i32_18 = arith.constant 0 : i32
    %c0_i32_19 = arith.constant 0 : i32
    %38 = tpu.memref_slice %arg5[%0, %c0_i32_18, %c0_i32_19] : memref<2x56x128xbf16, #tpu.memory_space<vmem>> -> memref<1x56x128xbf16, #tpu.memory_space<vmem>>
    %39 = tpu.memref_squeeze %38 : memref<1x56x128xbf16, #tpu.memory_space<vmem>> -> memref<56x128xbf16, #tpu.memory_space<vmem>>
    %c2 = arith.constant 2 : index
    %c0_20 = arith.constant 0 : index
    %40 = vector.load %39[%c2, %c0_20] : memref<56x128xbf16, #tpu.memory_space<vmem>>, vector<16x128xbf16>
    %41 = arith.extf %40 : vector<16x128xbf16> to vector<16x128xf32>
    %42 = arith.subf %21, %41 : vector<16x128xf32>
    %43 = arith.maximumf %42, %41 : vector<16x128xf32>
    %44 = arith.truncf %43 : vector<16x128xf32> to vector<16x128xbf16>
    %c0_21 = arith.constant 0 : index
    %c256 = arith.constant 256 : index
    %45 = vector.load %arg6[%c0_21, %c256] : memref<16x3200xbf16, #tpu.memory_space<vmem>>, vector<16x128xbf16>
    tpu.vector_store %arg6[%c0_21, %c256], %44 {strides = array<i32>} : memref<16x3200xbf16, #tpu.memory_space<vmem>>, vector<16x128xbf16>,
    %c0_i32_22 = arith.constant 0 : i32
    %c0_i32_23 = arith.constant 0 : i32
    %46 = tpu.memref_slice %arg5[%0, %c0_i32_22, %c0_i32_23] : memref<2x56x128xbf16, #tpu.memory_space<vmem>> -> memref<1x56x128xbf16, #tpu.memory_space<vmem>>
    %47 = tpu.memref_squeeze %46 : memref<1x56x128xbf16, #tpu.memory_space<vmem>> -> memref<56x128xbf16, #tpu.memory_space<vmem>>
    %c3 = arith.constant 3 : index
    %c0_24 = arith.constant 0 : index
    %48 = vector.load %47[%c3, %c0_24] : memref<56x128xbf16, #tpu.memory_space<vmem>>, vector<16x128xbf16>
    %49 = arith.extf %48 : vector<16x128xbf16> to vector<16x128xf32>
    %50 = arith.subf %21, %49 : vector<16x128xf32>
    %51 = arith.maximumf %50, %49 : vector<16x128xf32>
    %52 = arith.truncf %51 : vector<16x128xf32> to vector<16x128xbf16>
    %c0_25 = arith.constant 0 : index
    %c384 = arith.constant 384 : index
    %53 = vector.load %arg6[%c0_25, %c384] : memref<16x3200xbf16, #tpu.memory_space<vmem>>, vector<16x128xbf16>
    tpu.vector_store %arg6[%c0_25, %c384], %52 {strides = array<i32>} : memref<16x3200xbf16, #tpu.memory_space<vmem>>, vector<16x128xbf16>,
    %c0_i32_26 = arith.constant 0 : i32
    %c0_i32_27 = arith.constant 0 : i32
    %54 = tpu.memref_slice %arg5[%0, %c0_i32_26, %c0_i32_27] : memref<2x56x128xbf16, #tpu.memory_space<vmem>> -> memref<1x56x128xbf16, #tpu.memory_space<vmem>>
    %55 = tpu.memref_squeeze %54 : memref<1x56x128xbf16, #tpu.memory_space<vmem>> -> memref<56x128xbf16, #tpu.memory_space<vmem>>
    %c4 = arith.constant 4 : index
    %c0_28 = arith.constant 0 : index
    %56 = vector.load %55[%c4, %c0_28] : memref<56x128xbf16, #tpu.memory_space<vmem>>, vector<16x128xbf16>
    %57 = arith.extf %56 : vector<16x128xbf16> to vector<16x128xf32>
    %58 = arith.subf %21, %57 : vector<16x128xf32>
    %59 = arith.maximumf %58, %57 : vector<16x128xf32>
    %60 = arith.truncf %59 : vector<16x128xf32> to vector<16x128xbf16>
    %c0_29 = arith.constant 0 : index
    %c512 = arith.constant 512 : index
    %61 = vector.load %arg6[%c0_29, %c512] : memref<16x3200xbf16, #tpu.memory_space<vmem>>, vector<16x128xbf16>
    tpu.vector_store %arg6[%c0_29, %c512], %60 {strides = array<i32>} : memref<16x3200xbf16, #tpu.memory_space<vmem>>, vector<16x128xbf16>,
    %c0_i32_30 = arith.constant 0 : i32
    %c0_i32_31 = arith.constant 0 : i32
    %62 = tpu.memref_slice %arg5[%0, %c0_i32_30, %c0_i32_31] : memref<2x56x128xbf16, #tpu.memory_space<vmem>> -> memref<1x56x128xbf16, #tpu.memory_space<vmem>>
    %63 = tpu.memref_squeeze %62 : memref<1x56x128xbf16, #tpu.memory_space<vmem>> -> memref<56x128xbf16, #tpu.memory_space<vmem>>
    %c8 = arith.constant 8 : index
    %c0_32 = arith.constant 0 : index
    %64 = vector.load %63[%c8, %c0_32] : memref<56x128xbf16, #tpu.memory_space<vmem>>, vector<16x128xbf16>
    %65 = arith.extf %64 : vector<16x128xbf16> to vector<16x128xf32>
    %66 = arith.subf %21, %65 : vector<16x128xf32>
    %67 = arith.maximumf %66, %65 : vector<16x128xf32>
    %68 = arith.truncf %67 : vector<16x128xf32> to vector<16x128xbf16>
    %c0_33 = arith.constant 0 : index
    %c640 = arith.constant 640 : index
    %69 = vector.load %arg6[%c0_33, %c640] : memref<16x3200xbf16, #tpu.memory_space<vmem>>, vector<16x128xbf16>
    tpu.vector_store %arg6[%c0_33, %c640], %68 {strides = array<i32>} : memref<16x3200xbf16, #tpu.memory_space<vmem>>, vector<16x128xbf16>,
    %c0_i32_34 = arith.constant 0 : i32
    %c0_i32_35 = arith.constant 0 : i32
    %70 = tpu.memref_slice %arg5[%0, %c0_i32_34, %c0_i32_35] : memref<2x56x128xbf16, #tpu.memory_space<vmem>> -> memref<1x56x128xbf16, #tpu.memory_space<vmem>>
    %71 = tpu.memref_squeeze %70 : memref<1x56x128xbf16, #tpu.memory_space<vmem>> -> memref<56x128xbf16, #tpu.memory_space<vmem>>
    %c9 = arith.constant 9 : index
    %c0_36 = arith.constant 0 : index
    %72 = vector.load %71[%c9, %c0_36] : memref<56x128xbf16, #tpu.memory_space<vmem>>, vector<16x128xbf16>
    %73 = arith.extf %72 : vector<16x128xbf16> to vector<16x128xf32>
    %74 = arith.subf %21, %73 : vector<16x128xf32>
    %75 = arith.maximumf %74, %73 : vector<16x128xf32>
    %76 = arith.truncf %75 : vector<16x128xf32> to vector<16x128xbf16>
    %c0_37 = arith.constant 0 : index
    %c768 = arith.constant 768 : index
    %77 = vector.load %arg6[%c0_37, %c768] : memref<16x3200xbf16, #tpu.memory_space<vmem>>, vector<16x128xbf16>
    tpu.vector_store %arg6[%c0_37, %c768], %76 {strides = array<i32>} : memref<16x3200xbf16, #tpu.memory_space<vmem>>, vector<16x128xbf16>,
    %c0_i32_38 = arith.constant 0 : i32
    %c0_i32_39 = arith.constant 0 : i32
    %78 = tpu.memref_slice %arg5[%0, %c0_i32_38, %c0_i32_39] : memref<2x56x128xbf16, #tpu.memory_space<vmem>> -> memref<1x56x128xbf16, #tpu.memory_space<vmem>>
    %79 = tpu.memref_squeeze %78 : memref<1x56x128xbf16, #tpu.memory_space<vmem>> -> memref<56x128xbf16, #tpu.memory_space<vmem>>
    %c10 = arith.constant 10 : index
    %c0_40 = arith.constant 0 : index
    %80 = vector.load %79[%c10, %c0_40] : memref<56x128xbf16, #tpu.memory_space<vmem>>, vector<16x128xbf16>
    %81 = arith.extf %80 : vector<16x128xbf16> to vector<16x128xf32>
    %82 = arith.subf %21, %81 : vector<16x128xf32>
    %83 = arith.maximumf %82, %81 : vector<16x128xf32>
    %84 = arith.truncf %83 : vector<16x128xf32> to vector<16x128xbf16>
    %c0_41 = arith.constant 0 : index
    %c896 = arith.constant 896 : index
    %85 = vector.load %arg6[%c0_41, %c896] : memref<16x3200xbf16, #tpu.memory_space<vmem>>, vector<16x128xbf16>
    tpu.vector_store %arg6[%c0_41, %c896], %84 {strides = array<i32>} : memref<16x3200xbf16, #tpu.memory_space<vmem>>, vector<16x128xbf16>,
    %c0_i32_42 = arith.constant 0 : i32
    %c0_i32_43 = arith.constant 0 : i32
    %86 = tpu.memref_slice %arg5[%0, %c0_i32_42, %c0_i32_43] : memref<2x56x128xbf16, #tpu.memory_space<vmem>> -> memref<1x56x128xbf16, #tpu.memory_space<vmem>>
    %87 = tpu.memref_squeeze %86 : memref<1x56x128xbf16, #tpu.memory_space<vmem>> -> memref<56x128xbf16, #tpu.memory_space<vmem>>
    %c11 = arith.constant 11 : index
    %c0_44 = arith.constant 0 : index
    %88 = vector.load %87[%c11, %c0_44] : memref<56x128xbf16, #tpu.memory_space<vmem>>, vector<16x128xbf16>
    %89 = arith.extf %88 : vector<16x128xbf16> to vector<16x128xf32>
    %90 = arith.subf %21, %89 : vector<16x128xf32>
    %91 = arith.maximumf %90, %89 : vector<16x128xf32>
    %92 = arith.truncf %91 : vector<16x128xf32> to vector<16x128xbf16>
    %c0_45 = arith.constant 0 : index
    %c1024 = arith.constant 1024 : index
    %93 = vector.load %arg6[%c0_45, %c1024] : memref<16x3200xbf16, #tpu.memory_space<vmem>>, vector<16x128xbf16>
    tpu.vector_store %arg6[%c0_45, %c1024], %92 {strides = array<i32>} : memref<16x3200xbf16, #tpu.memory_space<vmem>>, vector<16x128xbf16>,
    %c0_i32_46 = arith.constant 0 : i32
    %c0_i32_47 = arith.constant 0 : i32
    %94 = tpu.memref_slice %arg5[%0, %c0_i32_46, %c0_i32_47] : memref<2x56x128xbf16, #tpu.memory_space<vmem>> -> memref<1x56x128xbf16, #tpu.memory_space<vmem>>
    %95 = tpu.memref_squeeze %94 : memref<1x56x128xbf16, #tpu.memory_space<vmem>> -> memref<56x128xbf16, #tpu.memory_space<vmem>>
    %c12 = arith.constant 12 : index
    %c0_48 = arith.constant 0 : index
    %96 = vector.load %95[%c12, %c0_48] : memref<56x128xbf16, #tpu.memory_space<vmem>>, vector<16x128xbf16>
    %97 = arith.extf %96 : vector<16x128xbf16> to vector<16x128xf32>
    %98 = arith.subf %21, %97 : vector<16x128xf32>
    %99 = arith.maximumf %98, %97 : vector<16x128xf32>
    %100 = arith.truncf %99 : vector<16x128xf32> to vector<16x128xbf16>
    %c0_49 = arith.constant 0 : index
    %c1152 = arith.constant 1152 : index
    %101 = vector.load %arg6[%c0_49, %c1152] : memref<16x3200xbf16, #tpu.memory_space<vmem>>, vector<16x128xbf16>
    tpu.vector_store %arg6[%c0_49, %c1152], %100 {strides = array<i32>} : memref<16x3200xbf16, #tpu.memory_space<vmem>>, vector<16x128xbf16>,
    %c0_i32_50 = arith.constant 0 : i32
    %c0_i32_51 = arith.constant 0 : i32
    %102 = tpu.memref_slice %arg5[%0, %c0_i32_50, %c0_i32_51] : memref<2x56x128xbf16, #tpu.memory_space<vmem>> -> memref<1x56x128xbf16, #tpu.memory_space<vmem>>
    %103 = tpu.memref_squeeze %102 : memref<1x56x128xbf16, #tpu.memory_space<vmem>> -> memref<56x128xbf16, #tpu.memory_space<vmem>>
    %c16 = arith.constant 16 : index
    %c0_52 = arith.constant 0 : index
    %104 = vector.load %103[%c16, %c0_52] : memref<56x128xbf16, #tpu.memory_space<vmem>>, vector<16x128xbf16>
    %105 = arith.extf %104 : vector<16x128xbf16> to vector<16x128xf32>
    %106 = arith.subf %21, %105 : vector<16x128xf32>
    %107 = arith.maximumf %106, %105 : vector<16x128xf32>
    %108 = arith.truncf %107 : vector<16x128xf32> to vector<16x128xbf16>
    %c0_53 = arith.constant 0 : index
    %c1280 = arith.constant 1280 : index
    %109 = vector.load %arg6[%c0_53, %c1280] : memref<16x3200xbf16, #tpu.memory_space<vmem>>, vector<16x128xbf16>
    tpu.vector_store %arg6[%c0_53, %c1280], %108 {strides = array<i32>} : memref<16x3200xbf16, #tpu.memory_space<vmem>>, vector<16x128xbf16>,
    %c0_i32_54 = arith.constant 0 : i32
    %c0_i32_55 = arith.constant 0 : i32
    %110 = tpu.memref_slice %arg5[%0, %c0_i32_54, %c0_i32_55] : memref<2x56x128xbf16, #tpu.memory_space<vmem>> -> memref<1x56x128xbf16, #tpu.memory_space<vmem>>
    %111 = tpu.memref_squeeze %110 : memref<1x56x128xbf16, #tpu.memory_space<vmem>> -> memref<56x128xbf16, #tpu.memory_space<vmem>>
    %c17 = arith.constant 17 : index
    %c0_56 = arith.constant 0 : index
    %112 = vector.load %111[%c17, %c0_56] : memref<56x128xbf16, #tpu.memory_space<vmem>>, vector<16x128xbf16>
    %113 = arith.extf %112 : vector<16x128xbf16> to vector<16x128xf32>
    %114 = arith.subf %21, %113 : vector<16x128xf32>
    %115 = arith.maximumf %114, %113 : vector<16x128xf32>
    %116 = arith.truncf %115 : vector<16x128xf32> to vector<16x128xbf16>
    %c0_57 = arith.constant 0 : index
    %c1408 = arith.constant 1408 : index
    %117 = vector.load %arg6[%c0_57, %c1408] : memref<16x3200xbf16, #tpu.memory_space<vmem>>, vector<16x128xbf16>
    tpu.vector_store %arg6[%c0_57, %c1408], %116 {strides = array<i32>} : memref<16x3200xbf16, #tpu.memory_space<vmem>>, vector<16x128xbf16>,
    %118 = arith.truncf %19 : vector<16x128xf32> to vector<16x128xbf16>
    %c0_58 = arith.constant 0 : index
    %c1536 = arith.constant 1536 : index
    %119 = vector.load %arg6[%c0_58, %c1536] : memref<16x3200xbf16, #tpu.memory_space<vmem>>, vector<16x128xbf16>
    tpu.vector_store %arg6[%c0_58, %c1536], %118 {strides = array<i32>} : memref<16x3200xbf16, #tpu.memory_space<vmem>>, vector<16x128xbf16>,
    %c0_i32_59 = arith.constant 0 : i32
    %c0_i32_60 = arith.constant 0 : i32
    %120 = tpu.memref_slice %arg5[%0, %c0_i32_59, %c0_i32_60] : memref<2x56x128xbf16, #tpu.memory_space<vmem>> -> memref<1x56x128xbf16, #tpu.memory_space<vmem>>
    %121 = tpu.memref_squeeze %120 : memref<1x56x128xbf16, #tpu.memory_space<vmem>> -> memref<56x128xbf16, #tpu.memory_space<vmem>>
    %c19 = arith.constant 19 : index
    %c0_61 = arith.constant 0 : index
    %122 = vector.load %121[%c19, %c0_61] : memref<56x128xbf16, #tpu.memory_space<vmem>>, vector<16x128xbf16>
    %123 = arith.extf %122 : vector<16x128xbf16> to vector<16x128xf32>
    %124 = arith.subf %21, %123 : vector<16x128xf32>
    %125 = arith.maximumf %124, %123 : vector<16x128xf32>
    %126 = arith.truncf %125 : vector<16x128xf32> to vector<16x128xbf16>
    %c0_62 = arith.constant 0 : index
    %c1664 = arith.constant 1664 : index
    %127 = vector.load %arg6[%c0_62, %c1664] : memref<16x3200xbf16, #tpu.memory_space<vmem>>, vector<16x128xbf16>
    tpu.vector_store %arg6[%c0_62, %c1664], %126 {strides = array<i32>} : memref<16x3200xbf16, #tpu.memory_space<vmem>>, vector<16x128xbf16>,
    %c0_i32_63 = arith.constant 0 : i32
    %c0_i32_64 = arith.constant 0 : i32
    %128 = tpu.memref_slice %arg5[%0, %c0_i32_63, %c0_i32_64] : memref<2x56x128xbf16, #tpu.memory_space<vmem>> -> memref<1x56x128xbf16, #tpu.memory_space<vmem>>
    %129 = tpu.memref_squeeze %128 : memref<1x56x128xbf16, #tpu.memory_space<vmem>> -> memref<56x128xbf16, #tpu.memory_space<vmem>>
    %c20 = arith.constant 20 : index
    %c0_65 = arith.constant 0 : index
    %130 = vector.load %129[%c20, %c0_65] : memref<56x128xbf16, #tpu.memory_space<vmem>>, vector<16x128xbf16>
    %131 = arith.extf %130 : vector<16x128xbf16> to vector<16x128xf32>
    %132 = arith.subf %21, %131 : vector<16x128xf32>
    %133 = arith.maximumf %132, %131 : vector<16x128xf32>
    %134 = arith.truncf %133 : vector<16x128xf32> to vector<16x128xbf16>
    %c0_66 = arith.constant 0 : index
    %c1792 = arith.constant 1792 : index
    %135 = vector.load %arg6[%c0_66, %c1792] : memref<16x3200xbf16, #tpu.memory_space<vmem>>, vector<16x128xbf16>
    tpu.vector_store %arg6[%c0_66, %c1792], %134 {strides = array<i32>} : memref<16x3200xbf16, #tpu.memory_space<vmem>>, vector<16x128xbf16>,
    %c0_i32_67 = arith.constant 0 : i32
    %c0_i32_68 = arith.constant 0 : i32
    %136 = tpu.memref_slice %arg5[%0, %c0_i32_67, %c0_i32_68] : memref<2x56x128xbf16, #tpu.memory_space<vmem>> -> memref<1x56x128xbf16, #tpu.memory_space<vmem>>
    %137 = tpu.memref_squeeze %136 : memref<1x56x128xbf16, #tpu.memory_space<vmem>> -> memref<56x128xbf16, #tpu.memory_space<vmem>>
    %c24 = arith.constant 24 : index
    %c0_69 = arith.constant 0 : index
    %138 = vector.load %137[%c24, %c0_69] : memref<56x128xbf16, #tpu.memory_space<vmem>>, vector<16x128xbf16>
    %139 = arith.extf %138 : vector<16x128xbf16> to vector<16x128xf32>
    %140 = arith.subf %21, %139 : vector<16x128xf32>
    %141 = arith.maximumf %140, %139 : vector<16x128xf32>
    %142 = arith.truncf %141 : vector<16x128xf32> to vector<16x128xbf16>
    %c0_70 = arith.constant 0 : index
    %c1920 = arith.constant 1920 : index
    %143 = vector.load %arg6[%c0_70, %c1920] : memref<16x3200xbf16, #tpu.memory_space<vmem>>, vector<16x128xbf16>
    tpu.vector_store %arg6[%c0_70, %c1920], %142 {strides = array<i32>} : memref<16x3200xbf16, #tpu.memory_space<vmem>>, vector<16x128xbf16>,
    %c0_i32_71 = arith.constant 0 : i32
    %c0_i32_72 = arith.constant 0 : i32
    %144 = tpu.memref_slice %arg5[%0, %c0_i32_71, %c0_i32_72] : memref<2x56x128xbf16, #tpu.memory_space<vmem>> -> memref<1x56x128xbf16, #tpu.memory_space<vmem>>
    %145 = tpu.memref_squeeze %144 : memref<1x56x128xbf16, #tpu.memory_space<vmem>> -> memref<56x128xbf16, #tpu.memory_space<vmem>>
    %c25 = arith.constant 25 : index
    %c0_73 = arith.constant 0 : index
    %146 = vector.load %145[%c25, %c0_73] : memref<56x128xbf16, #tpu.memory_space<vmem>>, vector<16x128xbf16>
    %147 = arith.extf %146 : vector<16x128xbf16> to vector<16x128xf32>
    %148 = arith.subf %21, %147 : vector<16x128xf32>
    %149 = arith.maximumf %148, %147 : vector<16x128xf32>
    %150 = arith.truncf %149 : vector<16x128xf32> to vector<16x128xbf16>
    %c0_74 = arith.constant 0 : index
    %c2048 = arith.constant 2048 : index
    %151 = vector.load %arg6[%c0_74, %c2048] : memref<16x3200xbf16, #tpu.memory_space<vmem>>, vector<16x128xbf16>
    tpu.vector_store %arg6[%c0_74, %c2048], %150 {strides = array<i32>} : memref<16x3200xbf16, #tpu.memory_space<vmem>>, vector<16x128xbf16>,
    %c0_i32_75 = arith.constant 0 : i32
    %c0_i32_76 = arith.constant 0 : i32
    %152 = tpu.memref_slice %arg5[%0, %c0_i32_75, %c0_i32_76] : memref<2x56x128xbf16, #tpu.memory_space<vmem>> -> memref<1x56x128xbf16, #tpu.memory_space<vmem>>
    %153 = tpu.memref_squeeze %152 : memref<1x56x128xbf16, #tpu.memory_space<vmem>> -> memref<56x128xbf16, #tpu.memory_space<vmem>>
    %c26 = arith.constant 26 : index
    %c0_77 = arith.constant 0 : index
    %154 = vector.load %153[%c26, %c0_77] : memref<56x128xbf16, #tpu.memory_space<vmem>>, vector<16x128xbf16>
    %155 = arith.extf %154 : vector<16x128xbf16> to vector<16x128xf32>
    %156 = arith.subf %21, %155 : vector<16x128xf32>
    %157 = arith.maximumf %156, %155 : vector<16x128xf32>
    %158 = arith.truncf %157 : vector<16x128xf32> to vector<16x128xbf16>
    %c0_78 = arith.constant 0 : index
    %c2176 = arith.constant 2176 : index
    %159 = vector.load %arg6[%c0_78, %c2176] : memref<16x3200xbf16, #tpu.memory_space<vmem>>, vector<16x128xbf16>
    tpu.vector_store %arg6[%c0_78, %c2176], %158 {strides = array<i32>} : memref<16x3200xbf16, #tpu.memory_space<vmem>>, vector<16x128xbf16>,
    %c0_i32_79 = arith.constant 0 : i32
    %c0_i32_80 = arith.constant 0 : i32
    %160 = tpu.memref_slice %arg5[%0, %c0_i32_79, %c0_i32_80] : memref<2x56x128xbf16, #tpu.memory_space<vmem>> -> memref<1x56x128xbf16, #tpu.memory_space<vmem>>
    %161 = tpu.memref_squeeze %160 : memref<1x56x128xbf16, #tpu.memory_space<vmem>> -> memref<56x128xbf16, #tpu.memory_space<vmem>>
    %c27 = arith.constant 27 : index
    %c0_81 = arith.constant 0 : index
    %162 = vector.load %161[%c27, %c0_81] : memref<56x128xbf16, #tpu.memory_space<vmem>>, vector<16x128xbf16>
    %163 = arith.extf %162 : vector<16x128xbf16> to vector<16x128xf32>
    %164 = arith.subf %21, %163 : vector<16x128xf32>
    %165 = arith.maximumf %164, %163 : vector<16x128xf32>
    %166 = arith.truncf %165 : vector<16x128xf32> to vector<16x128xbf16>
    %c0_82 = arith.constant 0 : index
    %c2304 = arith.constant 2304 : index
    %167 = vector.load %arg6[%c0_82, %c2304] : memref<16x3200xbf16, #tpu.memory_space<vmem>>, vector<16x128xbf16>
    tpu.vector_store %arg6[%c0_82, %c2304], %166 {strides = array<i32>} : memref<16x3200xbf16, #tpu.memory_space<vmem>>, vector<16x128xbf16>,
    %c0_i32_83 = arith.constant 0 : i32
    %c0_i32_84 = arith.constant 0 : i32
    %168 = tpu.memref_slice %arg5[%0, %c0_i32_83, %c0_i32_84] : memref<2x56x128xbf16, #tpu.memory_space<vmem>> -> memref<1x56x128xbf16, #tpu.memory_space<vmem>>
    %169 = tpu.memref_squeeze %168 : memref<1x56x128xbf16, #tpu.memory_space<vmem>> -> memref<56x128xbf16, #tpu.memory_space<vmem>>
    %c28 = arith.constant 28 : index
    %c0_85 = arith.constant 0 : index
    %170 = vector.load %169[%c28, %c0_85] : memref<56x128xbf16, #tpu.memory_space<vmem>>, vector<16x128xbf16>
    %171 = arith.extf %170 : vector<16x128xbf16> to vector<16x128xf32>
    %172 = arith.subf %21, %171 : vector<16x128xf32>
    %173 = arith.maximumf %172, %171 : vector<16x128xf32>
    %174 = arith.truncf %173 : vector<16x128xf32> to vector<16x128xbf16>
    %c0_86 = arith.constant 0 : index
    %c2432 = arith.constant 2432 : index
    %175 = vector.load %arg6[%c0_86, %c2432] : memref<16x3200xbf16, #tpu.memory_space<vmem>>, vector<16x128xbf16>
    tpu.vector_store %arg6[%c0_86, %c2432], %174 {strides = array<i32>} : memref<16x3200xbf16, #tpu.memory_space<vmem>>, vector<16x128xbf16>,
    %c0_i32_87 = arith.constant 0 : i32
    %c0_i32_88 = arith.constant 0 : i32
    %176 = tpu.memref_slice %arg5[%0, %c0_i32_87, %c0_i32_88] : memref<2x56x128xbf16, #tpu.memory_space<vmem>> -> memref<1x56x128xbf16, #tpu.memory_space<vmem>>
    %177 = tpu.memref_squeeze %176 : memref<1x56x128xbf16, #tpu.memory_space<vmem>> -> memref<56x128xbf16, #tpu.memory_space<vmem>>
    %c32 = arith.constant 32 : index
    %c0_89 = arith.constant 0 : index
    %178 = vector.load %177[%c32, %c0_89] : memref<56x128xbf16, #tpu.memory_space<vmem>>, vector<16x128xbf16>
    %179 = arith.extf %178 : vector<16x128xbf16> to vector<16x128xf32>
    %180 = arith.subf %21, %179 : vector<16x128xf32>
    %181 = arith.maximumf %180, %179 : vector<16x128xf32>
    %182 = arith.truncf %181 : vector<16x128xf32> to vector<16x128xbf16>
    %c0_90 = arith.constant 0 : index
    %c2560 = arith.constant 2560 : index
    %183 = vector.load %arg6[%c0_90, %c2560] : memref<16x3200xbf16, #tpu.memory_space<vmem>>, vector<16x128xbf16>
    tpu.vector_store %arg6[%c0_90, %c2560], %182 {strides = array<i32>} : memref<16x3200xbf16, #tpu.memory_space<vmem>>, vector<16x128xbf16>,
    %c0_i32_91 = arith.constant 0 : i32
    %c0_i32_92 = arith.constant 0 : i32
    %184 = tpu.memref_slice %arg5[%0, %c0_i32_91, %c0_i32_92] : memref<2x56x128xbf16, #tpu.memory_space<vmem>> -> memref<1x56x128xbf16, #tpu.memory_space<vmem>>
    %185 = tpu.memref_squeeze %184 : memref<1x56x128xbf16, #tpu.memory_space<vmem>> -> memref<56x128xbf16, #tpu.memory_space<vmem>>
    %c33 = arith.constant 33 : index
    %c0_93 = arith.constant 0 : index
    %186 = vector.load %185[%c33, %c0_93] : memref<56x128xbf16, #tpu.memory_space<vmem>>, vector<16x128xbf16>
    %187 = arith.extf %186 : vector<16x128xbf16> to vector<16x128xf32>
    %188 = arith.subf %21, %187 : vector<16x128xf32>
    %189 = arith.maximumf %188, %187 : vector<16x128xf32>
    %190 = arith.truncf %189 : vector<16x128xf32> to vector<16x128xbf16>
    %c0_94 = arith.constant 0 : index
    %c2688 = arith.constant 2688 : index
    %191 = vector.load %arg6[%c0_94, %c2688] : memref<16x3200xbf16, #tpu.memory_space<vmem>>, vector<16x128xbf16>
    tpu.vector_store %arg6[%c0_94, %c2688], %190 {strides = array<i32>} : memref<16x3200xbf16, #tpu.memory_space<vmem>>, vector<16x128xbf16>,
    %c0_i32_95 = arith.constant 0 : i32
    %c0_i32_96 = arith.constant 0 : i32
    %192 = tpu.memref_slice %arg5[%0, %c0_i32_95, %c0_i32_96] : memref<2x56x128xbf16, #tpu.memory_space<vmem>> -> memref<1x56x128xbf16, #tpu.memory_space<vmem>>
    %193 = tpu.memref_squeeze %192 : memref<1x56x128xbf16, #tpu.memory_space<vmem>> -> memref<56x128xbf16, #tpu.memory_space<vmem>>
    %c34 = arith.constant 34 : index
    %c0_97 = arith.constant 0 : index
    %194 = vector.load %193[%c34, %c0_97] : memref<56x128xbf16, #tpu.memory_space<vmem>>, vector<16x128xbf16>
    %195 = arith.extf %194 : vector<16x128xbf16> to vector<16x128xf32>
    %196 = arith.subf %21, %195 : vector<16x128xf32>
    %197 = arith.maximumf %196, %195 : vector<16x128xf32>
    %198 = arith.truncf %197 : vector<16x128xf32> to vector<16x128xbf16>
    %c0_98 = arith.constant 0 : index
    %c2816 = arith.constant 2816 : index
    %199 = vector.load %arg6[%c0_98, %c2816] : memref<16x3200xbf16, #tpu.memory_space<vmem>>, vector<16x128xbf16>
    tpu.vector_store %arg6[%c0_98, %c2816], %198 {strides = array<i32>} : memref<16x3200xbf16, #tpu.memory_space<vmem>>, vector<16x128xbf16>,
    %c0_i32_99 = arith.constant 0 : i32
    %c0_i32_100 = arith.constant 0 : i32
    %200 = tpu.memref_slice %arg5[%0, %c0_i32_99, %c0_i32_100] : memref<2x56x128xbf16, #tpu.memory_space<vmem>> -> memref<1x56x128xbf16, #tpu.memory_space<vmem>>
    %201 = tpu.memref_squeeze %200 : memref<1x56x128xbf16, #tpu.memory_space<vmem>> -> memref<56x128xbf16, #tpu.memory_space<vmem>>
    %c35 = arith.constant 35 : index
    %c0_101 = arith.constant 0 : index
    %202 = vector.load %201[%c35, %c0_101] : memref<56x128xbf16, #tpu.memory_space<vmem>>, vector<16x128xbf16>
    %203 = arith.extf %202 : vector<16x128xbf16> to vector<16x128xf32>
    %204 = arith.subf %21, %203 : vector<16x128xf32>
    %205 = arith.maximumf %204, %203 : vector<16x128xf32>
    %206 = arith.truncf %205 : vector<16x128xf32> to vector<16x128xbf16>
    %c0_102 = arith.constant 0 : index
    %c2944 = arith.constant 2944 : index
    %207 = vector.load %arg6[%c0_102, %c2944] : memref<16x3200xbf16, #tpu.memory_space<vmem>>, vector<16x128xbf16>
    tpu.vector_store %arg6[%c0_102, %c2944], %206 {strides = array<i32>} : memref<16x3200xbf16, #tpu.memory_space<vmem>>, vector<16x128xbf16>,
    %c0_i32_103 = arith.constant 0 : i32
    %c0_i32_104 = arith.constant 0 : i32
    %208 = tpu.memref_slice %arg5[%0, %c0_i32_103, %c0_i32_104] : memref<2x56x128xbf16, #tpu.memory_space<vmem>> -> memref<1x56x128xbf16, #tpu.memory_space<vmem>>
    %209 = tpu.memref_squeeze %208 : memref<1x56x128xbf16, #tpu.memory_space<vmem>> -> memref<56x128xbf16, #tpu.memory_space<vmem>>
    %c36 = arith.constant 36 : index
    %c0_105 = arith.constant 0 : index
    %210 = vector.load %209[%c36, %c0_105] : memref<56x128xbf16, #tpu.memory_space<vmem>>, vector<16x128xbf16>
    %211 = arith.extf %210 : vector<16x128xbf16> to vector<16x128xf32>
    %212 = arith.subf %21, %211 : vector<16x128xf32>
    %213 = arith.maximumf %212, %211 : vector<16x128xf32>
    %214 = arith.truncf %213 : vector<16x128xf32> to vector<16x128xbf16>
    %c0_106 = arith.constant 0 : index
    %c3072 = arith.constant 3072 : index
    %215 = vector.load %arg6[%c0_106, %c3072] : memref<16x3200xbf16, #tpu.memory_space<vmem>>, vector<16x128xbf16>
    tpu.vector_store %arg6[%c0_106, %c3072], %214 {strides = array<i32>} : memref<16x3200xbf16, #tpu.memory_space<vmem>>, vector<16x128xbf16>,
    %c0_107 = arith.constant 0 : index
    %c0_108 = arith.constant 0 : index
    %216 = vector.load %arg6[%c0_107, %c0_108] : memref<16x3200xbf16, #tpu.memory_space<vmem>>, vector<16x3200xbf16>
    %c0_109 = arith.constant 0 : index
    %c0_110 = arith.constant 0 : index
    %217 = vector.load %arg3[%c0_109, %c0_110] : memref<3200x128xbf16, #tpu.memory_space<vmem>>, vector<3200x128xbf16>
    %cst_111 = arith.constant dense<0.000000e+00> : vector<16x128xf32>
    %218 = tpu.matmul %216, %217, %cst_111 {dimension_numbers = #tpu.dot_dimension_numbers<[1], [0], [0], [1], [0, 0, 1, 1], [], []>} : vector<16x3200xbf16>, vector<3200x128xbf16>, vector<16x128xf32> -> vector<16x128xf32>
    %219 = arith.truncf %218 : vector<16x128xf32> to vector<16x128xbf16>
    %c0_112 = arith.constant 0 : index
    %c0_113 = arith.constant 0 : index
    %c0_114 = arith.constant 0 : index
    %220 = vector.load %arg4[%c0_112, %c0_113, %c0_114] : memref<1x16x128xbf16, #tpu.memory_space<vmem>>, vector<1x16x128xbf16>
    %221 = vector.shape_cast %220 : vector<1x16x128xbf16> to vector<16x128xbf16>
    %222 = vector.shape_cast %219 : vector<16x128xbf16> to vector<1x16x128xbf16>
    tpu.vector_store %arg4[%c0_112, %c0_113, %c0_114], %222 {strides = array<i32>} : memref<1x16x128xbf16, #tpu.memory_space<vmem>>, vector<1x16x128xbf16>,
    return
  }
  func.func @transform_1(%arg0: i32, %arg1: i32) -> (i32, i32) {
    %c0_i32 = arith.constant 0 : i32
    %c0_i32_0 = arith.constant 0 : i32
    %c0_i32_1 = arith.constant 0 : i32
    return %c0_i32, %c0_i32_0 : i32, i32
  }
  func.func @transform_2(%arg0: i32, %arg1: i32) -> (i32, i32, i32) {
    %c0_i32 = arith.constant 0 : i32
    %c0_i32_0 = arith.constant 0 : i32
    return %arg0, %arg1, %c0_i32 : i32, i32, i32
  }
}

</mosaic_0001>

<llo_original>
// kernel: tpu_custom_call.1
$region0: #{tpu_custom_call.1}
  #allocation0 [shape = 'u32[]', space=smem, size = 0x4, offset = 0x4, fixed_abs, tag = 'smem constant byte address 0x4 - core index']
  #allocation1 [shape = 'u32[144,128]{1,0:T(1,128)}', space=vmem, size = 0x12000, scoped, tag = 'internal scratch']
  #allocation2 [shape = 'bf16[2,56,128]{2,1,0:T(8,128)(2,1)}', space=vmem, size = 0x7000, scoped, tag = 'scratch operand']
  #allocation3 [shape = 'bf16[16,3200]{1,0:T(8,128)(2,1)}', space=vmem, size = 0x19000, scoped, tag = 'scratch operand']
  #allocation4 [shape = 's32[2]{0}', space=sflag, size = 0x8, scoped, tag = 'scratch operand']
  #allocation9 [shape = 's32[]', space=sflag, size = 0x4, offset = 0, fixed_abs, tag = 'sflag constant byte address 0x0 - dummy sync flag']
  #allocation10 [shape = 's32[]', space=sflag, size = 0x4, offset = 0, fixed_abs, tag = 'sflag constant byte address 0x0 - dummy sync flag']
  #allocation11 [shape = 'u32[]', space=smem, size = 0x4, offset = 0x44, fixed_abs, tag = 'smem constant byte address 0x44 - assertion arg 0']
  #allocation12 [shape = 'u32[]', space=smem, size = 0x4, offset = 0x48, fixed_abs, tag = 'smem constant byte address 0x48 - assertion arg 1']
  #allocation13 [shape = 's32[]', space=sflag, size = 0x4, offset = 0, fixed_abs, tag = 'sflag constant byte address 0x0 - dummy sync flag']
  #allocation14 [shape = 's32[]', space=sflag, size = 0x4, offset = 0, fixed_abs, tag = 'sflag constant byte address 0x0 - dummy sync flag']
  %s0 = inlined_call_operand.hbm [shape: bf16[2,72,128], index: 0, kind: input, shape index: {}]
  %s1 = inlined_call_operand.hbm [shape: bf16[3200,128], index: 1, kind: input, shape index: {}]
  %s2 = inlined_call_operand.hbm [shape: bf16[2,32,128], index: 2, kind: output, shape index: {}]
  %s3 = sld [smem:[#allocation0]]
  $region57: #{tpu_custom_call.1} parent=0
    _
  %s5 = ssub.s32 1, %s3
  %s6 = scalar_select 0, %s5, %s3
  $region1: #{tpu_custom_call.1} parent=0
    #allocation5 [shape = 'u8[819200]{0}', space=vmem, size = 0xc8000, scoped, tag = 'input window, operand 1, single buffered']
    #allocation6 [shape = 's32[2]{0}', space=sflag, size = 0x8, scoped, tag = 'scoped memory for tpu_custom_call.1']
    #allocation7 [shape = 's32[2]{0}', space=sflag, size = 0x8, scoped, tag = 'scoped memory for tpu_custom_call.1']
    #allocation8 [shape = 'u8[8192]{0}', space=vmem, size = 0x2000, scoped, tag = 'output window, operand 0']
    %7 = vsyncpa [#allocation6], 0
    %8 = vsyncpa [#allocation7], 0
    %s9 = scalar_lea.sflag [#allocation7], 1
    %10 = vsyncpa %s9, 0
    loop: start=0, step=1, limit=6
    $region2: #{tpu_custom_call.1} parent=1 // loop_pre_header
      _
    $region3: #{tpu_custom_call.1} parent=1 // loop_header
      %s12 = sphi 0, %s16
      %p13 = scmp.ge.s32.totalorder %s12, 6
      %s19 = sphi 0, %s31
      %s20 = sphi 0, %s27
      %s21 = sphi 0, %s19
      %s22 = sphi 0, %s20
      %s23 = sphi 0, %s21
      %s24 = sphi 0, %s22
      %s32 = sphi 0, %s32
      %s34 = sphi 0, %s32
      %s35 = sphi 0, %s34
      %s49 = sphi 0, %s35
      %s57 = sphi 0, %s59
      %s60 = sphi 0, %s57
      %s61 = sphi 0, %s60
      %s77 = sphi 0, %s61
    $region4: #{tpu_custom_call.1} parent=1 // loop_header_branch
      %15 = sbr.rel (%p13) target = $region8
    $region5: #{tpu_custom_call.1} parent=1 // loop_body
      %s17 = ssub.s32 %s12, 1
      %s18 = ssub.s32 %s12, 2
      %s25 = sadd.s32 1, %s20
      %p26 = scmp.ge.s32.totalorder %s25, 2
      %s27 = scalar_select %p26, 0, %s25
      %s28 = sadd.s32 1, %s19
      %s29 = scalar_select %p26, %s28, %s19
      %p30 = scmp.ge.s32.totalorder %s29, 2
      %s31 = scalar_select %p30, 0, %s29
      %s33 = sadd.s32 %s32, 1
      %p36 = scmp.eq.s32.totalorder %s12, 3
      %p37 = scmp.ne.s32.totalorder %s32, %s34
      %p38 = scmp.eq.s32.totalorder %s12, 0
      %p39 = por %p37, %p38
      %p40 = scmp.ne.s32.totalorder %s32, %s34
      %p41 = scmp.eq.s32.totalorder %s17, 3
      %p42 = por %p40, %p41
      %p43 = scmp.ne.s32.totalorder %s34, %s35
      %p44 = scmp.eq.s32.totalorder %s17, 0
      %p45 = por %p43, %p44
      %p46 = scmp.ne.s32.totalorder %s34, %s35
      %p47 = scmp.eq.s32.totalorder %s18, 3
      %p48 = por %p46, %p47
      %p50 = scmp.ne.s32.totalorder %s35, %s49
      %p51 = scmp.eq.s32.totalorder %s18, 0
      %p52 = por %p50, %p51
      %s53 = ssub.s32 %s19, %s31
      %s54 = ssub.s32 %s20, %s27
      %s55 = sor.u32 %s53, %s54
      %p56 = scmp.eq.s32.totalorder %s55, 0
      %s58 = sadd.s32 %s57, 1
      %s59 = scalar_select %p56, %s57, %s58
      %p62 = pneg %p56
      %p63 = scmp.eq.s32.totalorder %s12, 3
      %p64 = por %p62, %p63
      %p65 = scmp.ne.s32.totalorder %s57, %s60
      %p66 = scmp.eq.s32.totalorder %s12, 0
      %p67 = por %p65, %p66
      %p68 = scmp.ne.s32.totalorder %s57, %s60
      %p69 = scmp.eq.s32.totalorder %s17, 3
      %p70 = por %p68, %p69
      %p71 = scmp.ne.s32.totalorder %s60, %s61
      %p72 = scmp.eq.s32.totalorder %s17, 0
      %p73 = por %p71, %p72
      %p74 = scmp.ne.s32.totalorder %s60, %s61
      %p75 = scmp.eq.s32.totalorder %s18, 3
      %p76 = por %p74, %p75
      %p78 = scmp.ne.s32.totalorder %s61, %s77
      %p79 = scmp.eq.s32.totalorder %s18, 0
      %p80 = por %p78, %p79
      %p81 = scmp.le.s32.totalorder 1, %s12
      %p82 = scmp.lt.s32.totalorder %s12, 5
      %p83 = pnand %p81, %p82
      %p84 = pneg %p83
      // Predicated region
      $region9: #{tpu_custom_call.1} parent=5 // pred_check
        _
      $region10: #{tpu_custom_call.1} parent=5 // pred_check_branch
        %86 = sbr.rel (%p83) target = $region12
      $region11: #{tpu_custom_call.1} parent=5 // pred_region
        %s87 = ssub.s32 %s12, 1
        // Predicated region
        $region13: #{tpu_custom_call.1} parent=11 // pred_check
          %p88 = pneg %p45
        $region14: #{tpu_custom_call.1} parent=11 // pred_check_branch
          %90 = sbr.rel (%p88) target = $region16
        $region15: #{tpu_custom_call.1} parent=11 // pred_region
          %s92 = ssub.s32 25600, 25600
          %93 = vsyncadd [#allocation6], %s92
          %s94 = sshll.u32 [#allocation5], 4
          %s95 = int_to_ptr.vmem [resolvable:$true] %s94
          %100 = dma.hbm_to_vmem [thread:$0]  %s1, 25600, %s95, [#allocation6], 64, 64, 4
        $region16: #{tpu_custom_call.1} parent=11 // pred_fallthru
          _
      $region12: #{tpu_custom_call.1} parent=5 // pred_fallthru
        _
      %p101 = scmp.lt.s32.totalorder %s12, 4
      // Predicated region
      $region17: #{tpu_custom_call.1} parent=5 // pred_check
        %p102 = pneg %p101
      $region18: #{tpu_custom_call.1} parent=5 // pred_check_branch
        %104 = sbr.rel (%p102) target = $region20
      $region19: #{tpu_custom_call.1} parent=5 // pred_region
        _
      $region20: #{tpu_custom_call.1} parent=5 // pred_fallthru
        _
      %p105 = scmp.le.s32.totalorder 1, %s12
      %p106 = scmp.lt.s32.totalorder %s12, 5
      %p107 = pnand %p105, %p106
      %p108 = pneg %p107
      // Predicated region
      $region21: #{tpu_custom_call.1} parent=5 // pred_check
        _
      $region22: #{tpu_custom_call.1} parent=5 // pred_check_branch
        %110 = sbr.rel (%p107) target = $region24
      $region23: #{tpu_custom_call.1} parent=5 // pred_region
        %s111 = ssub.s32 %s12, 1
        // Predicated region
        $region25: #{tpu_custom_call.1} parent=23 // pred_check
          %p112 = pneg %p45
        $region26: #{tpu_custom_call.1} parent=23 // pred_check_branch
          %114 = sbr.rel (%p112) target = $region28
        $region27: #{tpu_custom_call.1} parent=23 // pred_region
          %115 = dma.done [#allocation6], 25600
        $region28: #{tpu_custom_call.1} parent=23 // pred_fallthru
          _
        %p116 = pneg %p45
        %p117 = pneg %p42
        %p118 = pneg %p73
        %p119 = pneg %p70
        %s120 = sand.u32 %s60, 1
        %s121 = scalar_lea.sflag [#allocation7], %s120
        %s122 = sand.u32 %s60, 1
        %s123 = smul.addr %s122, 8
        %s124 = scalar_lea.vmem [#allocation8], %s123
        %s125 = smul.u32 2, %s22
        %p127 = scmp.lt.s32.totalorder %s22, 0
        %s128 = ssub.s32 0, %s22
        %s129 = scalar_select %p127, %s128, %s22
        %s130 = sand.u32 %s129, 1
        %s131 = ssub.s32 0, %s130
        %s132 = scalar_select %p127, %s131, %s130
        %p133 = scmp.eq.s32.totalorder %s22, 0
        // Predicated region
        $region29: #{tpu_custom_call.1} parent=23 // pred_check
          %p134 = pneg %p133
        $region30: #{tpu_custom_call.1} parent=23 // pred_check_branch
          %136 = sbr.rel (%p134) target = $region32
        $region31: #{tpu_custom_call.1} parent=23 // pred_region
          %s137 = smul.u32 %s22, 16
          %s138 = sshra.s32 %s137, 3
          %s139 = sand.u32 %s137, 7
          %s140 = smul.u32 %s21, 9
          %s141 = sadd.s32 %s138, %s140
          %s142 = smul.addr %s141, 64
          %s143 = scalar_lea.hbm %s0, %s142
          %s144 = smul.u32 %s132, 7
          %s145 = smul.addr %s144, 4
          %s146 = scalar_lea.vmem [#allocation2], %s145
          %s147 = scalar_lea.sflag [#allocation4], %s132
          // Predicated region
          $region33: #{tpu_custom_call.1} parent=31 // pred_check
            _
          $region34: #{tpu_custom_call.1} parent=31 // pred_check_branch
            %149 = sbr.rel target = $region36
          $region35: #{tpu_custom_call.1} parent=31 // pred_region
            %150 = sst [smem:[#allocation11]] [#allocation10]
            %151 = sst [smem:[#allocation12]] [#allocation9]
          $region36: #{tpu_custom_call.1} parent=31 // pred_fallthru
            _
          %153 = shalt.err (0)
          %s155 = sshll.u32 %s146, 4
          %s156 = int_to_ptr.vmem [resolvable:$true] %s155
          %158 = dma.hbm_to_vmem [thread:$0]  %s143, 448, %s156, %s147
        $region32: #{tpu_custom_call.1} parent=23 // pred_fallthru
          _
        %s159 = smul.u32 %s22, 16
        %s160 = smul.u32 %s132, 7
        %s161 = smul.addr %s160, 4
        %s162 = scalar_lea.vmem [#allocation2], %s161
        %s163 = scalar_lea.sflag [#allocation4], %s132
        %s164 = smul.u32 4, 7
        %s165 = smul.u32 %s164, 1
        %s166 = sshll.u32 %s165, 4
        %167 = dma.done %s163, %s166
        %s168 = sadd.s32 %s22, 1
        %p169 = scmp.lt.s32.totalorder %s168, 2
        // Predicated region
        $region37: #{tpu_custom_call.1} parent=23 // pred_check
          %p170 = pneg %p169
        $region38: #{tpu_custom_call.1} parent=23 // pred_check_branch
          %172 = sbr.rel (%p170) target = $region40
        $region39: #{tpu_custom_call.1} parent=23 // pred_region
          %s173 = ssub.s32 1, %s132
          %s174 = smul.u32 %s168, 16
          %s175 = sshra.s32 %s174, 3
          %s176 = sand.u32 %s174, 7
          %s177 = smul.u32 %s21, 9
          %s178 = sadd.s32 %s175, %s177
          %s179 = smul.addr %s178, 64
          %s180 = scalar_lea.hbm %s0, %s179
          %s181 = smul.u32 %s173, 7
          %s182 = smul.addr %s181, 4
          %s183 = scalar_lea.vmem [#allocation2], %s182
          %s184 = scalar_lea.sflag [#allocation4], %s173
          // Predicated region
          $region41: #{tpu_custom_call.1} parent=39 // pred_check
            _
          $region42: #{tpu_custom_call.1} parent=39 // pred_check_branch
            %186 = sbr.rel target = $region44
          $region43: #{tpu_custom_call.1} parent=39 // pred_region
            %187 = sst [smem:[#allocation11]] [#allocation14]
            %188 = sst [smem:[#allocation12]] [#allocation13]
          $region44: #{tpu_custom_call.1} parent=39 // pred_fallthru
            _
          %190 = shalt.err (0)
          %s192 = sshll.u32 %s183, 4
          %s193 = int_to_ptr.vmem [resolvable:$true] %s192
          %195 = dma.hbm_to_vmem [thread:$0]  %s180, 448, %s193, %s184
        $region40: #{tpu_custom_call.1} parent=23 // pred_fallthru
          _
        %v196 = vld [vmem:[%s162 + $0x8] sm:$0xe]
        %v197 = vld [vmem:[%s162 + $0xc] sm:$0xf]
        %v198 = vld [vmem:[%s162 + $0x10] sm:$0x1]
        %v199 = vunpack.c.l.bf16 %v196
        %v200 = vunpack.c.l.bf16 %v197
        %v201 = vunpack.c.l.bf16 %v198
        %v202 = vmul.f32 %v199, 2.0
        %v203 = vmul.f32 %v200, 2.0
        %v204 = vmul.f32 %v201, 2.0
        %v205 = vld [vmem:[%s162] sm:$0xf]
        %v206 = vld [vmem:[%s162 + $0x4] sm:$0xf]
        %v207 = vunpack.c.l.bf16 %v205
        %v208 = vunpack.c.l.bf16 %v206
        %vm211 = vcmask 1041408
        %v212 = vrot.slane %v207, 6
        %v213 = vrot.slane %v208, 6
        %v214 = vsel %vm211, %v212, %v213
        %v218 = vsub.f32 %v202, %v212
        %v219 = vsub.f32 %v203, %v214
        %v220 = vsub.f32 %v204, %v213
        %v221 = vmax.f32 %v218, %v212
        %v222 = vmax.f32 %v219, %v214
        %v223 = vmax.f32 %v220, %v213
        %v224 = vpack.c.bf16 %v222, %v221
        %v225 = vpack.c.bf16 %v223, %v223
        %v228 = vunpack.c.l.b16 %v224
        %v229 = vunpack.c.h.b16 %v224
        %v230 = vunpack.c.l.b16 %v225
        %v231 = vpack.c.b16 %v228, %v228
        %v232 = vpack.c.b16 %v229, %v229
        %v233 = vpack.c.b16 %v230, %v230
        %vm234 = vcmask 1042432
        %vm235 = vcmask 1046532
        %vm236 = vmor %vm234, %vm235
        %v237 = vrot.slane %v231, 5
        %v238 = vrot.slane %v237, 4
        %v239 = vrot.slane %v232, 5
        %v240 = vsel %vm236, %v238, %v239
        %v241 = vrot.slane %v239, 4
        %v242 = vrot.slane %v233, 5
        %v243 = vsel %vm236, %v241, %v242
        %246 = vst [vmem:[#allocation3] sm:$0xf] %v240
        %247 = vst [vmem:[#allocation3 + $0x64] sm:$0xf] %v243
        %v248 = vld [vmem:[%s162] sm:$0xf]
        %v249 = vld [vmem:[%s162 + $0x4] sm:$0xf]
        %v250 = vld [vmem:[%s162 + $0x8] sm:$0x1]
        %v251 = vunpack.c.l.bf16 %v248
        %v252 = vunpack.c.l.bf16 %v249
        %v253 = vunpack.c.l.bf16 %v250
        %vm257 = vcmask 1040384
        %v258 = vrot.slane %v251, 7
        %v259 = vrot.slane %v252, 7
        %v260 = vsel %vm257, %v258, %v259
        %v261 = vrot.slane %v253, 7
        %v262 = vsel %vm257, %v259, %v261
        %v266 = vsub.f32 %v202, %v258
        %v267 = vsub.f32 %v203, %v260
        %v268 = vsub.f32 %v204, %v262
        %v269 = vmax.f32 %v266, %v258
        %v270 = vmax.f32 %v267, %v260
        %v271 = vmax.f32 %v268, %v262
        %v272 = vpack.c.bf16 %v270, %v269
        %v273 = vpack.c.bf16 %v271, %v271
        %v276 = vunpack.c.l.b16 %v272
        %v277 = vunpack.c.h.b16 %v272
        %v278 = vunpack.c.l.b16 %v273
        %v279 = vpack.c.b16 %v276, %v276
        %v280 = vpack.c.b16 %v277, %v277
        %v281 = vpack.c.b16 %v278, %v278
        %v282 = vrot.slane %v279, 5
        %v283 = vrot.slane %v282, 4
        %v284 = vrot.slane %v280, 5
        %v285 = vsel %vm236, %v283, %v284
        %v286 = vrot.slane %v284, 4
        %v287 = vrot.slane %v281, 5
        %v288 = vsel %vm236, %v286, %v287
        %291 = vst [vmem:[#allocation3 + $0x4] sm:$0xf] %v285
        %292 = vst [vmem:[#allocation3 + $0x68] sm:$0xf] %v288
        %v293 = vld [vmem:[%s162] sm:$0xe]
        %v294 = vld [vmem:[%s162 + $0x4] sm:$0xf]
        %v295 = vld [vmem:[%s162 + $0x8] sm:$0x1]
        %v296 = vunpack.c.l.bf16 %v293
        %v297 = vunpack.c.l.bf16 %v294
        %v298 = vunpack.c.l.bf16 %v295
        %v299 = vsub.f32 %v202, %v296
        %v300 = vsub.f32 %v203, %v297
        %v301 = vsub.f32 %v204, %v298
        %v302 = vmax.f32 %v299, %v296
        %v303 = vmax.f32 %v300, %v297
        %v304 = vmax.f32 %v301, %v298
        %v305 = vpack.c.bf16 %v303, %v302
        %v306 = vpack.c.bf16 %v304, %v304
        %v309 = vunpack.c.l.b16 %v305
        %v310 = vunpack.c.h.b16 %v305
        %v311 = vunpack.c.l.b16 %v306
        %v312 = vpack.c.b16 %v309, %v309
        %v313 = vpack.c.b16 %v310, %v310
        %v314 = vpack.c.b16 %v311, %v311
        %v315 = vrot.slane %v312, 5
        %v316 = vrot.slane %v315, 4
        %v317 = vrot.slane %v313, 5
        %v318 = vsel %vm236, %v316, %v317
        %v319 = vrot.slane %v317, 4
        %v320 = vrot.slane %v314, 5
        %v321 = vsel %vm236, %v319, %v320
        %324 = vst [vmem:[#allocation3 + $0x8] sm:$0xf] %v318
        %325 = vst [vmem:[#allocation3 + $0x6c] sm:$0xf] %v321
        %v326 = vld [vmem:[%s162] sm:$0xe]
        %v327 = vld [vmem:[%s162 + $0x4] sm:$0xf]
        %v328 = vld [vmem:[%s162 + $0x8] sm:$0x3]
        %v329 = vunpack.c.l.bf16 %v326
        %v330 = vunpack.c.l.bf16 %v327
        %v331 = vunpack.c.l.bf16 %v328
        %vm335 = vcmask 1046528
        %v336 = vrot.slane %v329, 1
        %v337 = vrot.slane %v330, 1
        %v338 = vsel %vm335, %v336, %v337
        %v339 = vrot.slane %v331, 1
        %v340 = vsel %vm335, %v337, %v339
        %v344 = vsub.f32 %v202, %v338
        %v345 = vsub.f32 %v203, %v340
        %v346 = vsub.f32 %v204, %v339
        %v347 = vmax.f32 %v344, %v338
        %v348 = vmax.f32 %v345, %v340
        %v349 = vmax.f32 %v346, %v339
        %v350 = vpack.c.bf16 %v348, %v347
        %v351 = vpack.c.bf16 %v349, %v349
        %v354 = vunpack.c.l.b16 %v350
        %v355 = vunpack.c.h.b16 %v350
        %v356 = vunpack.c.l.b16 %v351
        %v357 = vpack.c.b16 %v354, %v354
        %v358 = vpack.c.b16 %v355, %v355
        %v359 = vpack.c.b16 %v356, %v356
        %v360 = vrot.slane %v357, 5
        %v361 = vrot.slane %v360, 4
        %v362 = vrot.slane %v358, 5
        %v363 = vsel %vm236, %v361, %v362
        %v364 = vrot.slane %v362, 4
        %v365 = vrot.slane %v359, 5
        %v366 = vsel %vm236, %v364, %v365
        %369 = vst [vmem:[#allocation3 + $0xc] sm:$0xf] %v363
        %370 = vst [vmem:[#allocation3 + $0x70] sm:$0xf] %v366
        %v371 = vld [vmem:[%s162] sm:$0xc]
        %v372 = vld [vmem:[%s162 + $0x4] sm:$0xf]
        %v373 = vld [vmem:[%s162 + $0x8] sm:$0x3]
        %v374 = vunpack.c.l.bf16 %v371
        %v375 = vunpack.c.l.bf16 %v372
        %v376 = vunpack.c.l.bf16 %v373
        %vm380 = vcmask 1045504
        %v381 = vrot.slane %v374, 2
        %v382 = vrot.slane %v375, 2
        %v383 = vsel %vm380, %v381, %v382
        %v384 = vrot.slane %v376, 2
        %v385 = vsel %vm380, %v382, %v384
        %v389 = vsub.f32 %v202, %v383
        %v390 = vsub.f32 %v203, %v385
        %v391 = vsub.f32 %v204, %v384
        %v392 = vmax.f32 %v389, %v383
        %v393 = vmax.f32 %v390, %v385
        %v394 = vmax.f32 %v391, %v384
        %v395 = vpack.c.bf16 %v393, %v392
        %v396 = vpack.c.bf16 %v394, %v394
        %v399 = vunpack.c.l.b16 %v395
        %v400 = vunpack.c.h.b16 %v395
        %v401 = vunpack.c.l.b16 %v396
        %v402 = vpack.c.b16 %v399, %v399
        %v403 = vpack.c.b16 %v400, %v400
        %v404 = vpack.c.b16 %v401, %v401
        %v405 = vrot.slane %v402, 5
        %v406 = vrot.slane %v405, 4
        %v407 = vrot.slane %v403, 5
        %v408 = vsel %vm236, %v406, %v407
        %v409 = vrot.slane %v407, 4
        %v410 = vrot.slane %v404, 5
        %v411 = vsel %vm236, %v409, %v410
        %414 = vst [vmem:[#allocation3 + $0x10] sm:$0xf] %v408
        %415 = vst [vmem:[#allocation3 + $0x74] sm:$0xf] %v411
        %v416 = vld [vmem:[%s162 + $0x4] sm:$0xf]
        %v417 = vld [vmem:[%s162 + $0x8] sm:$0xf]
        %v418 = vunpack.c.l.bf16 %v416
        %v419 = vunpack.c.l.bf16 %v417
        %v422 = vrot.slane %v418, 6
        %v423 = vrot.slane %v419, 6
        %v424 = vsel %vm211, %v422, %v423
        %v428 = vsub.f32 %v202, %v422
        %v429 = vsub.f32 %v203, %v424
        %v430 = vsub.f32 %v204, %v423
        %v431 = vmax.f32 %v428, %v422
        %v432 = vmax.f32 %v429, %v424
        %v433 = vmax.f32 %v430, %v423
        %v434 = vpack.c.bf16 %v432, %v431
        %v435 = vpack.c.bf16 %v433, %v433
        %v438 = vunpack.c.l.b16 %v434
        %v439 = vunpack.c.h.b16 %v434
        %v440 = vunpack.c.l.b16 %v435
        %v441 = vpack.c.b16 %v438, %v438
        %v442 = vpack.c.b16 %v439, %v439
        %v443 = vpack.c.b16 %v440, %v440
        %v444 = vrot.slane %v441, 5
        %v445 = vrot.slane %v444, 4
        %v446 = vrot.slane %v442, 5
        %v447 = vsel %vm236, %v445, %v446
        %v448 = vrot.slane %v446, 4
        %v449 = vrot.slane %v443, 5
        %v450 = vsel %vm236, %v448, %v449
        %453 = vst [vmem:[#allocation3 + $0x14] sm:$0xf] %v447
        %454 = vst [vmem:[#allocation3 + $0x78] sm:$0xf] %v450
        %v455 = vld [vmem:[%s162 + $0x4] sm:$0xf]
        %v456 = vld [vmem:[%s162 + $0x8] sm:$0xf]
        %v457 = vld [vmem:[%s162 + $0xc] sm:$0x1]
        %v458 = vunpack.c.l.bf16 %v455
        %v459 = vunpack.c.l.bf16 %v456
        %v460 = vunpack.c.l.bf16 %v457
        %v464 = vrot.slane %v458, 7
        %v465 = vrot.slane %v459, 7
        %v466 = vsel %vm257, %v464, %v465
        %v467 = vrot.slane %v460, 7
        %v468 = vsel %vm257, %v465, %v467
        %v472 = vsub.f32 %v202, %v464
        %v473 = vsub.f32 %v203, %v466
        %v474 = vsub.f32 %v204, %v468
        %v475 = vmax.f32 %v472, %v464
        %v476 = vmax.f32 %v473, %v466
        %v477 = vmax.f32 %v474, %v468
        %v478 = vpack.c.bf16 %v476, %v475
        %v479 = vpack.c.bf16 %v477, %v477
        %v482 = vunpack.c.l.b16 %v478
        %v483 = vunpack.c.h.b16 %v478
        %v484 = vunpack.c.l.b16 %v479
        %v485 = vpack.c.b16 %v482, %v482
        %v486 = vpack.c.b16 %v483, %v483
        %v487 = vpack.c.b16 %v484, %v484
        %v488 = vrot.slane %v485, 5
        %v489 = vrot.slane %v488, 4
        %v490 = vrot.slane %v486, 5
        %v491 = vsel %vm236, %v489, %v490
        %v492 = vrot.slane %v490, 4
        %v493 = vrot.slane %v487, 5
        %v494 = vsel %vm236, %v492, %v493
        %497 = vst [vmem:[#allocation3 + $0x18] sm:$0xf] %v491
        %498 = vst [vmem:[#allocation3 + $0x7c] sm:$0xf] %v494
        %v499 = vld [vmem:[%s162 + $0x4] sm:$0xe]
        %v500 = vld [vmem:[%s162 + $0x8] sm:$0xf]
        %v501 = vld [vmem:[%s162 + $0xc] sm:$0x1]
        %v502 = vunpack.c.l.bf16 %v499
        %v503 = vunpack.c.l.bf16 %v500
        %v504 = vunpack.c.l.bf16 %v501
        %v505 = vsub.f32 %v202, %v502
        %v506 = vsub.f32 %v203, %v503
        %v507 = vsub.f32 %v204, %v504
        %v508 = vmax.f32 %v505, %v502
        %v509 = vmax.f32 %v506, %v503
        %v510 = vmax.f32 %v507, %v504
        %v511 = vpack.c.bf16 %v509, %v508
        %v512 = vpack.c.bf16 %v510, %v510
        %v515 = vunpack.c.l.b16 %v511
        %v516 = vunpack.c.h.b16 %v511
        %v517 = vunpack.c.l.b16 %v512
        %v518 = vpack.c.b16 %v515, %v515
        %v519 = vpack.c.b16 %v516, %v516
        %v520 = vpack.c.b16 %v517, %v517
        %v521 = vrot.slane %v518, 5
        %v522 = vrot.slane %v521, 4
        %v523 = vrot.slane %v519, 5
        %v524 = vsel %vm236, %v522, %v523
        %v525 = vrot.slane %v523, 4
        %v526 = vrot.slane %v520, 5
        %v527 = vsel %vm236, %v525, %v526
        %530 = vst [vmem:[#allocation3 + $0x1c] sm:$0xf] %v524
        %531 = vst [vmem:[#allocation3 + $0x80] sm:$0xf] %v527
        %v532 = vld [vmem:[%s162 + $0x4] sm:$0xe]
        %v533 = vld [vmem:[%s162 + $0x8] sm:$0xf]
        %v534 = vld [vmem:[%s162 + $0xc] sm:$0x3]
        %v535 = vunpack.c.l.bf16 %v532
        %v536 = vunpack.c.l.bf16 %v533
        %v537 = vunpack.c.l.bf16 %v534
        %v541 = vrot.slane %v535, 1
        %v542 = vrot.slane %v536, 1
        %v543 = vsel %vm335, %v541, %v542
        %v544 = vrot.slane %v537, 1
        %v545 = vsel %vm335, %v542, %v544
        %v549 = vsub.f32 %v202, %v543
        %v550 = vsub.f32 %v203, %v545
        %v551 = vsub.f32 %v204, %v544
        %v552 = vmax.f32 %v549, %v543
        %v553 = vmax.f32 %v550, %v545
        %v554 = vmax.f32 %v551, %v544
        %v555 = vpack.c.bf16 %v553, %v552
        %v556 = vpack.c.bf16 %v554, %v554
        %v559 = vunpack.c.l.b16 %v555
        %v560 = vunpack.c.h.b16 %v555
        %v561 = vunpack.c.l.b16 %v556
        %v562 = vpack.c.b16 %v559, %v559
        %v563 = vpack.c.b16 %v560, %v560
        %v564 = vpack.c.b16 %v561, %v561
        %v565 = vrot.slane %v562, 5
        %v566 = vrot.slane %v565, 4
        %v567 = vrot.slane %v563, 5
        %v568 = vsel %vm236, %v566, %v567
        %v569 = vrot.slane %v567, 4
        %v570 = vrot.slane %v564, 5
        %v571 = vsel %vm236, %v569, %v570
        %574 = vst [vmem:[#allocation3 + $0x20] sm:$0xf] %v568
        %575 = vst [vmem:[#allocation3 + $0x84] sm:$0xf] %v571
        %v576 = vld [vmem:[%s162 + $0x4] sm:$0xc]
        %v577 = vld [vmem:[%s162 + $0x8] sm:$0xf]
        %v578 = vld [vmem:[%s162 + $0xc] sm:$0x3]
        %v579 = vunpack.c.l.bf16 %v576
        %v580 = vunpack.c.l.bf16 %v577
        %v581 = vunpack.c.l.bf16 %v578
        %v585 = vrot.slane %v579, 2
        %v586 = vrot.slane %v580, 2
        %v587 = vsel %vm380, %v585, %v586
        %v588 = vrot.slane %v581, 2
        %v589 = vsel %vm380, %v586, %v588
        %v593 = vsub.f32 %v202, %v587
        %v594 = vsub.f32 %v203, %v589
        %v595 = vsub.f32 %v204, %v588
        %v596 = vmax.f32 %v593, %v587
        %v597 = vmax.f32 %v594, %v589
        %v598 = vmax.f32 %v595, %v588
        %v599 = vpack.c.bf16 %v597, %v596
        %v600 = vpack.c.bf16 %v598, %v598
        %v603 = vunpack.c.l.b16 %v599
        %v604 = vunpack.c.h.b16 %v599
        %v605 = vunpack.c.l.b16 %v600
        %v606 = vpack.c.b16 %v603, %v603
        %v607 = vpack.c.b16 %v604, %v604
        %v608 = vpack.c.b16 %v605, %v605
        %v609 = vrot.slane %v606, 5
        %v610 = vrot.slane %v609, 4
        %v611 = vrot.slane %v607, 5
        %v612 = vsel %vm236, %v610, %v611
        %v613 = vrot.slane %v611, 4
        %v614 = vrot.slane %v608, 5
        %v615 = vsel %vm236, %v613, %v614
        %618 = vst [vmem:[#allocation3 + $0x24] sm:$0xf] %v612
        %619 = vst [vmem:[#allocation3 + $0x88] sm:$0xf] %v615
        %v620 = vld [vmem:[%s162 + $0x8] sm:$0xf]
        %v621 = vld [vmem:[%s162 + $0xc] sm:$0xf]
        %v622 = vunpack.c.l.bf16 %v620
        %v623 = vunpack.c.l.bf16 %v621
        %v626 = vrot.slane %v622, 6
        %v627 = vrot.slane %v623, 6
        %v628 = vsel %vm211, %v626, %v627
        %v632 = vsub.f32 %v202, %v626
        %v633 = vsub.f32 %v203, %v628
        %v634 = vsub.f32 %v204, %v627
        %v635 = vmax.f32 %v632, %v626
        %v636 = vmax.f32 %v633, %v628
        %v637 = vmax.f32 %v634, %v627
        %v638 = vpack.c.bf16 %v636, %v635
        %v639 = vpack.c.bf16 %v637, %v637
        %v642 = vunpack.c.l.b16 %v638
        %v643 = vunpack.c.h.b16 %v638
        %v644 = vunpack.c.l.b16 %v639
        %v645 = vpack.c.b16 %v642, %v642
        %v646 = vpack.c.b16 %v643, %v643
        %v647 = vpack.c.b16 %v644, %v644
        %v648 = vrot.slane %v645, 5
        %v649 = vrot.slane %v648, 4
        %v650 = vrot.slane %v646, 5
        %v651 = vsel %vm236, %v649, %v650
        %v652 = vrot.slane %v650, 4
        %v653 = vrot.slane %v647, 5
        %v654 = vsel %vm236, %v652, %v653
        %657 = vst [vmem:[#allocation3 + $0x28] sm:$0xf] %v651
        %658 = vst [vmem:[#allocation3 + $0x8c] sm:$0xf] %v654
        %v659 = vld [vmem:[%s162 + $0x8] sm:$0xf]
        %v660 = vld [vmem:[%s162 + $0xc] sm:$0xf]
        %v661 = vld [vmem:[%s162 + $0x10] sm:$0x1]
        %v662 = vunpack.c.l.bf16 %v659
        %v663 = vunpack.c.l.bf16 %v660
        %v664 = vunpack.c.l.bf16 %v661
        %v668 = vrot.slane %v662, 7
        %v669 = vrot.slane %v663, 7
        %v670 = vsel %vm257, %v668, %v669
        %v671 = vrot.slane %v664, 7
        %v672 = vsel %vm257, %v669, %v671
        %v676 = vsub.f32 %v202, %v668
        %v677 = vsub.f32 %v203, %v670
        %v678 = vsub.f32 %v204, %v672
        %v679 = vmax.f32 %v676, %v668
        %v680 = vmax.f32 %v677, %v670
        %v681 = vmax.f32 %v678, %v672
        %v682 = vpack.c.bf16 %v680, %v679
        %v683 = vpack.c.bf16 %v681, %v681
        %v686 = vunpack.c.l.b16 %v682
        %v687 = vunpack.c.h.b16 %v682
        %v688 = vunpack.c.l.b16 %v683
        %v689 = vpack.c.b16 %v686, %v686
        %v690 = vpack.c.b16 %v687, %v687
        %v691 = vpack.c.b16 %v688, %v688
        %v692 = vrot.slane %v689, 5
        %v693 = vrot.slane %v692, 4
        %v694 = vrot.slane %v690, 5
        %v695 = vsel %vm236, %v693, %v694
        %v696 = vrot.slane %v694, 4
        %v697 = vrot.slane %v691, 5
        %v698 = vsel %vm236, %v696, %v697
        %701 = vst [vmem:[#allocation3 + $0x2c] sm:$0xf] %v695
        %702 = vst [vmem:[#allocation3 + $0x90] sm:$0xf] %v698
        %v706 = vrot.slane %v196, 5
        %v707 = vrot.slane %v706, 4
        %v708 = vrot.slane %v197, 5
        %v709 = vsel %vm236, %v707, %v708
        %v710 = vrot.slane %v708, 4
        %v711 = vrot.slane %v198, 5
        %v712 = vsel %vm236, %v710, %v711
        %715 = vst [vmem:[#allocation3 + $0x30] sm:$0xf] %v709
        %716 = vst [vmem:[#allocation3 + $0x94] sm:$0xf] %v712
        %v717 = vld [vmem:[%s162 + $0x8] sm:$0xe]
        %v718 = vld [vmem:[%s162 + $0xc] sm:$0xf]
        %v719 = vld [vmem:[%s162 + $0x10] sm:$0x3]
        %v720 = vunpack.c.l.bf16 %v717
        %v721 = vunpack.c.l.bf16 %v718
        %v722 = vunpack.c.l.bf16 %v719
        %v726 = vrot.slane %v720, 1
        %v727 = vrot.slane %v721, 1
        %v728 = vsel %vm335, %v726, %v727
        %v729 = vrot.slane %v722, 1
        %v730 = vsel %vm335, %v727, %v729
        %v734 = vsub.f32 %v202, %v728
        %v735 = vsub.f32 %v203, %v730
        %v736 = vsub.f32 %v204, %v729
        %v737 = vmax.f32 %v734, %v728
        %v738 = vmax.f32 %v735, %v730
        %v739 = vmax.f32 %v736, %v729
        %v740 = vpack.c.bf16 %v738, %v737
        %v741 = vpack.c.bf16 %v739, %v739
        %v744 = vunpack.c.l.b16 %v740
        %v745 = vunpack.c.h.b16 %v740
        %v746 = vunpack.c.l.b16 %v741
        %v747 = vpack.c.b16 %v744, %v744
        %v748 = vpack.c.b16 %v745, %v745
        %v749 = vpack.c.b16 %v746, %v746
        %v750 = vrot.slane %v747, 5
        %v751 = vrot.slane %v750, 4
        %v752 = vrot.slane %v748, 5
        %v753 = vsel %vm236, %v751, %v752
        %v754 = vrot.slane %v752, 4
        %v755 = vrot.slane %v749, 5
        %v756 = vsel %vm236, %v754, %v755
        %759 = vst [vmem:[#allocation3 + $0x34] sm:$0xf] %v753
        %760 = vst [vmem:[#allocation3 + $0x98] sm:$0xf] %v756
        %v761 = vld [vmem:[%s162 + $0x8] sm:$0xc]
        %v762 = vld [vmem:[%s162 + $0xc] sm:$0xf]
        %v763 = vld [vmem:[%s162 + $0x10] sm:$0x3]
        %v764 = vunpack.c.l.bf16 %v761
        %v765 = vunpack.c.l.bf16 %v762
        %v766 = vunpack.c.l.bf16 %v763
        %v770 = vrot.slane %v764, 2
        %v771 = vrot.slane %v765, 2
        %v772 = vsel %vm380, %v770, %v771
        %v773 = vrot.slane %v766, 2
        %v774 = vsel %vm380, %v771, %v773
        %v778 = vsub.f32 %v202, %v772
        %v779 = vsub.f32 %v203, %v774
        %v780 = vsub.f32 %v204, %v773
        %v781 = vmax.f32 %v778, %v772
        %v782 = vmax.f32 %v779, %v774
        %v783 = vmax.f32 %v780, %v773
        %v784 = vpack.c.bf16 %v782, %v781
        %v785 = vpack.c.bf16 %v783, %v783
        %v788 = vunpack.c.l.b16 %v784
        %v789 = vunpack.c.h.b16 %v784
        %v790 = vunpack.c.l.b16 %v785
        %v791 = vpack.c.b16 %v788, %v788
        %v792 = vpack.c.b16 %v789, %v789
        %v793 = vpack.c.b16 %v790, %v790
        %v794 = vrot.slane %v791, 5
        %v795 = vrot.slane %v794, 4
        %v796 = vrot.slane %v792, 5
        %v797 = vsel %vm236, %v795, %v796
        %v798 = vrot.slane %v796, 4
        %v799 = vrot.slane %v793, 5
        %v800 = vsel %vm236, %v798, %v799
        %803 = vst [vmem:[#allocation3 + $0x38] sm:$0xf] %v797
        %804 = vst [vmem:[#allocation3 + $0x9c] sm:$0xf] %v800
        %v805 = vld [vmem:[%s162 + $0xc] sm:$0xf]
        %v806 = vld [vmem:[%s162 + $0x10] sm:$0xf]
        %v807 = vunpack.c.l.bf16 %v805
        %v808 = vunpack.c.l.bf16 %v806
        %v811 = vrot.slane %v807, 6
        %v812 = vrot.slane %v808, 6
        %v813 = vsel %vm211, %v811, %v812
        %v817 = vsub.f32 %v202, %v811
        %v818 = vsub.f32 %v203, %v813
        %v819 = vsub.f32 %v204, %v812
        %v820 = vmax.f32 %v817, %v811
        %v821 = vmax.f32 %v818, %v813
        %v822 = vmax.f32 %v819, %v812
        %v823 = vpack.c.bf16 %v821, %v820
        %v824 = vpack.c.bf16 %v822, %v822
        %v827 = vunpack.c.l.b16 %v823
        %v828 = vunpack.c.h.b16 %v823
        %v829 = vunpack.c.l.b16 %v824
        %v830 = vpack.c.b16 %v827, %v827
        %v831 = vpack.c.b16 %v828, %v828
        %v832 = vpack.c.b16 %v829, %v829
        %v833 = vrot.slane %v830, 5
        %v834 = vrot.slane %v833, 4
        %v835 = vrot.slane %v831, 5
        %v836 = vsel %vm236, %v834, %v835
        %v837 = vrot.slane %v835, 4
        %v838 = vrot.slane %v832, 5
        %v839 = vsel %vm236, %v837, %v838
        %842 = vst [vmem:[#allocation3 + $0x3c] sm:$0xf] %v836
        %843 = vst [vmem:[#allocation3 + $0xa0] sm:$0xf] %v839
        %v844 = vld [vmem:[%s162 + $0xc] sm:$0xf]
        %v845 = vld [vmem:[%s162 + $0x10] sm:$0xf]
        %v846 = vld [vmem:[%s162 + $0x14] sm:$0x1]
        %v847 = vunpack.c.l.bf16 %v844
        %v848 = vunpack.c.l.bf16 %v845
        %v849 = vunpack.c.l.bf16 %v846
        %v853 = vrot.slane %v847, 7
        %v854 = vrot.slane %v848, 7
        %v855 = vsel %vm257, %v853, %v854
        %v856 = vrot.slane %v849, 7
        %v857 = vsel %vm257, %v854, %v856
        %v861 = vsub.f32 %v202, %v853
        %v862 = vsub.f32 %v203, %v855
        %v863 = vsub.f32 %v204, %v857
        %v864 = vmax.f32 %v861, %v853
        %v865 = vmax.f32 %v862, %v855
        %v866 = vmax.f32 %v863, %v857
        %v867 = vpack.c.bf16 %v865, %v864
        %v868 = vpack.c.bf16 %v866, %v866
        %v871 = vunpack.c.l.b16 %v867
        %v872 = vunpack.c.h.b16 %v867
        %v873 = vunpack.c.l.b16 %v868
        %v874 = vpack.c.b16 %v871, %v871
        %v875 = vpack.c.b16 %v872, %v872
        %v876 = vpack.c.b16 %v873, %v873
        %v877 = vrot.slane %v874, 5
        %v878 = vrot.slane %v877, 4
        %v879 = vrot.slane %v875, 5
        %v880 = vsel %vm236, %v878, %v879
        %v881 = vrot.slane %v879, 4
        %v882 = vrot.slane %v876, 5
        %v883 = vsel %vm236, %v881, %v882
        %886 = vst [vmem:[#allocation3 + $0x40] sm:$0xf] %v880
        %887 = vst [vmem:[#allocation3 + $0xa4] sm:$0xf] %v883
        %v888 = vld [vmem:[%s162 + $0xc] sm:$0xe]
        %v889 = vld [vmem:[%s162 + $0x10] sm:$0xf]
        %v890 = vld [vmem:[%s162 + $0x14] sm:$0x1]
        %v891 = vunpack.c.l.bf16 %v888
        %v892 = vunpack.c.l.bf16 %v889
        %v893 = vunpack.c.l.bf16 %v890
        %v894 = vsub.f32 %v202, %v891
        %v895 = vsub.f32 %v203, %v892
        %v896 = vsub.f32 %v204, %v893
        %v897 = vmax.f32 %v894, %v891
        %v898 = vmax.f32 %v895, %v892
        %v899 = vmax.f32 %v896, %v893
        %v900 = vpack.c.bf16 %v898, %v897
        %v901 = vpack.c.bf16 %v899, %v899
        %v904 = vunpack.c.l.b16 %v900
        %v905 = vunpack.c.h.b16 %v900
        %v906 = vunpack.c.l.b16 %v901
        %v907 = vpack.c.b16 %v904, %v904
        %v908 = vpack.c.b16 %v905, %v905
        %v909 = vpack.c.b16 %v906, %v906
        %v910 = vrot.slane %v907, 5
        %v911 = vrot.slane %v910, 4
        %v912 = vrot.slane %v908, 5
        %v913 = vsel %vm236, %v911, %v912
        %v914 = vrot.slane %v912, 4
        %v915 = vrot.slane %v909, 5
        %v916 = vsel %vm236, %v914, %v915
        %919 = vst [vmem:[#allocation3 + $0x44] sm:$0xf] %v913
        %920 = vst [vmem:[#allocation3 + $0xa8] sm:$0xf] %v916
        %v921 = vld [vmem:[%s162 + $0xc] sm:$0xe]
        %v922 = vld [vmem:[%s162 + $0x10] sm:$0xf]
        %v923 = vld [vmem:[%s162 + $0x14] sm:$0x3]
        %v924 = vunpack.c.l.bf16 %v921
        %v925 = vunpack.c.l.bf16 %v922
        %v926 = vunpack.c.l.bf16 %v923
        %v930 = vrot.slane %v924, 1
        %v931 = vrot.slane %v925, 1
        %v932 = vsel %vm335, %v930, %v931
        %v933 = vrot.slane %v926, 1
        %v934 = vsel %vm335, %v931, %v933
        %v938 = vsub.f32 %v202, %v932
        %v939 = vsub.f32 %v203, %v934
        %v940 = vsub.f32 %v204, %v933
        %v941 = vmax.f32 %v938, %v932
        %v942 = vmax.f32 %v939, %v934
        %v943 = vmax.f32 %v940, %v933
        %v944 = vpack.c.bf16 %v942, %v941
        %v945 = vpack.c.bf16 %v943, %v943
        %v948 = vunpack.c.l.b16 %v944
        %v949 = vunpack.c.h.b16 %v944
        %v950 = vunpack.c.l.b16 %v945
        %v951 = vpack.c.b16 %v948, %v948
        %v952 = vpack.c.b16 %v949, %v949
        %v953 = vpack.c.b16 %v950, %v950
        %v954 = vrot.slane %v951, 5
        %v955 = vrot.slane %v954, 4
        %v956 = vrot.slane %v952, 5
        %v957 = vsel %vm236, %v955, %v956
        %v958 = vrot.slane %v956, 4
        %v959 = vrot.slane %v953, 5
        %v960 = vsel %vm236, %v958, %v959
        %963 = vst [vmem:[#allocation3 + $0x48] sm:$0xf] %v957
        %964 = vst [vmem:[#allocation3 + $0xac] sm:$0xf] %v960
        %v965 = vld [vmem:[%s162 + $0xc] sm:$0xc]
        %v966 = vld [vmem:[%s162 + $0x10] sm:$0xf]
        %v967 = vld [vmem:[%s162 + $0x14] sm:$0x3]
        %v968 = vunpack.c.l.bf16 %v965
        %v969 = vunpack.c.l.bf16 %v966
        %v970 = vunpack.c.l.bf16 %v967
        %v974 = vrot.slane %v968, 2
        %v975 = vrot.slane %v969, 2
        %v976 = vsel %vm380, %v974, %v975
        %v977 = vrot.slane %v970, 2
        %v978 = vsel %vm380, %v975, %v977
        %v982 = vsub.f32 %v202, %v976
        %v983 = vsub.f32 %v203, %v978
        %v984 = vsub.f32 %v204, %v977
        %v985 = vmax.f32 %v982, %v976
        %v986 = vmax.f32 %v983, %v978
        %v987 = vmax.f32 %v984, %v977
        %v988 = vpack.c.bf16 %v986, %v985
        %v989 = vpack.c.bf16 %v987, %v987
        %v992 = vunpack.c.l.b16 %v988
        %v993 = vunpack.c.h.b16 %v988
        %v994 = vunpack.c.l.b16 %v989
        %v995 = vpack.c.b16 %v992, %v992
        %v996 = vpack.c.b16 %v993, %v993
        %v997 = vpack.c.b16 %v994, %v994
        %v998 = vrot.slane %v995, 5
        %v999 = vrot.slane %v998, 4
        %v1000 = vrot.slane %v996, 5
        %v1001 = vsel %vm236, %v999, %v1000
        %v1002 = vrot.slane %v1000, 4
        %v1003 = vrot.slane %v997, 5
        %v1004 = vsel %vm236, %v1002, %v1003
        %1007 = vst [vmem:[#allocation3 + $0x4c] sm:$0xf] %v1001
        %1008 = vst [vmem:[#allocation3 + $0xb0] sm:$0xf] %v1004
        %v1009 = vld [vmem:[%s162 + $0x10] sm:$0xf]
        %v1010 = vld [vmem:[%s162 + $0x14] sm:$0xf]
        %v1011 = vunpack.c.l.bf16 %v1009
        %v1012 = vunpack.c.l.bf16 %v1010
        %v1015 = vrot.slane %v1011, 6
        %v1016 = vrot.slane %v1012, 6
        %v1017 = vsel %vm211, %v1015, %v1016
        %v1021 = vsub.f32 %v202, %v1015
        %v1022 = vsub.f32 %v203, %v1017
        %v1023 = vsub.f32 %v204, %v1016
        %v1024 = vmax.f32 %v1021, %v1015
        %v1025 = vmax.f32 %v1022, %v1017
        %v1026 = vmax.f32 %v1023, %v1016
        %v1027 = vpack.c.bf16 %v1025, %v1024
        %v1028 = vpack.c.bf16 %v1026, %v1026
        %v1031 = vunpack.c.l.b16 %v1027
        %v1032 = vunpack.c.h.b16 %v1027
        %v1033 = vunpack.c.l.b16 %v1028
        %v1034 = vpack.c.b16 %v1031, %v1031
        %v1035 = vpack.c.b16 %v1032, %v1032
        %v1036 = vpack.c.b16 %v1033, %v1033
        %v1037 = vrot.slane %v1034, 5
        %v1038 = vrot.slane %v1037, 4
        %v1039 = vrot.slane %v1035, 5
        %v1040 = vsel %vm236, %v1038, %v1039
        %v1041 = vrot.slane %v1039, 4
        %v1042 = vrot.slane %v1036, 5
        %v1043 = vsel %vm236, %v1041, %v1042
        %1046 = vst [vmem:[#allocation3 + $0x50] sm:$0xf] %v1040
        %1047 = vst [vmem:[#allocation3 + $0xb4] sm:$0xf] %v1043
        %v1048 = vld [vmem:[%s162 + $0x10] sm:$0xf]
        %v1049 = vld [vmem:[%s162 + $0x14] sm:$0xf]
        %v1050 = vld [vmem:[%s162 + $0x18] sm:$0x1]
        %v1051 = vunpack.c.l.bf16 %v1048
        %v1052 = vunpack.c.l.bf16 %v1049
        %v1053 = vunpack.c.l.bf16 %v1050
        %v1057 = vrot.slane %v1051, 7
        %v1058 = vrot.slane %v1052, 7
        %v1059 = vsel %vm257, %v1057, %v1058
        %v1060 = vrot.slane %v1053, 7
        %v1061 = vsel %vm257, %v1058, %v1060
        %v1065 = vsub.f32 %v202, %v1057
        %v1066 = vsub.f32 %v203, %v1059
        %v1067 = vsub.f32 %v204, %v1061
        %v1068 = vmax.f32 %v1065, %v1057
        %v1069 = vmax.f32 %v1066, %v1059
        %v1070 = vmax.f32 %v1067, %v1061
        %v1071 = vpack.c.bf16 %v1069, %v1068
        %v1072 = vpack.c.bf16 %v1070, %v1070
        %v1075 = vunpack.c.l.b16 %v1071
        %v1076 = vunpack.c.h.b16 %v1071
        %v1077 = vunpack.c.l.b16 %v1072
        %v1078 = vpack.c.b16 %v1075, %v1075
        %v1079 = vpack.c.b16 %v1076, %v1076
        %v1080 = vpack.c.b16 %v1077, %v1077
        %v1081 = vrot.slane %v1078, 5
        %v1082 = vrot.slane %v1081, 4
        %v1083 = vrot.slane %v1079, 5
        %v1084 = vsel %vm236, %v1082, %v1083
        %v1085 = vrot.slane %v1083, 4
        %v1086 = vrot.slane %v1080, 5
        %v1087 = vsel %vm236, %v1085, %v1086
        %1090 = vst [vmem:[#allocation3 + $0x54] sm:$0xf] %v1084
        %1091 = vst [vmem:[#allocation3 + $0xb8] sm:$0xf] %v1087
        %v1092 = vld [vmem:[%s162 + $0x10] sm:$0xe]
        %v1093 = vld [vmem:[%s162 + $0x14] sm:$0xf]
        %v1094 = vld [vmem:[%s162 + $0x18] sm:$0x1]
        %v1095 = vunpack.c.l.bf16 %v1092
        %v1096 = vunpack.c.l.bf16 %v1093
        %v1097 = vunpack.c.l.bf16 %v1094
        %v1098 = vsub.f32 %v202, %v1095
        %v1099 = vsub.f32 %v203, %v1096
        %v1100 = vsub.f32 %v204, %v1097
        %v1101 = vmax.f32 %v1098, %v1095
        %v1102 = vmax.f32 %v1099, %v1096
        %v1103 = vmax.f32 %v1100, %v1097
        %v1104 = vpack.c.bf16 %v1102, %v1101
        %v1105 = vpack.c.bf16 %v1103, %v1103
        %v1108 = vunpack.c.l.b16 %v1104
        %v1109 = vunpack.c.h.b16 %v1104
        %v1110 = vunpack.c.l.b16 %v1105
        %v1111 = vpack.c.b16 %v1108, %v1108
        %v1112 = vpack.c.b16 %v1109, %v1109
        %v1113 = vpack.c.b16 %v1110, %v1110
        %v1114 = vrot.slane %v1111, 5
        %v1115 = vrot.slane %v1114, 4
        %v1116 = vrot.slane %v1112, 5
        %v1117 = vsel %vm236, %v1115, %v1116
        %v1118 = vrot.slane %v1116, 4
        %v1119 = vrot.slane %v1113, 5
        %v1120 = vsel %vm236, %v1118, %v1119
        %1123 = vst [vmem:[#allocation3 + $0x58] sm:$0xf] %v1117
        %1124 = vst [vmem:[#allocation3 + $0xbc] sm:$0xf] %v1120
        %v1125 = vld [vmem:[%s162 + $0x10] sm:$0xe]
        %v1126 = vld [vmem:[%s162 + $0x14] sm:$0xf]
        %v1127 = vld [vmem:[%s162 + $0x18] sm:$0x3]
        %v1128 = vunpack.c.l.bf16 %v1125
        %v1129 = vunpack.c.l.bf16 %v1126
        %v1130 = vunpack.c.l.bf16 %v1127
        %v1134 = vrot.slane %v1128, 1
        %v1135 = vrot.slane %v1129, 1
        %v1136 = vsel %vm335, %v1134, %v1135
        %v1137 = vrot.slane %v1130, 1
        %v1138 = vsel %vm335, %v1135, %v1137
        %v1142 = vsub.f32 %v202, %v1136
        %v1143 = vsub.f32 %v203, %v1138
        %v1144 = vsub.f32 %v204, %v1137
        %v1145 = vmax.f32 %v1142, %v1136
        %v1146 = vmax.f32 %v1143, %v1138
        %v1147 = vmax.f32 %v1144, %v1137
        %v1148 = vpack.c.bf16 %v1146, %v1145
        %v1149 = vpack.c.bf16 %v1147, %v1147
        %v1152 = vunpack.c.l.b16 %v1148
        %v1153 = vunpack.c.h.b16 %v1148
        %v1154 = vunpack.c.l.b16 %v1149
        %v1155 = vpack.c.b16 %v1152, %v1152
        %v1156 = vpack.c.b16 %v1153, %v1153
        %v1157 = vpack.c.b16 %v1154, %v1154
        %v1158 = vrot.slane %v1155, 5
        %v1159 = vrot.slane %v1158, 4
        %v1160 = vrot.slane %v1156, 5
        %v1161 = vsel %vm236, %v1159, %v1160
        %v1162 = vrot.slane %v1160, 4
        %v1163 = vrot.slane %v1157, 5
        %v1164 = vsel %vm236, %v1162, %v1163
        %1167 = vst [vmem:[#allocation3 + $0x5c] sm:$0xf] %v1161
        %1168 = vst [vmem:[#allocation3 + $0xc0] sm:$0xf] %v1164
        %v1169 = vld [vmem:[%s162 + $0x10] sm:$0xc]
        %v1170 = vld [vmem:[%s162 + $0x14] sm:$0xf]
        %v1171 = vld [vmem:[%s162 + $0x18] sm:$0x3]
        %v1172 = vunpack.c.l.bf16 %v1169
        %v1173 = vunpack.c.l.bf16 %v1170
        %v1174 = vunpack.c.l.bf16 %v1171
        %v1178 = vrot.slane %v1172, 2
        %v1179 = vrot.slane %v1173, 2
        %v1180 = vsel %vm380, %v1178, %v1179
        %v1181 = vrot.slane %v1174, 2
        %v1182 = vsel %vm380, %v1179, %v1181
        %v1186 = vsub.f32 %v202, %v1180
        %v1187 = vsub.f32 %v203, %v1182
        %v1188 = vsub.f32 %v204, %v1181
        %v1189 = vmax.f32 %v1186, %v1180
        %v1190 = vmax.f32 %v1187, %v1182
        %v1191 = vmax.f32 %v1188, %v1181
        %v1192 = vpack.c.bf16 %v1190, %v1189
        %v1193 = vpack.c.bf16 %v1191, %v1191
        %v1196 = vunpack.c.l.b16 %v1192
        %v1197 = vunpack.c.h.b16 %v1192
        %v1198 = vunpack.c.l.b16 %v1193
        %v1199 = vpack.c.b16 %v1196, %v1196
        %v1200 = vpack.c.b16 %v1197, %v1197
        %v1201 = vpack.c.b16 %v1198, %v1198
        %v1202 = vrot.slane %v1199, 5
        %v1203 = vrot.slane %v1202, 4
        %v1204 = vrot.slane %v1200, 5
        %v1205 = vsel %vm236, %v1203, %v1204
        %v1206 = vrot.slane %v1204, 4
        %v1207 = vrot.slane %v1201, 5
        %v1208 = vsel %vm236, %v1206, %v1207
        %1211 = vst [vmem:[#allocation3 + $0x60] sm:$0xf] %v1205
        %1212 = vst [vmem:[#allocation3 + $0xc4] sm:$0xf] %v1208
        %v1213 = vld [vmem:[#allocation3] sm:$0xff]
        %v1214 = vld [vmem:[#allocation3 + $0x8] sm:$0xff]
        %v1215 = vld [vmem:[#allocation3 + $0x10] sm:$0xff]
        %v1216 = vld [vmem:[#allocation3 + $0x18] sm:$0xff]
        %v1217 = vld [vmem:[#allocation3 + $0x20] sm:$0xff]
        %v1218 = vld [vmem:[#allocation3 + $0x28] sm:$0xff]
        %v1219 = vld [vmem:[#allocation3 + $0x30] sm:$0xff]
        %v1220 = vld [vmem:[#allocation3 + $0x38] sm:$0xff]
        %v1221 = vld [vmem:[#allocation3 + $0x40] sm:$0xff]
        %v1222 = vld [vmem:[#allocation3 + $0x48] sm:$0xff]
        %v1223 = vld [vmem:[#allocation3 + $0x50] sm:$0xff]
        %v1224 = vld [vmem:[#allocation3 + $0x58] sm:$0xff]
        %v1225 = vld [vmem:[#allocation3 + $0x60] sm:$0xf]
        %v1226 = vld [vmem:[#allocation3 + $0x64] sm:$0xff]
        %v1227 = vld [vmem:[#allocation3 + $0x6c] sm:$0xff]
        %v1228 = vld [vmem:[#allocation3 + $0x74] sm:$0xff]
        %v1229 = vld [vmem:[#allocation3 + $0x7c] sm:$0xff]
        %v1230 = vld [vmem:[#allocation3 + $0x84] sm:$0xff]
        %v1231 = vld [vmem:[#allocation3 + $0x8c] sm:$0xff]
        %v1232 = vld [vmem:[#allocation3 + $0x94] sm:$0xff]
        %v1233 = vld [vmem:[#allocation3 + $0x9c] sm:$0xff]
        %v1234 = vld [vmem:[#allocation3 + $0xa4] sm:$0xff]
        %v1235 = vld [vmem:[#allocation3 + $0xac] sm:$0xff]
        %v1236 = vld [vmem:[#allocation3 + $0xb4] sm:$0xff]
        %v1237 = vld [vmem:[#allocation3 + $0xbc] sm:$0xff]
        %v1238 = vld [vmem:[#allocation3 + $0xc4] sm:$0xf]
        %v1239 = vld [vmem:[#allocation5] sm:$0xf]
        %v1240 = vld [vmem:[#allocation5 + $0x4] sm:$0xf]
        %v1241 = vld [vmem:[#allocation5 + $0x8] sm:$0xf]
        %v1242 = vld [vmem:[#allocation5 + $0xc] sm:$0xf]
        %v1243 = vld [vmem:[#allocation5 + $0x10] sm:$0xf]
        %v1244 = vld [vmem:[#allocation5 + $0x14] sm:$0xf]
        %v1245 = vld [vmem:[#allocation5 + $0x18] sm:$0xf]
        %v1246 = vld [vmem:[#allocation5 + $0x1c] sm:$0xf]
        %v1247 = vld [vmem:[#allocation5 + $0x20] sm:$0xf]
        %v1248 = vld [vmem:[#allocation5 + $0x24] sm:$0xf]
        %v1249 = vld [vmem:[#allocation5 + $0x28] sm:$0xf]
        %v1250 = vld [vmem:[#allocation5 + $0x2c] sm:$0xf]
        %v1251 = vld [vmem:[#allocation5 + $0x30] sm:$0xf]
        %v1252 = vld [vmem:[#allocation5 + $0x34] sm:$0xf]
        %v1253 = vld [vmem:[#allocation5 + $0x38] sm:$0xf]
        %v1254 = vld [vmem:[#allocation5 + $0x3c] sm:$0xf]
        %v1255 = vld [vmem:[#allocation5 + $0x40] sm:$0xf]
        %v1256 = vld [vmem:[#allocation5 + $0x44] sm:$0xf]
        %v1257 = vld [vmem:[#allocation5 + $0x48] sm:$0xf]
        %v1258 = vld [vmem:[#allocation5 + $0x4c] sm:$0xf]
        %v1259 = vld [vmem:[#allocation5 + $0x50] sm:$0xf]
        %v1260 = vld [vmem:[#allocation5 + $0x54] sm:$0xf]
        %v1261 = vld [vmem:[#allocation5 + $0x58] sm:$0xf]
        %v1262 = vld [vmem:[#allocation5 + $0x5c] sm:$0xf]
        %v1263 = vld [vmem:[#allocation5 + $0x60] sm:$0xf]
        %v1264 = vld [vmem:[#allocation5 + $0x64] sm:$0xf]
        %v1265 = vld [vmem:[#allocation5 + $0x68] sm:$0xf]
        %v1266 = vld [vmem:[#allocation5 + $0x6c] sm:$0xf]
        %v1267 = vld [vmem:[#allocation5 + $0x70] sm:$0xf]
        %v1268 = vld [vmem:[#allocation5 + $0x74] sm:$0xf]
        %v1269 = vld [vmem:[#allocation5 + $0x78] sm:$0xf]
        %v1270 = vld [vmem:[#allocation5 + $0x7c] sm:$0xf]
        %v1271 = vld [vmem:[#allocation5 + $0x80] sm:$0xf]
        %v1272 = vld [vmem:[#allocation5 + $0x84] sm:$0xf]
        %v1273 = vld [vmem:[#allocation5 + $0x88] sm:$0xf]
        %v1274 = vld [vmem:[#allocation5 + $0x8c] sm:$0xf]
        %v1275 = vld [vmem:[#allocation5 + $0x90] sm:$0xf]
        %v1276 = vld [vmem:[#allocation5 + $0x94] sm:$0xf]
        %v1277 = vld [vmem:[#allocation5 + $0x98] sm:$0xf]
        %v1278 = vld [vmem:[#allocation5 + $0x9c] sm:$0xf]
        %v1279 = vld [vmem:[#allocation5 + $0xa0] sm:$0xf]
        %v1280 = vld [vmem:[#allocation5 + $0xa4] sm:$0xf]
        %v1281 = vld [vmem:[#allocation5 + $0xa8] sm:$0xf]
        %v1282 = vld [vmem:[#allocation5 + $0xac] sm:$0xf]
        %v1283 = vld [vmem:[#allocation5 + $0xb0] sm:$0xf]
        %v1284 = vld [vmem:[#allocation5 + $0xb4] sm:$0xf]
        %v1285 = vld [vmem:[#allocation5 + $0xb8] sm:$0xf]
        %v1286 = vld [vmem:[#allocation5 + $0xbc] sm:$0xf]
        %v1287 = vld [vmem:[#allocation5 + $0xc0] sm:$0xf]
        %v1288 = vld [vmem:[#allocation5 + $0xc4] sm:$0xf]
        %v1289 = vld [vmem:[#allocation5 + $0xc8] sm:$0xf]
        %v1290 = vld [vmem:[#allocation5 + $0xcc] sm:$0xf]
        %v1291 = vld [vmem:[#allocation5 + $0xd0] sm:$0xf]
        %v1292 = vld [vmem:[#allocation5 + $0xd4] sm:$0xf]
        %v1293 = vld [vmem:[#allocation5 + $0xd8] sm:$0xf]
        %v1294 = vld [vmem:[#allocation5 + $0xdc] sm:$0xf]
        %v1295 = vld [vmem:[#allocation5 + $0xe0] sm:$0xf]
        %v1296 = vld [vmem:[#allocation5 + $0xe4] sm:$0xf]
        %v1297 = vld [vmem:[#allocation5 + $0xe8] sm:$0xf]
        %v1298 = vld [vmem:[#allocation5 + $0xec] sm:$0xf]
        %v1299 = vld [vmem:[#allocation5 + $0xf0] sm:$0xf]
        %v1300 = vld [vmem:[#allocation5 + $0xf4] sm:$0xf]
        %v1301 = vld [vmem:[#allocation5 + $0xf8] sm:$0xf]
        %v1302 = vld [vmem:[#allocation5 + $0xfc] sm:$0xf]
        %v1303 = vld [vmem:[#allocation5 + $0x100] sm:$0xf]
        %v1304 = vld [vmem:[#allocation5 + $0x104] sm:$0xf]
        %v1305 = vld [vmem:[#allocation5 + $0x108] sm:$0xf]
        %v1306 = vld [vmem:[#allocation5 + $0x10c] sm:$0xf]
        %v1307 = vld [vmem:[#allocation5 + $0x110] sm:$0xf]
        %v1308 = vld [vmem:[#allocation5 + $0x114] sm:$0xf]
        %v1309 = vld [vmem:[#allocation5 + $0x118] sm:$0xf]
        %v1310 = vld [vmem:[#allocation5 + $0x11c] sm:$0xf]
        %v1311 = vld [vmem:[#allocation5 + $0x120] sm:$0xf]
        %v1312 = vld [vmem:[#allocation5 + $0x124] sm:$0xf]
        %v1313 = vld [vmem:[#allocation5 + $0x128] sm:$0xf]
        %v1314 = vld [vmem:[#allocation5 + $0x12c] sm:$0xf]
        %v1315 = vld [vmem:[#allocation5 + $0x130] sm:$0xf]
        %v1316 = vld [vmem:[#allocation5 + $0x134] sm:$0xf]
        %v1317 = vld [vmem:[#allocation5 + $0x138] sm:$0xf]
        %v1318 = vld [vmem:[#allocation5 + $0x13c] sm:$0xf]
        %v1319 = vld [vmem:[#allocation5 + $0x140] sm:$0xf]
        %v1320 = vld [vmem:[#allocation5 + $0x144] sm:$0xf]
        %v1321 = vld [vmem:[#allocation5 + $0x148] sm:$0xf]
        %v1322 = vld [vmem:[#allocation5 + $0x14c] sm:$0xf]
        %v1323 = vld [vmem:[#allocation5 + $0x150] sm:$0xf]
        %v1324 = vld [vmem:[#allocation5 + $0x154] sm:$0xf]
        %v1325 = vld [vmem:[#allocation5 + $0x158] sm:$0xf]
        %v1326 = vld [vmem:[#allocation5 + $0x15c] sm:$0xf]
        %v1327 = vld [vmem:[#allocation5 + $0x160] sm:$0xf]
        %v1328 = vld [vmem:[#allocation5 + $0x164] sm:$0xf]
        %v1329 = vld [vmem:[#allocation5 + $0x168] sm:$0xf]
        %v1330 = vld [vmem:[#allocation5 + $0x16c] sm:$0xf]
        %v1331 = vld [vmem:[#allocation5 + $0x170] sm:$0xf]
        %v1332 = vld [vmem:[#allocation5 + $0x174] sm:$0xf]
        %v1333 = vld [vmem:[#allocation5 + $0x178] sm:$0xf]
        %v1334 = vld [vmem:[#allocation5 + $0x17c] sm:$0xf]
        %v1335 = vld [vmem:[#allocation5 + $0x180] sm:$0xf]
        %v1336 = vld [vmem:[#allocation5 + $0x184] sm:$0xf]
        %v1337 = vld [vmem:[#allocation5 + $0x188] sm:$0xf]
        %v1338 = vld [vmem:[#allocation5 + $0x18c] sm:$0xf]
        %v1339 = vld [vmem:[#allocation5 + $0x190] sm:$0xf]
        %v1340 = vld [vmem:[#allocation5 + $0x194] sm:$0xf]
        %v1341 = vld [vmem:[#allocation5 + $0x198] sm:$0xf]
        %v1342 = vld [vmem:[#allocation5 + $0x19c] sm:$0xf]
        %v1343 = vld [vmem:[#allocation5 + $0x1a0] sm:$0xf]
        %v1344 = vld [vmem:[#allocation5 + $0x1a4] sm:$0xf]
        %v1345 = vld [vmem:[#allocation5 + $0x1a8] sm:$0xf]
        %v1346 = vld [vmem:[#allocation5 + $0x1ac] sm:$0xf]
        %v1347 = vld [vmem:[#allocation5 + $0x1b0] sm:$0xf]
        %v1348 = vld [vmem:[#allocation5 + $0x1b4] sm:$0xf]
        %v1349 = vld [vmem:[#allocation5 + $0x1b8] sm:$0xf]
        %v1350 = vld [vmem:[#allocation5 + $0x1bc] sm:$0xf]
        %v1351 = vld [vmem:[#allocation5 + $0x1c0] sm:$0xf]
        %v1352 = vld [vmem:[#allocation5 + $0x1c4] sm:$0xf]
        %v1353 = vld [vmem:[#allocation5 + $0x1c8] sm:$0xf]
        %v1354 = vld [vmem:[#allocation5 + $0x1cc] sm:$0xf]
        %v1355 = vld [vmem:[#allocation5 + $0x1d0] sm:$0xf]
        %v1356 = vld [vmem:[#allocation5 + $0x1d4] sm:$0xf]
        %v1357 = vld [vmem:[#allocation5 + $0x1d8] sm:$0xf]
        %v1358 = vld [vmem:[#allocation5 + $0x1dc] sm:$0xf]
        %v1359 = vld [vmem:[#allocation5 + $0x1e0] sm:$0xf]
        %v1360 = vld [vmem:[#allocation5 + $0x1e4] sm:$0xf]
        %v1361 = vld [vmem:[#allocation5 + $0x1e8] sm:$0xf]
        %v1362 = vld [vmem:[#allocation5 + $0x1ec] sm:$0xf]
        %v1363 = vld [vmem:[#allocation5 + $0x1f0] sm:$0xf]
        %v1364 = vld [vmem:[#allocation5 + $0x1f4] sm:$0xf]
        %v1365 = vld [vmem:[#allocation5 + $0x1f8] sm:$0xf]
        %v1366 = vld [vmem:[#allocation5 + $0x1fc] sm:$0xf]
        %v1367 = vld [vmem:[#allocation5 + $0x200] sm:$0xf]
        %v1368 = vld [vmem:[#allocation5 + $0x204] sm:$0xf]
        %v1369 = vld [vmem:[#allocation5 + $0x208] sm:$0xf]
        %v1370 = vld [vmem:[#allocation5 + $0x20c] sm:$0xf]
        %v1371 = vld [vmem:[#allocation5 + $0x210] sm:$0xf]
        %v1372 = vld [vmem:[#allocation5 + $0x214] sm:$0xf]
        %v1373 = vld [vmem:[#allocation5 + $0x218] sm:$0xf]
        %v1374 = vld [vmem:[#allocation5 + $0x21c] sm:$0xf]
        %v1375 = vld [vmem:[#allocation5 + $0x220] sm:$0xf]
        %v1376 = vld [vmem:[#allocation5 + $0x224] sm:$0xf]
        %v1377 = vld [vmem:[#allocation5 + $0x228] sm:$0xf]
        %v1378 = vld [vmem:[#allocation5 + $0x22c] sm:$0xf]
        %v1379 = vld [vmem:[#allocation5 + $0x230] sm:$0xf]
        %v1380 = vld [vmem:[#allocation5 + $0x234] sm:$0xf]
        %v1381 = vld [vmem:[#allocation5 + $0x238] sm:$0xf]
        %v1382 = vld [vmem:[#allocation5 + $0x23c] sm:$0xf]
        %v1383 = vld [vmem:[#allocation5 + $0x240] sm:$0xf]
        %v1384 = vld [vmem:[#allocation5 + $0x244] sm:$0xf]
        %v1385 = vld [vmem:[#allocation5 + $0x248] sm:$0xf]
        %v1386 = vld [vmem:[#allocation5 + $0x24c] sm:$0xf]
        %v1387 = vld [vmem:[#allocation5 + $0x250] sm:$0xf]
        %v1388 = vld [vmem:[#allocation5 + $0x254] sm:$0xf]
        %v1389 = vld [vmem:[#allocation5 + $0x258] sm:$0xf]
        %v1390 = vld [vmem:[#allocation5 + $0x25c] sm:$0xf]
        %v1391 = vld [vmem:[#allocation5 + $0x260] sm:$0xf]
        %v1392 = vld [vmem:[#allocation5 + $0x264] sm:$0xf]
        %v1393 = vld [vmem:[#allocation5 + $0x268] sm:$0xf]
        %v1394 = vld [vmem:[#allocation5 + $0x26c] sm:$0xf]
        %v1395 = vld [vmem:[#allocation5 + $0x270] sm:$0xf]
        %v1396 = vld [vmem:[#allocation5 + $0x274] sm:$0xf]
        %v1397 = vld [vmem:[#allocation5 + $0x278] sm:$0xf]
        %v1398 = vld [vmem:[#allocation5 + $0x27c] sm:$0xf]
        %v1399 = vld [vmem:[#allocation5 + $0x280] sm:$0xf]
        %v1400 = vld [vmem:[#allocation5 + $0x284] sm:$0xf]
        %v1401 = vld [vmem:[#allocation5 + $0x288] sm:$0xf]
        %v1402 = vld [vmem:[#allocation5 + $0x28c] sm:$0xf]
        %v1403 = vld [vmem:[#allocation5 + $0x290] sm:$0xf]
        %v1404 = vld [vmem:[#allocation5 + $0x294] sm:$0xf]
        %v1405 = vld [vmem:[#allocation5 + $0x298] sm:$0xf]
        %v1406 = vld [vmem:[#allocation5 + $0x29c] sm:$0xf]
        %v1407 = vld [vmem:[#allocation5 + $0x2a0] sm:$0xf]
        %v1408 = vld [vmem:[#allocation5 + $0x2a4] sm:$0xf]
        %v1409 = vld [vmem:[#allocation5 + $0x2a8] sm:$0xf]
        %v1410 = vld [vmem:[#allocation5 + $0x2ac] sm:$0xf]
        %v1411 = vld [vmem:[#allocation5 + $0x2b0] sm:$0xf]
        %v1412 = vld [vmem:[#allocation5 + $0x2b4] sm:$0xf]
        %v1413 = vld [vmem:[#allocation5 + $0x2b8] sm:$0xf]
        %v1414 = vld [vmem:[#allocation5 + $0x2bc] sm:$0xf]
        %v1415 = vld [vmem:[#allocation5 + $0x2c0] sm:$0xf]
        %v1416 = vld [vmem:[#allocation5 + $0x2c4] sm:$0xf]
        %v1417 = vld [vmem:[#allocation5 + $0x2c8] sm:$0xf]
        %v1418 = vld [vmem:[#allocation5 + $0x2cc] sm:$0xf]
        %v1419 = vld [vmem:[#allocation5 + $0x2d0] sm:$0xf]
        %v1420 = vld [vmem:[#allocation5 + $0x2d4] sm:$0xf]
        %v1421 = vld [vmem:[#allocation5 + $0x2d8] sm:$0xf]
        %v1422 = vld [vmem:[#allocation5 + $0x2dc] sm:$0xf]
        %v1423 = vld [vmem:[#allocation5 + $0x2e0] sm:$0xf]
        %v1424 = vld [vmem:[#allocation5 + $0x2e4] sm:$0xf]
        %v1425 = vld [vmem:[#allocation5 + $0x2e8] sm:$0xf]
        %v1426 = vld [vmem:[#allocation5 + $0x2ec] sm:$0xf]
        %v1427 = vld [vmem:[#allocation5 + $0x2f0] sm:$0xf]
        %v1428 = vld [vmem:[#allocation5 + $0x2f4] sm:$0xf]
        %v1429 = vld [vmem:[#allocation5 + $0x2f8] sm:$0xf]
        %v1430 = vld [vmem:[#allocation5 + $0x2fc] sm:$0xf]
        %v1431 = vld [vmem:[#allocation5 + $0x300] sm:$0xf]
        %v1432 = vld [vmem:[#allocation5 + $0x304] sm:$0xf]
        %v1433 = vld [vmem:[#allocation5 + $0x308] sm:$0xf]
        %v1434 = vld [vmem:[#allocation5 + $0x30c] sm:$0xf]
        %v1435 = vld [vmem:[#allocation5 + $0x310] sm:$0xf]
        %v1436 = vld [vmem:[#allocation5 + $0x314] sm:$0xf]
        %v1437 = vld [vmem:[#allocation5 + $0x318] sm:$0xf]
        %v1438 = vld [vmem:[#allocation5 + $0x31c] sm:$0xf]
        %v1439 = vld [vmem:[#allocation5 + $0x320] sm:$0xf]
        %v1440 = vld [vmem:[#allocation5 + $0x324] sm:$0xf]
        %v1441 = vld [vmem:[#allocation5 + $0x328] sm:$0xf]
        %v1442 = vld [vmem:[#allocation5 + $0x32c] sm:$0xf]
        %v1443 = vld [vmem:[#allocation5 + $0x330] sm:$0xf]
        %v1444 = vld [vmem:[#allocation5 + $0x334] sm:$0xf]
        %v1445 = vld [vmem:[#allocation5 + $0x338] sm:$0xf]
        %v1446 = vld [vmem:[#allocation5 + $0x33c] sm:$0xf]
        %v1447 = vld [vmem:[#allocation5 + $0x340] sm:$0xf]
        %v1448 = vld [vmem:[#allocation5 + $0x344] sm:$0xf]
        %v1449 = vld [vmem:[#allocation5 + $0x348] sm:$0xf]
        %v1450 = vld [vmem:[#allocation5 + $0x34c] sm:$0xf]
        %v1451 = vld [vmem:[#allocation5 + $0x350] sm:$0xf]
        %v1452 = vld [vmem:[#allocation5 + $0x354] sm:$0xf]
        %v1453 = vld [vmem:[#allocation5 + $0x358] sm:$0xf]
        %v1454 = vld [vmem:[#allocation5 + $0x35c] sm:$0xf]
        %v1455 = vld [vmem:[#allocation5 + $0x360] sm:$0xf]
        %v1456 = vld [vmem:[#allocation5 + $0x364] sm:$0xf]
        %v1457 = vld [vmem:[#allocation5 + $0x368] sm:$0xf]
        %v1458 = vld [vmem:[#allocation5 + $0x36c] sm:$0xf]
        %v1459 = vld [vmem:[#allocation5 + $0x370] sm:$0xf]
        %v1460 = vld [vmem:[#allocation5 + $0x374] sm:$0xf]
        %v1461 = vld [vmem:[#allocation5 + $0x378] sm:$0xf]
        %v1462 = vld [vmem:[#allocation5 + $0x37c] sm:$0xf]
        %v1463 = vld [vmem:[#allocation5 + $0x380] sm:$0xf]
        %v1464 = vld [vmem:[#allocation5 + $0x384] sm:$0xf]
        %v1465 = vld [vmem:[#allocation5 + $0x388] sm:$0xf]
        %v1466 = vld [vmem:[#allocation5 + $0x38c] sm:$0xf]
        %v1467 = vld [vmem:[#allocation5 + $0x390] sm:$0xf]
        %v1468 = vld [vmem:[#allocation5 + $0x394] sm:$0xf]
        %v1469 = vld [vmem:[#allocation5 + $0x398] sm:$0xf]
        %v1470 = vld [vmem:[#allocation5 + $0x39c] sm:$0xf]
        %v1471 = vld [vmem:[#allocation5 + $0x3a0] sm:$0xf]
        %v1472 = vld [vmem:[#allocation5 + $0x3a4] sm:$0xf]
        %v1473 = vld [vmem:[#allocation5 + $0x3a8] sm:$0xf]
        %v1474 = vld [vmem:[#allocation5 + $0x3ac] sm:$0xf]
        %v1475 = vld [vmem:[#allocation5 + $0x3b0] sm:$0xf]
        %v1476 = vld [vmem:[#allocation5 + $0x3b4] sm:$0xf]
        %v1477 = vld [vmem:[#allocation5 + $0x3b8] sm:$0xf]
        %v1478 = vld [vmem:[#allocation5 + $0x3bc] sm:$0xf]
        %v1479 = vld [vmem:[#allocation5 + $0x3c0] sm:$0xf]
        %v1480 = vld [vmem:[#allocation5 + $0x3c4] sm:$0xf]
        %v1481 = vld [vmem:[#allocation5 + $0x3c8] sm:$0xf]
        %v1482 = vld [vmem:[#allocation5 + $0x3cc] sm:$0xf]
        %v1483 = vld [vmem:[#allocation5 + $0x3d0] sm:$0xf]
        %v1484 = vld [vmem:[#allocation5 + $0x3d4] sm:$0xf]
        %v1485 = vld [vmem:[#allocation5 + $0x3d8] sm:$0xf]
        %v1486 = vld [vmem:[#allocation5 + $0x3dc] sm:$0xf]
        %v1487 = vld [vmem:[#allocation5 + $0x3e0] sm:$0xf]
        %v1488 = vld [vmem:[#allocation5 + $0x3e4] sm:$0xf]
        %v1489 = vld [vmem:[#allocation5 + $0x3e8] sm:$0xf]
        %v1490 = vld [vmem:[#allocation5 + $0x3ec] sm:$0xf]
        %v1491 = vld [vmem:[#allocation5 + $0x3f0] sm:$0xf]
        %v1492 = vld [vmem:[#allocation5 + $0x3f4] sm:$0xf]
        %v1493 = vld [vmem:[#allocation5 + $0x3f8] sm:$0xf]
        %v1494 = vld [vmem:[#allocation5 + $0x3fc] sm:$0xf]
        %v1495 = vld [vmem:[#allocation5 + $0x400] sm:$0xf]
        %v1496 = vld [vmem:[#allocation5 + $0x404] sm:$0xf]
        %v1497 = vld [vmem:[#allocation5 + $0x408] sm:$0xf]
        %v1498 = vld [vmem:[#allocation5 + $0x40c] sm:$0xf]
        %v1499 = vld [vmem:[#allocation5 + $0x410] sm:$0xf]
        %v1500 = vld [vmem:[#allocation5 + $0x414] sm:$0xf]
        %v1501 = vld [vmem:[#allocation5 + $0x418] sm:$0xf]
        %v1502 = vld [vmem:[#allocation5 + $0x41c] sm:$0xf]
        %v1503 = vld [vmem:[#allocation5 + $0x420] sm:$0xf]
        %v1504 = vld [vmem:[#allocation5 + $0x424] sm:$0xf]
        %v1505 = vld [vmem:[#allocation5 + $0x428] sm:$0xf]
        %v1506 = vld [vmem:[#allocation5 + $0x42c] sm:$0xf]
        %v1507 = vld [vmem:[#allocation5 + $0x430] sm:$0xf]
        %v1508 = vld [vmem:[#allocation5 + $0x434] sm:$0xf]
        %v1509 = vld [vmem:[#allocation5 + $0x438] sm:$0xf]
        %v1510 = vld [vmem:[#allocation5 + $0x43c] sm:$0xf]
        %v1511 = vld [vmem:[#allocation5 + $0x440] sm:$0xf]
        %v1512 = vld [vmem:[#allocation5 + $0x444] sm:$0xf]
        %v1513 = vld [vmem:[#allocation5 + $0x448] sm:$0xf]
        %v1514 = vld [vmem:[#allocation5 + $0x44c] sm:$0xf]
        %v1515 = vld [vmem:[#allocation5 + $0x450] sm:$0xf]
        %v1516 = vld [vmem:[#allocation5 + $0x454] sm:$0xf]
        %v1517 = vld [vmem:[#allocation5 + $0x458] sm:$0xf]
        %v1518 = vld [vmem:[#allocation5 + $0x45c] sm:$0xf]
        %v1519 = vld [vmem:[#allocation5 + $0x460] sm:$0xf]
        %v1520 = vld [vmem:[#allocation5 + $0x464] sm:$0xf]
        %v1521 = vld [vmem:[#allocation5 + $0x468] sm:$0xf]
        %v1522 = vld [vmem:[#allocation5 + $0x46c] sm:$0xf]
        %v1523 = vld [vmem:[#allocation5 + $0x470] sm:$0xf]
        %v1524 = vld [vmem:[#allocation5 + $0x474] sm:$0xf]
        %v1525 = vld [vmem:[#allocation5 + $0x478] sm:$0xf]
        %v1526 = vld [vmem:[#allocation5 + $0x47c] sm:$0xf]
        %v1527 = vld [vmem:[#allocation5 + $0x480] sm:$0xf]
        %v1528 = vld [vmem:[#allocation5 + $0x484] sm:$0xf]
        %v1529 = vld [vmem:[#allocation5 + $0x488] sm:$0xf]
        %v1530 = vld [vmem:[#allocation5 + $0x48c] sm:$0xf]
        %v1531 = vld [vmem:[#allocation5 + $0x490] sm:$0xf]
        %v1532 = vld [vmem:[#allocation5 + $0x494] sm:$0xf]
        %v1533 = vld [vmem:[#allocation5 + $0x498] sm:$0xf]
        %v1534 = vld [vmem:[#allocation5 + $0x49c] sm:$0xf]
        %v1535 = vld [vmem:[#allocation5 + $0x4a0] sm:$0xf]
        %v1536 = vld [vmem:[#allocation5 + $0x4a4] sm:$0xf]
        %v1537 = vld [vmem:[#allocation5 + $0x4a8] sm:$0xf]
        %v1538 = vld [vmem:[#allocation5 + $0x4ac] sm:$0xf]
        %v1539 = vld [vmem:[#allocation5 + $0x4b0] sm:$0xf]
        %v1540 = vld [vmem:[#allocation5 + $0x4b4] sm:$0xf]
        %v1541 = vld [vmem:[#allocation5 + $0x4b8] sm:$0xf]
        %v1542 = vld [vmem:[#allocation5 + $0x4bc] sm:$0xf]
        %v1543 = vld [vmem:[#allocation5 + $0x4c0] sm:$0xf]
        %v1544 = vld [vmem:[#allocation5 + $0x4c4] sm:$0xf]
        %v1545 = vld [vmem:[#allocation5 + $0x4c8] sm:$0xf]
        %v1546 = vld [vmem:[#allocation5 + $0x4cc] sm:$0xf]
        %v1547 = vld [vmem:[#allocation5 + $0x4d0] sm:$0xf]
        %v1548 = vld [vmem:[#allocation5 + $0x4d4] sm:$0xf]
        %v1549 = vld [vmem:[#allocation5 + $0x4d8] sm:$0xf]
        %v1550 = vld [vmem:[#allocation5 + $0x4dc] sm:$0xf]
        %v1551 = vld [vmem:[#allocation5 + $0x4e0] sm:$0xf]
        %v1552 = vld [vmem:[#allocation5 + $0x4e4] sm:$0xf]
        %v1553 = vld [vmem:[#allocation5 + $0x4e8] sm:$0xf]
        %v1554 = vld [vmem:[#allocation5 + $0x4ec] sm:$0xf]
        %v1555 = vld [vmem:[#allocation5 + $0x4f0] sm:$0xf]
        %v1556 = vld [vmem:[#allocation5 + $0x4f4] sm:$0xf]
        %v1557 = vld [vmem:[#allocation5 + $0x4f8] sm:$0xf]
        %v1558 = vld [vmem:[#allocation5 + $0x4fc] sm:$0xf]
        %v1559 = vld [vmem:[#allocation5 + $0x500] sm:$0xf]
        %v1560 = vld [vmem:[#allocation5 + $0x504] sm:$0xf]
        %v1561 = vld [vmem:[#allocation5 + $0x508] sm:$0xf]
        %v1562 = vld [vmem:[#allocation5 + $0x50c] sm:$0xf]
        %v1563 = vld [vmem:[#allocation5 + $0x510] sm:$0xf]
        %v1564 = vld [vmem:[#allocation5 + $0x514] sm:$0xf]
        %v1565 = vld [vmem:[#allocation5 + $0x518] sm:$0xf]
        %v1566 = vld [vmem:[#allocation5 + $0x51c] sm:$0xf]
        %v1567 = vld [vmem:[#allocation5 + $0x520] sm:$0xf]
        %v1568 = vld [vmem:[#allocation5 + $0x524] sm:$0xf]
        %v1569 = vld [vmem:[#allocation5 + $0x528] sm:$0xf]
        %v1570 = vld [vmem:[#allocation5 + $0x52c] sm:$0xf]
        %v1571 = vld [vmem:[#allocation5 + $0x530] sm:$0xf]
        %v1572 = vld [vmem:[#allocation5 + $0x534] sm:$0xf]
        %v1573 = vld [vmem:[#allocation5 + $0x538] sm:$0xf]
        %v1574 = vld [vmem:[#allocation5 + $0x53c] sm:$0xf]
        %v1575 = vld [vmem:[#allocation5 + $0x540] sm:$0xf]
        %v1576 = vld [vmem:[#allocation5 + $0x544] sm:$0xf]
        %v1577 = vld [vmem:[#allocation5 + $0x548] sm:$0xf]
        %v1578 = vld [vmem:[#allocation5 + $0x54c] sm:$0xf]
        %v1579 = vld [vmem:[#allocation5 + $0x550] sm:$0xf]
        %v1580 = vld [vmem:[#allocation5 + $0x554] sm:$0xf]
        %v1581 = vld [vmem:[#allocation5 + $0x558] sm:$0xf]
        %v1582 = vld [vmem:[#allocation5 + $0x55c] sm:$0xf]
        %v1583 = vld [vmem:[#allocation5 + $0x560] sm:$0xf]
        %v1584 = vld [vmem:[#allocation5 + $0x564] sm:$0xf]
        %v1585 = vld [vmem:[#allocation5 + $0x568] sm:$0xf]
        %v1586 = vld [vmem:[#allocation5 + $0x56c] sm:$0xf]
        %v1587 = vld [vmem:[#allocation5 + $0x570] sm:$0xf]
        %v1588 = vld [vmem:[#allocation5 + $0x574] sm:$0xf]
        %v1589 = vld [vmem:[#allocation5 + $0x578] sm:$0xf]
        %v1590 = vld [vmem:[#allocation5 + $0x57c] sm:$0xf]
        %v1591 = vld [vmem:[#allocation5 + $0x580] sm:$0xf]
        %v1592 = vld [vmem:[#allocation5 + $0x584] sm:$0xf]
        %v1593 = vld [vmem:[#allocation5 + $0x588] sm:$0xf]
        %v1594 = vld [vmem:[#allocation5 + $0x58c] sm:$0xf]
        %v1595 = vld [vmem:[#allocation5 + $0x590] sm:$0xf]
        %v1596 = vld [vmem:[#allocation5 + $0x594] sm:$0xf]
        %v1597 = vld [vmem:[#allocation5 + $0x598] sm:$0xf]
        %v1598 = vld [vmem:[#allocation5 + $0x59c] sm:$0xf]
        %v1599 = vld [vmem:[#allocation5 + $0x5a0] sm:$0xf]
        %v1600 = vld [vmem:[#allocation5 + $0x5a4] sm:$0xf]
        %v1601 = vld [vmem:[#allocation5 + $0x5a8] sm:$0xf]
        %v1602 = vld [vmem:[#allocation5 + $0x5ac] sm:$0xf]
        %v1603 = vld [vmem:[#allocation5 + $0x5b0] sm:$0xf]
        %v1604 = vld [vmem:[#allocation5 + $0x5b4] sm:$0xf]
        %v1605 = vld [vmem:[#allocation5 + $0x5b8] sm:$0xf]
        %v1606 = vld [vmem:[#allocation5 + $0x5bc] sm:$0xf]
        %v1607 = vld [vmem:[#allocation5 + $0x5c0] sm:$0xf]
        %v1608 = vld [vmem:[#allocation5 + $0x5c4] sm:$0xf]
        %v1609 = vld [vmem:[#allocation5 + $0x5c8] sm:$0xf]
        %v1610 = vld [vmem:[#allocation5 + $0x5cc] sm:$0xf]
        %v1611 = vld [vmem:[#allocation5 + $0x5d0] sm:$0xf]
        %v1612 = vld [vmem:[#allocation5 + $0x5d4] sm:$0xf]
        %v1613 = vld [vmem:[#allocation5 + $0x5d8] sm:$0xf]
        %v1614 = vld [vmem:[#allocation5 + $0x5dc] sm:$0xf]
        %v1615 = vld [vmem:[#allocation5 + $0x5e0] sm:$0xf]
        %v1616 = vld [vmem:[#allocation5 + $0x5e4] sm:$0xf]
        %v1617 = vld [vmem:[#allocation5 + $0x5e8] sm:$0xf]
        %v1618 = vld [vmem:[#allocation5 + $0x5ec] sm:$0xf]
        %v1619 = vld [vmem:[#allocation5 + $0x5f0] sm:$0xf]
        %v1620 = vld [vmem:[#allocation5 + $0x5f4] sm:$0xf]
        %v1621 = vld [vmem:[#allocation5 + $0x5f8] sm:$0xf]
        %v1622 = vld [vmem:[#allocation5 + $0x5fc] sm:$0xf]
        %v1623 = vld [vmem:[#allocation5 + $0x600] sm:$0xf]
        %v1624 = vld [vmem:[#allocation5 + $0x604] sm:$0xf]
        %v1625 = vld [vmem:[#allocation5 + $0x608] sm:$0xf]
        %v1626 = vld [vmem:[#allocation5 + $0x60c] sm:$0xf]
        %v1627 = vld [vmem:[#allocation5 + $0x610] sm:$0xf]
        %v1628 = vld [vmem:[#allocation5 + $0x614] sm:$0xf]
        %v1629 = vld [vmem:[#allocation5 + $0x618] sm:$0xf]
        %v1630 = vld [vmem:[#allocation5 + $0x61c] sm:$0xf]
        %v1631 = vld [vmem:[#allocation5 + $0x620] sm:$0xf]
        %v1632 = vld [vmem:[#allocation5 + $0x624] sm:$0xf]
        %v1633 = vld [vmem:[#allocation5 + $0x628] sm:$0xf]
        %v1634 = vld [vmem:[#allocation5 + $0x62c] sm:$0xf]
        %v1635 = vld [vmem:[#allocation5 + $0x630] sm:$0xf]
        %v1636 = vld [vmem:[#allocation5 + $0x634] sm:$0xf]
        %v1637 = vld [vmem:[#allocation5 + $0x638] sm:$0xf]
        %v1638 = vld [vmem:[#allocation5 + $0x63c] sm:$0xf]
        %v1665 = vunpack.c.l.b16 %v1213
        %v1666 = vunpack.c.h.b16 %v1213
        %v1667 = vunpack.c.l.b16 %v1214
        %v1668 = vunpack.c.h.b16 %v1214
        %v1669 = vunpack.c.l.b16 %v1215
        %v1670 = vunpack.c.h.b16 %v1215
        %v1671 = vunpack.c.l.b16 %v1216
        %v1672 = vunpack.c.h.b16 %v1216
        %v1673 = vunpack.c.l.b16 %v1217
        %v1674 = vunpack.c.h.b16 %v1217
        %v1675 = vunpack.c.l.b16 %v1218
        %v1676 = vunpack.c.h.b16 %v1218
        %v1677 = vunpack.c.l.b16 %v1219
        %v1678 = vunpack.c.h.b16 %v1219
        %v1679 = vunpack.c.l.b16 %v1220
        %v1680 = vunpack.c.h.b16 %v1220
        %v1681 = vunpack.c.l.b16 %v1221
        %v1682 = vunpack.c.h.b16 %v1221
        %v1683 = vunpack.c.l.b16 %v1222
        %v1684 = vunpack.c.h.b16 %v1222
        %v1685 = vunpack.c.l.b16 %v1223
        %v1686 = vunpack.c.h.b16 %v1223
        %v1687 = vunpack.c.l.b16 %v1224
        %v1688 = vunpack.c.h.b16 %v1224
        %v1689 = vunpack.c.l.b16 %v1225
        %v1690 = vunpack.c.l.b16 %v1226
        %v1691 = vunpack.c.h.b16 %v1226
        %v1692 = vunpack.c.l.b16 %v1227
        %v1693 = vunpack.c.h.b16 %v1227
        %v1694 = vunpack.c.l.b16 %v1228
        %v1695 = vunpack.c.h.b16 %v1228
        %v1696 = vunpack.c.l.b16 %v1229
        %v1697 = vunpack.c.h.b16 %v1229
        %v1698 = vunpack.c.l.b16 %v1230
        %v1699 = vunpack.c.h.b16 %v1230
        %v1700 = vunpack.c.l.b16 %v1231
        %v1701 = vunpack.c.h.b16 %v1231
        %v1702 = vunpack.c.l.b16 %v1232
        %v1703 = vunpack.c.h.b16 %v1232
        %v1704 = vunpack.c.l.b16 %v1233
        %v1705 = vunpack.c.h.b16 %v1233
        %v1706 = vunpack.c.l.b16 %v1234
        %v1707 = vunpack.c.h.b16 %v1234
        %v1708 = vunpack.c.l.b16 %v1235
        %v1709 = vunpack.c.h.b16 %v1235
        %v1710 = vunpack.c.l.b16 %v1236
        %v1711 = vunpack.c.h.b16 %v1236
        %v1712 = vunpack.c.l.b16 %v1237
        %v1713 = vunpack.c.h.b16 %v1237
        %v1714 = vunpack.c.l.b16 %v1238
        %v1715 = vpack.c.b16 %v1690, %v1665
        %v1716 = vpack.c.b16 %v1691, %v1666
        %v1717 = vpack.c.b16 %v1692, %v1667
        %v1718 = vpack.c.b16 %v1693, %v1668
        %v1719 = vpack.c.b16 %v1694, %v1669
        %v1720 = vpack.c.b16 %v1695, %v1670
        %v1721 = vpack.c.b16 %v1696, %v1671
        %v1722 = vpack.c.b16 %v1697, %v1672
        %v1723 = vpack.c.b16 %v1698, %v1673
        %v1724 = vpack.c.b16 %v1699, %v1674
        %v1725 = vpack.c.b16 %v1700, %v1675
        %v1726 = vpack.c.b16 %v1701, %v1676
        %v1727 = vpack.c.b16 %v1702, %v1677
        %v1728 = vpack.c.b16 %v1703, %v1678
        %v1729 = vpack.c.b16 %v1704, %v1679
        %v1730 = vpack.c.b16 %v1705, %v1680
        %v1731 = vpack.c.b16 %v1706, %v1681
        %v1732 = vpack.c.b16 %v1707, %v1682
        %v1733 = vpack.c.b16 %v1708, %v1683
        %v1734 = vpack.c.b16 %v1709, %v1684
        %v1735 = vpack.c.b16 %v1710, %v1685
        %v1736 = vpack.c.b16 %v1711, %v1686
        %v1737 = vpack.c.b16 %v1712, %v1687
        %v1738 = vpack.c.b16 %v1713, %v1688
        %v1739 = vpack.c.b16 %v1714, %v1689
        %v2165 = vunpack.c.l.b16 %v1239
        %v2166 = vunpack.c.l.b16 %v1240
        %v2167 = vunpack.c.l.b16 %v1241
        %v2168 = vunpack.c.l.b16 %v1242
        %v2169 = vunpack.c.l.b16 %v1243
        %v2170 = vunpack.c.l.b16 %v1244
        %v2171 = vunpack.c.l.b16 %v1245
        %v2172 = vunpack.c.l.b16 %v1246
        %v2173 = vunpack.c.l.b16 %v1247
        %v2174 = vunpack.c.l.b16 %v1248
        %v2175 = vunpack.c.l.b16 %v1249
        %v2176 = vunpack.c.l.b16 %v1250
        %v2177 = vunpack.c.l.b16 %v1251
        %v2178 = vunpack.c.l.b16 %v1252
        %v2179 = vunpack.c.l.b16 %v1253
        %v2180 = vunpack.c.l.b16 %v1254
        %v2181 = vunpack.c.l.b16 %v1255
        %v2182 = vunpack.c.l.b16 %v1256
        %v2183 = vunpack.c.l.b16 %v1257
        %v2184 = vunpack.c.l.b16 %v1258
        %v2185 = vunpack.c.l.b16 %v1259
        %v2186 = vunpack.c.l.b16 %v1260
        %v2187 = vunpack.c.l.b16 %v1261
        %v2188 = vunpack.c.l.b16 %v1262
        %v2189 = vunpack.c.l.b16 %v1263
        %v2190 = vunpack.c.l.b16 %v1264
        %v2191 = vunpack.c.l.b16 %v1265
        %v2192 = vunpack.c.l.b16 %v1266
        %v2193 = vunpack.c.l.b16 %v1267
        %v2194 = vunpack.c.l.b16 %v1268
        %v2195 = vunpack.c.l.b16 %v1269
        %v2196 = vunpack.c.l.b16 %v1270
        %v2197 = vunpack.c.l.b16 %v1271
        %v2198 = vunpack.c.l.b16 %v1272
        %v2199 = vunpack.c.l.b16 %v1273
        %v2200 = vunpack.c.l.b16 %v1274
        %v2201 = vunpack.c.l.b16 %v1275
        %v2202 = vunpack.c.l.b16 %v1276
        %v2203 = vunpack.c.l.b16 %v1277
        %v2204 = vunpack.c.l.b16 %v1278
        %v2205 = vunpack.c.l.b16 %v1279
        %v2206 = vunpack.c.l.b16 %v1280
        %v2207 = vunpack.c.l.b16 %v1281
        %v2208 = vunpack.c.l.b16 %v1282
        %v2209 = vunpack.c.l.b16 %v1283
        %v2210 = vunpack.c.l.b16 %v1284
        %v2211 = vunpack.c.l.b16 %v1285
        %v2212 = vunpack.c.l.b16 %v1286
        %v2213 = vunpack.c.l.b16 %v1287
        %v2214 = vunpack.c.l.b16 %v1288
        %v2215 = vunpack.c.l.b16 %v1289
        %v2216 = vunpack.c.l.b16 %v1290
        %v2217 = vunpack.c.l.b16 %v1291
        %v2218 = vunpack.c.l.b16 %v1292
        %v2219 = vunpack.c.l.b16 %v1293
        %v2220 = vunpack.c.l.b16 %v1294
        %v2221 = vunpack.c.l.b16 %v1295
        %v2222 = vunpack.c.l.b16 %v1296
        %v2223 = vunpack.c.l.b16 %v1297
        %v2224 = vunpack.c.l.b16 %v1298
        %v2225 = vunpack.c.l.b16 %v1299
        %v2226 = vunpack.c.l.b16 %v1300
        %v2227 = vunpack.c.l.b16 %v1301
        %v2228 = vunpack.c.l.b16 %v1302
        %v2229 = vunpack.c.l.b16 %v1303
        %v2230 = vunpack.c.l.b16 %v1304
        %v2231 = vunpack.c.l.b16 %v1305
        %v2232 = vunpack.c.l.b16 %v1306
        %v2233 = vunpack.c.l.b16 %v1307
        %v2234 = vunpack.c.l.b16 %v1308
        %v2235 = vunpack.c.l.b16 %v1309
        %v2236 = vunpack.c.l.b16 %v1310
        %v2237 = vunpack.c.l.b16 %v1311
        %v2238 = vunpack.c.l.b16 %v1312
        %v2239 = vunpack.c.l.b16 %v1313
        %v2240 = vunpack.c.l.b16 %v1314
        %v2241 = vunpack.c.l.b16 %v1315
        %v2242 = vunpack.c.l.b16 %v1316
        %v2243 = vunpack.c.l.b16 %v1317
        %v2244 = vunpack.c.l.b16 %v1318
        %v2245 = vunpack.c.l.b16 %v1319
        %v2246 = vunpack.c.l.b16 %v1320
        %v2247 = vunpack.c.l.b16 %v1321
        %v2248 = vunpack.c.l.b16 %v1322
        %v2249 = vunpack.c.l.b16 %v1323
        %v2250 = vunpack.c.l.b16 %v1324
        %v2251 = vunpack.c.l.b16 %v1325
        %v2252 = vunpack.c.l.b16 %v1326
        %v2253 = vunpack.c.l.b16 %v1327
        %v2254 = vunpack.c.l.b16 %v1328
        %v2255 = vunpack.c.l.b16 %v1329
        %v2256 = vunpack.c.l.b16 %v1330
        %v2257 = vunpack.c.l.b16 %v1331
        %v2258 = vunpack.c.l.b16 %v1332
        %v2259 = vunpack.c.l.b16 %v1333
        %v2260 = vunpack.c.l.b16 %v1334
        %v2261 = vunpack.c.l.b16 %v1335
        %v2262 = vunpack.c.l.b16 %v1336
        %v2263 = vunpack.c.l.b16 %v1337
        %v2264 = vunpack.c.l.b16 %v1338
        %v2265 = vunpack.c.l.b16 %v1339
        %v2266 = vunpack.c.l.b16 %v1340
        %v2267 = vunpack.c.l.b16 %v1341
        %v2268 = vunpack.c.l.b16 %v1342
        %v2269 = vunpack.c.l.b16 %v1343
        %v2270 = vunpack.c.l.b16 %v1344
        %v2271 = vunpack.c.l.b16 %v1345
        %v2272 = vunpack.c.l.b16 %v1346
        %v2273 = vunpack.c.l.b16 %v1347
        %v2274 = vunpack.c.l.b16 %v1348
        %v2275 = vunpack.c.l.b16 %v1349
        %v2276 = vunpack.c.l.b16 %v1350
        %v2277 = vunpack.c.l.b16 %v1351
        %v2278 = vunpack.c.l.b16 %v1352
        %v2279 = vunpack.c.l.b16 %v1353
        %v2280 = vunpack.c.l.b16 %v1354
        %v2281 = vunpack.c.l.b16 %v1355
        %v2282 = vunpack.c.l.b16 %v1356
        %v2283 = vunpack.c.l.b16 %v1357
        %v2284 = vunpack.c.l.b16 %v1358
        %v2285 = vunpack.c.l.b16 %v1359
        %v2286 = vunpack.c.l.b16 %v1360
        %v2287 = vunpack.c.l.b16 %v1361
        %v2288 = vunpack.c.l.b16 %v1362
        %v2289 = vunpack.c.l.b16 %v1363
        %v2290 = vunpack.c.l.b16 %v1364
        %v2291 = vunpack.c.l.b16 %v1365
        %v2292 = vunpack.c.l.b16 %v1366
        %v2293 = vunpack.c.l.b16 %v1367
        %v2294 = vunpack.c.l.b16 %v1368
        %v2295 = vunpack.c.l.b16 %v1369
        %v2296 = vunpack.c.l.b16 %v1370
        %v2297 = vunpack.c.l.b16 %v1371
        %v2298 = vunpack.c.l.b16 %v1372
        %v2299 = vunpack.c.l.b16 %v1373
        %v2300 = vunpack.c.l.b16 %v1374
        %v2301 = vunpack.c.l.b16 %v1375
        %v2302 = vunpack.c.l.b16 %v1376
        %v2303 = vunpack.c.l.b16 %v1377
        %v2304 = vunpack.c.l.b16 %v1378
        %v2305 = vunpack.c.l.b16 %v1379
        %v2306 = vunpack.c.l.b16 %v1380
        %v2307 = vunpack.c.l.b16 %v1381
        %v2308 = vunpack.c.l.b16 %v1382
        %v2309 = vunpack.c.l.b16 %v1383
        %v2310 = vunpack.c.l.b16 %v1384
        %v2311 = vunpack.c.l.b16 %v1385
        %v2312 = vunpack.c.l.b16 %v1386
        %v2313 = vunpack.c.l.b16 %v1387
        %v2314 = vunpack.c.l.b16 %v1388
        %v2315 = vunpack.c.l.b16 %v1389
        %v2316 = vunpack.c.l.b16 %v1390
        %v2317 = vunpack.c.l.b16 %v1391
        %v2318 = vunpack.c.l.b16 %v1392
        %v2319 = vunpack.c.l.b16 %v1393
        %v2320 = vunpack.c.l.b16 %v1394
        %v2321 = vunpack.c.l.b16 %v1395
        %v2322 = vunpack.c.l.b16 %v1396
        %v2323 = vunpack.c.l.b16 %v1397
        %v2324 = vunpack.c.l.b16 %v1398
        %v2325 = vunpack.c.l.b16 %v1399
        %v2326 = vunpack.c.l.b16 %v1400
        %v2327 = vunpack.c.l.b16 %v1401
        %v2328 = vunpack.c.l.b16 %v1402
        %v2329 = vunpack.c.l.b16 %v1403
        %v2330 = vunpack.c.l.b16 %v1404
        %v2331 = vunpack.c.l.b16 %v1405
        %v2332 = vunpack.c.l.b16 %v1406
        %v2333 = vunpack.c.l.b16 %v1407
        %v2334 = vunpack.c.l.b16 %v1408
        %v2335 = vunpack.c.l.b16 %v1409
        %v2336 = vunpack.c.l.b16 %v1410
        %v2337 = vunpack.c.l.b16 %v1411
        %v2338 = vunpack.c.l.b16 %v1412
        %v2339 = vunpack.c.l.b16 %v1413
        %v2340 = vunpack.c.l.b16 %v1414
        %v2341 = vunpack.c.l.b16 %v1415
        %v2342 = vunpack.c.l.b16 %v1416
        %v2343 = vunpack.c.l.b16 %v1417
        %v2344 = vunpack.c.l.b16 %v1418
        %v2345 = vunpack.c.l.b16 %v1419
        %v2346 = vunpack.c.l.b16 %v1420
        %v2347 = vunpack.c.l.b16 %v1421
        %v2348 = vunpack.c.l.b16 %v1422
        %v2349 = vunpack.c.l.b16 %v1423
        %v2350 = vunpack.c.l.b16 %v1424
        %v2351 = vunpack.c.l.b16 %v1425
        %v2352 = vunpack.c.l.b16 %v1426
        %v2353 = vunpack.c.l.b16 %v1427
        %v2354 = vunpack.c.l.b16 %v1428
        %v2355 = vunpack.c.l.b16 %v1429
        %v2356 = vunpack.c.l.b16 %v1430
        %v2357 = vunpack.c.l.b16 %v1431
        %v2358 = vunpack.c.l.b16 %v1432
        %v2359 = vunpack.c.l.b16 %v1433
        %v2360 = vunpack.c.l.b16 %v1434
        %v2361 = vunpack.c.l.b16 %v1435
        %v2362 = vunpack.c.l.b16 %v1436
        %v2363 = vunpack.c.l.b16 %v1437
        %v2364 = vunpack.c.l.b16 %v1438
        %v2365 = vunpack.c.l.b16 %v1439
        %v2366 = vunpack.c.l.b16 %v1440
        %v2367 = vunpack.c.l.b16 %v1441
        %v2368 = vunpack.c.l.b16 %v1442
        %v2369 = vunpack.c.l.b16 %v1443
        %v2370 = vunpack.c.l.b16 %v1444
        %v2371 = vunpack.c.l.b16 %v1445
        %v2372 = vunpack.c.l.b16 %v1446
        %v2373 = vunpack.c.l.b16 %v1447
        %v2374 = vunpack.c.l.b16 %v1448
        %v2375 = vunpack.c.l.b16 %v1449
        %v2376 = vunpack.c.l.b16 %v1450
        %v2377 = vunpack.c.l.b16 %v1451
        %v2378 = vunpack.c.l.b16 %v1452
        %v2379 = vunpack.c.l.b16 %v1453
        %v2380 = vunpack.c.l.b16 %v1454
        %v2381 = vunpack.c.l.b16 %v1455
        %v2382 = vunpack.c.l.b16 %v1456
        %v2383 = vunpack.c.l.b16 %v1457
        %v2384 = vunpack.c.l.b16 %v1458
        %v2385 = vunpack.c.l.b16 %v1459
        %v2386 = vunpack.c.l.b16 %v1460
        %v2387 = vunpack.c.l.b16 %v1461
        %v2388 = vunpack.c.l.b16 %v1462
        %v2389 = vunpack.c.l.b16 %v1463
        %v2390 = vunpack.c.l.b16 %v1464
        %v2391 = vunpack.c.l.b16 %v1465
        %v2392 = vunpack.c.l.b16 %v1466
        %v2393 = vunpack.c.l.b16 %v1467
        %v2394 = vunpack.c.l.b16 %v1468
        %v2395 = vunpack.c.l.b16 %v1469
        %v2396 = vunpack.c.l.b16 %v1470
        %v2397 = vunpack.c.l.b16 %v1471
        %v2398 = vunpack.c.l.b16 %v1472
        %v2399 = vunpack.c.l.b16 %v1473
        %v2400 = vunpack.c.l.b16 %v1474
        %v2401 = vunpack.c.l.b16 %v1475
        %v2402 = vunpack.c.l.b16 %v1476
        %v2403 = vunpack.c.l.b16 %v1477
        %v2404 = vunpack.c.l.b16 %v1478
        %v2405 = vunpack.c.l.b16 %v1479
        %v2406 = vunpack.c.l.b16 %v1480
        %v2407 = vunpack.c.l.b16 %v1481
        %v2408 = vunpack.c.l.b16 %v1482
        %v2409 = vunpack.c.l.b16 %v1483
        %v2410 = vunpack.c.l.b16 %v1484
        %v2411 = vunpack.c.l.b16 %v1485
        %v2412 = vunpack.c.l.b16 %v1486
        %v2413 = vunpack.c.l.b16 %v1487
        %v2414 = vunpack.c.l.b16 %v1488
        %v2415 = vunpack.c.l.b16 %v1489
        %v2416 = vunpack.c.l.b16 %v1490
        %v2417 = vunpack.c.l.b16 %v1491
        %v2418 = vunpack.c.l.b16 %v1492
        %v2419 = vunpack.c.l.b16 %v1493
        %v2420 = vunpack.c.l.b16 %v1494
        %v2421 = vunpack.c.l.b16 %v1495
        %v2422 = vunpack.c.l.b16 %v1496
        %v2423 = vunpack.c.l.b16 %v1497
        %v2424 = vunpack.c.l.b16 %v1498
        %v2425 = vunpack.c.l.b16 %v1499
        %v2426 = vunpack.c.l.b16 %v1500
        %v2427 = vunpack.c.l.b16 %v1501
        %v2428 = vunpack.c.l.b16 %v1502
        %v2429 = vunpack.c.l.b16 %v1503
        %v2430 = vunpack.c.l.b16 %v1504
        %v2431 = vunpack.c.l.b16 %v1505
        %v2432 = vunpack.c.l.b16 %v1506
        %v2433 = vunpack.c.l.b16 %v1507
        %v2434 = vunpack.c.l.b16 %v1508
        %v2435 = vunpack.c.l.b16 %v1509
        %v2436 = vunpack.c.l.b16 %v1510
        %v2437 = vunpack.c.l.b16 %v1511
        %v2438 = vunpack.c.l.b16 %v1512
        %v2439 = vunpack.c.l.b16 %v1513
        %v2440 = vunpack.c.l.b16 %v1514
        %v2441 = vunpack.c.l.b16 %v1515
        %v2442 = vunpack.c.l.b16 %v1516
        %v2443 = vunpack.c.l.b16 %v1517
        %v2444 = vunpack.c.l.b16 %v1518
        %v2445 = vunpack.c.l.b16 %v1519
        %v2446 = vunpack.c.l.b16 %v1520
        %v2447 = vunpack.c.l.b16 %v1521
        %v2448 = vunpack.c.l.b16 %v1522
        %v2449 = vunpack.c.l.b16 %v1523
        %v2450 = vunpack.c.l.b16 %v1524
        %v2451 = vunpack.c.l.b16 %v1525
        %v2452 = vunpack.c.l.b16 %v1526
        %v2453 = vunpack.c.l.b16 %v1527
        %v2454 = vunpack.c.l.b16 %v1528
        %v2455 = vunpack.c.l.b16 %v1529
        %v2456 = vunpack.c.l.b16 %v1530
        %v2457 = vunpack.c.l.b16 %v1531
        %v2458 = vunpack.c.l.b16 %v1532
        %v2459 = vunpack.c.l.b16 %v1533
        %v2460 = vunpack.c.l.b16 %v1534
        %v2461 = vunpack.c.l.b16 %v1535
        %v2462 = vunpack.c.l.b16 %v1536
        %v2463 = vunpack.c.l.b16 %v1537
        %v2464 = vunpack.c.l.b16 %v1538
        %v2465 = vunpack.c.l.b16 %v1539
        %v2466 = vunpack.c.l.b16 %v1540
        %v2467 = vunpack.c.l.b16 %v1541
        %v2468 = vunpack.c.l.b16 %v1542
        %v2469 = vunpack.c.l.b16 %v1543
        %v2470 = vunpack.c.l.b16 %v1544
        %v2471 = vunpack.c.l.b16 %v1545
        %v2472 = vunpack.c.l.b16 %v1546
        %v2473 = vunpack.c.l.b16 %v1547
        %v2474 = vunpack.c.l.b16 %v1548
        %v2475 = vunpack.c.l.b16 %v1549
        %v2476 = vunpack.c.l.b16 %v1550
        %v2477 = vunpack.c.l.b16 %v1551
        %v2478 = vunpack.c.l.b16 %v1552
        %v2479 = vunpack.c.l.b16 %v1553
        %v2480 = vunpack.c.l.b16 %v1554
        %v2481 = vunpack.c.l.b16 %v1555
        %v2482 = vunpack.c.l.b16 %v1556
        %v2483 = vunpack.c.l.b16 %v1557
        %v2484 = vunpack.c.l.b16 %v1558
        %v2485 = vunpack.c.l.b16 %v1559
        %v2486 = vunpack.c.l.b16 %v1560
        %v2487 = vunpack.c.l.b16 %v1561
        %v2488 = vunpack.c.l.b16 %v1562
        %v2489 = vunpack.c.l.b16 %v1563
        %v2490 = vunpack.c.l.b16 %v1564
        %v2491 = vunpack.c.l.b16 %v1565
        %v2492 = vunpack.c.l.b16 %v1566
        %v2493 = vunpack.c.l.b16 %v1567
        %v2494 = vunpack.c.l.b16 %v1568
        %v2495 = vunpack.c.l.b16 %v1569
        %v2496 = vunpack.c.l.b16 %v1570
        %v2497 = vunpack.c.l.b16 %v1571
        %v2498 = vunpack.c.l.b16 %v1572
        %v2499 = vunpack.c.l.b16 %v1573
        %v2500 = vunpack.c.l.b16 %v1574
        %v2501 = vunpack.c.l.b16 %v1575
        %v2502 = vunpack.c.l.b16 %v1576
        %v2503 = vunpack.c.l.b16 %v1577
        %v2504 = vunpack.c.l.b16 %v1578
        %v2505 = vunpack.c.l.b16 %v1579
        %v2506 = vunpack.c.l.b16 %v1580
        %v2507 = vunpack.c.l.b16 %v1581
        %v2508 = vunpack.c.l.b16 %v1582
        %v2509 = vunpack.c.l.b16 %v1583
        %v2510 = vunpack.c.l.b16 %v1584
        %v2511 = vunpack.c.l.b16 %v1585
        %v2512 = vunpack.c.l.b16 %v1586
        %v2513 = vunpack.c.l.b16 %v1587
        %v2514 = vunpack.c.l.b16 %v1588
        %v2515 = vunpack.c.l.b16 %v1589
        %v2516 = vunpack.c.l.b16 %v1590
        %v2517 = vunpack.c.l.b16 %v1591
        %v2518 = vunpack.c.l.b16 %v1592
        %v2519 = vunpack.c.l.b16 %v1593
        %v2520 = vunpack.c.l.b16 %v1594
        %v2521 = vunpack.c.l.b16 %v1595
        %v2522 = vunpack.c.l.b16 %v1596
        %v2523 = vunpack.c.l.b16 %v1597
        %v2524 = vunpack.c.l.b16 %v1598
        %v2525 = vunpack.c.l.b16 %v1599
        %v2526 = vunpack.c.l.b16 %v1600
        %v2527 = vunpack.c.l.b16 %v1601
        %v2528 = vunpack.c.l.b16 %v1602
        %v2529 = vunpack.c.l.b16 %v1603
        %v2530 = vunpack.c.l.b16 %v1604
        %v2531 = vunpack.c.l.b16 %v1605
        %v2532 = vunpack.c.l.b16 %v1606
        %v2533 = vunpack.c.l.b16 %v1607
        %v2534 = vunpack.c.l.b16 %v1608
        %v2535 = vunpack.c.l.b16 %v1609
        %v2536 = vunpack.c.l.b16 %v1610
        %v2537 = vunpack.c.l.b16 %v1611
        %v2538 = vunpack.c.l.b16 %v1612
        %v2539 = vunpack.c.l.b16 %v1613
        %v2540 = vunpack.c.l.b16 %v1614
        %v2541 = vunpack.c.l.b16 %v1615
        %v2542 = vunpack.c.l.b16 %v1616
        %v2543 = vunpack.c.l.b16 %v1617
        %v2544 = vunpack.c.l.b16 %v1618
        %v2545 = vunpack.c.l.b16 %v1619
        %v2546 = vunpack.c.l.b16 %v1620
        %v2547 = vunpack.c.l.b16 %v1621
        %v2548 = vunpack.c.l.b16 %v1622
        %v2549 = vunpack.c.l.b16 %v1623
        %v2550 = vunpack.c.l.b16 %v1624
        %v2551 = vunpack.c.l.b16 %v1625
        %v2552 = vunpack.c.l.b16 %v1626
        %v2553 = vunpack.c.l.b16 %v1627
        %v2554 = vunpack.c.l.b16 %v1628
        %v2555 = vunpack.c.l.b16 %v1629
        %v2556 = vunpack.c.l.b16 %v1630
        %v2557 = vunpack.c.l.b16 %v1631
        %v2558 = vunpack.c.l.b16 %v1632
        %v2559 = vunpack.c.l.b16 %v1633
        %v2560 = vunpack.c.l.b16 %v1634
        %v2561 = vunpack.c.l.b16 %v1635
        %v2562 = vunpack.c.l.b16 %v1636
        %v2563 = vunpack.c.l.b16 %v1637
        %v2564 = vunpack.c.l.b16 %v1638
        %v2565 = vpack.c.b16 %v2166, %v2165
        %v2566 = vpack.c.b16 %v2168, %v2167
        %v2567 = vpack.c.b16 %v2170, %v2169
        %v2568 = vpack.c.b16 %v2172, %v2171
        %v2569 = vpack.c.b16 %v2174, %v2173
        %v2570 = vpack.c.b16 %v2176, %v2175
        %v2571 = vpack.c.b16 %v2178, %v2177
        %v2572 = vpack.c.b16 %v2180, %v2179
        %v2573 = vpack.c.b16 %v2182, %v2181
        %v2574 = vpack.c.b16 %v2184, %v2183
        %v2575 = vpack.c.b16 %v2186, %v2185
        %v2576 = vpack.c.b16 %v2188, %v2187
        %v2577 = vpack.c.b16 %v2190, %v2189
        %v2578 = vpack.c.b16 %v2192, %v2191
        %v2579 = vpack.c.b16 %v2194, %v2193
        %v2580 = vpack.c.b16 %v2196, %v2195
        %v2581 = vpack.c.b16 %v2198, %v2197
        %v2582 = vpack.c.b16 %v2200, %v2199
        %v2583 = vpack.c.b16 %v2202, %v2201
        %v2584 = vpack.c.b16 %v2204, %v2203
        %v2585 = vpack.c.b16 %v2206, %v2205
        %v2586 = vpack.c.b16 %v2208, %v2207
        %v2587 = vpack.c.b16 %v2210, %v2209
        %v2588 = vpack.c.b16 %v2212, %v2211
        %v2589 = vpack.c.b16 %v2214, %v2213
        %v2590 = vpack.c.b16 %v2216, %v2215
        %v2591 = vpack.c.b16 %v2218, %v2217
        %v2592 = vpack.c.b16 %v2220, %v2219
        %v2593 = vpack.c.b16 %v2222, %v2221
        %v2594 = vpack.c.b16 %v2224, %v2223
        %v2595 = vpack.c.b16 %v2226, %v2225
        %v2596 = vpack.c.b16 %v2228, %v2227
        %v2597 = vpack.c.b16 %v2230, %v2229
        %v2598 = vpack.c.b16 %v2232, %v2231
        %v2599 = vpack.c.b16 %v2234, %v2233
        %v2600 = vpack.c.b16 %v2236, %v2235
        %v2601 = vpack.c.b16 %v2238, %v2237
        %v2602 = vpack.c.b16 %v2240, %v2239
        %v2603 = vpack.c.b16 %v2242, %v2241
        %v2604 = vpack.c.b16 %v2244, %v2243
        %v2605 = vpack.c.b16 %v2246, %v2245
        %v2606 = vpack.c.b16 %v2248, %v2247
        %v2607 = vpack.c.b16 %v2250, %v2249
        %v2608 = vpack.c.b16 %v2252, %v2251
        %v2609 = vpack.c.b16 %v2254, %v2253
        %v2610 = vpack.c.b16 %v2256, %v2255
        %v2611 = vpack.c.b16 %v2258, %v2257
        %v2612 = vpack.c.b16 %v2260, %v2259
        %v2613 = vpack.c.b16 %v2262, %v2261
        %v2614 = vpack.c.b16 %v2264, %v2263
        %v2615 = vpack.c.b16 %v2266, %v2265
        %v2616 = vpack.c.b16 %v2268, %v2267
        %v2617 = vpack.c.b16 %v2270, %v2269
        %v2618 = vpack.c.b16 %v2272, %v2271
        %v2619 = vpack.c.b16 %v2274, %v2273
        %v2620 = vpack.c.b16 %v2276, %v2275
        %v2621 = vpack.c.b16 %v2278, %v2277
        %v2622 = vpack.c.b16 %v2280, %v2279
        %v2623 = vpack.c.b16 %v2282, %v2281
        %v2624 = vpack.c.b16 %v2284, %v2283
        %v2625 = vpack.c.b16 %v2286, %v2285
        %v2626 = vpack.c.b16 %v2288, %v2287
        %v2627 = vpack.c.b16 %v2290, %v2289
        %v2628 = vpack.c.b16 %v2292, %v2291
        %v2629 = vpack.c.b16 %v2294, %v2293
        %v2630 = vpack.c.b16 %v2296, %v2295
        %v2631 = vpack.c.b16 %v2298, %v2297
        %v2632 = vpack.c.b16 %v2300, %v2299
        %v2633 = vpack.c.b16 %v2302, %v2301
        %v2634 = vpack.c.b16 %v2304, %v2303
        %v2635 = vpack.c.b16 %v2306, %v2305
        %v2636 = vpack.c.b16 %v2308, %v2307
        %v2637 = vpack.c.b16 %v2310, %v2309
        %v2638 = vpack.c.b16 %v2312, %v2311
        %v2639 = vpack.c.b16 %v2314, %v2313
        %v2640 = vpack.c.b16 %v2316, %v2315
        %v2641 = vpack.c.b16 %v2318, %v2317
        %v2642 = vpack.c.b16 %v2320, %v2319
        %v2643 = vpack.c.b16 %v2322, %v2321
        %v2644 = vpack.c.b16 %v2324, %v2323
        %v2645 = vpack.c.b16 %v2326, %v2325
        %v2646 = vpack.c.b16 %v2328, %v2327
        %v2647 = vpack.c.b16 %v2330, %v2329
        %v2648 = vpack.c.b16 %v2332, %v2331
        %v2649 = vpack.c.b16 %v2334, %v2333
        %v2650 = vpack.c.b16 %v2336, %v2335
        %v2651 = vpack.c.b16 %v2338, %v2337
        %v2652 = vpack.c.b16 %v2340, %v2339
        %v2653 = vpack.c.b16 %v2342, %v2341
        %v2654 = vpack.c.b16 %v2344, %v2343
        %v2655 = vpack.c.b16 %v2346, %v2345
        %v2656 = vpack.c.b16 %v2348, %v2347
        %v2657 = vpack.c.b16 %v2350, %v2349
        %v2658 = vpack.c.b16 %v2352, %v2351
        %v2659 = vpack.c.b16 %v2354, %v2353
        %v2660 = vpack.c.b16 %v2356, %v2355
        %v2661 = vpack.c.b16 %v2358, %v2357
        %v2662 = vpack.c.b16 %v2360, %v2359
        %v2663 = vpack.c.b16 %v2362, %v2361
        %v2664 = vpack.c.b16 %v2364, %v2363
        %v2665 = vpack.c.b16 %v2366, %v2365
        %v2666 = vpack.c.b16 %v2368, %v2367
        %v2667 = vpack.c.b16 %v2370, %v2369
        %v2668 = vpack.c.b16 %v2372, %v2371
        %v2669 = vpack.c.b16 %v2374, %v2373
        %v2670 = vpack.c.b16 %v2376, %v2375
        %v2671 = vpack.c.b16 %v2378, %v2377
        %v2672 = vpack.c.b16 %v2380, %v2379
        %v2673 = vpack.c.b16 %v2382, %v2381
        %v2674 = vpack.c.b16 %v2384, %v2383
        %v2675 = vpack.c.b16 %v2386, %v2385
        %v2676 = vpack.c.b16 %v2388, %v2387
        %v2677 = vpack.c.b16 %v2390, %v2389
        %v2678 = vpack.c.b16 %v2392, %v2391
        %v2679 = vpack.c.b16 %v2394, %v2393
        %v2680 = vpack.c.b16 %v2396, %v2395
        %v2681 = vpack.c.b16 %v2398, %v2397
        %v2682 = vpack.c.b16 %v2400, %v2399
        %v2683 = vpack.c.b16 %v2402, %v2401
        %v2684 = vpack.c.b16 %v2404, %v2403
        %v2685 = vpack.c.b16 %v2406, %v2405
        %v2686 = vpack.c.b16 %v2408, %v2407
        %v2687 = vpack.c.b16 %v2410, %v2409
        %v2688 = vpack.c.b16 %v2412, %v2411
        %v2689 = vpack.c.b16 %v2414, %v2413
        %v2690 = vpack.c.b16 %v2416, %v2415
        %v2691 = vpack.c.b16 %v2418, %v2417
        %v2692 = vpack.c.b16 %v2420, %v2419
        %v2693 = vpack.c.b16 %v2422, %v2421
        %v2694 = vpack.c.b16 %v2424, %v2423
        %v2695 = vpack.c.b16 %v2426, %v2425
        %v2696 = vpack.c.b16 %v2428, %v2427
        %v2697 = vpack.c.b16 %v2430, %v2429
        %v2698 = vpack.c.b16 %v2432, %v2431
        %v2699 = vpack.c.b16 %v2434, %v2433
        %v2700 = vpack.c.b16 %v2436, %v2435
        %v2701 = vpack.c.b16 %v2438, %v2437
        %v2702 = vpack.c.b16 %v2440, %v2439
        %v2703 = vpack.c.b16 %v2442, %v2441
        %v2704 = vpack.c.b16 %v2444, %v2443
        %v2705 = vpack.c.b16 %v2446, %v2445
        %v2706 = vpack.c.b16 %v2448, %v2447
        %v2707 = vpack.c.b16 %v2450, %v2449
        %v2708 = vpack.c.b16 %v2452, %v2451
        %v2709 = vpack.c.b16 %v2454, %v2453
        %v2710 = vpack.c.b16 %v2456, %v2455
        %v2711 = vpack.c.b16 %v2458, %v2457
        %v2712 = vpack.c.b16 %v2460, %v2459
        %v2713 = vpack.c.b16 %v2462, %v2461
        %v2714 = vpack.c.b16 %v2464, %v2463
        %v2715 = vpack.c.b16 %v2466, %v2465
        %v2716 = vpack.c.b16 %v2468, %v2467
        %v2717 = vpack.c.b16 %v2470, %v2469
        %v2718 = vpack.c.b16 %v2472, %v2471
        %v2719 = vpack.c.b16 %v2474, %v2473
        %v2720 = vpack.c.b16 %v2476, %v2475
        %v2721 = vpack.c.b16 %v2478, %v2477
        %v2722 = vpack.c.b16 %v2480, %v2479
        %v2723 = vpack.c.b16 %v2482, %v2481
        %v2724 = vpack.c.b16 %v2484, %v2483
        %v2725 = vpack.c.b16 %v2486, %v2485
        %v2726 = vpack.c.b16 %v2488, %v2487
        %v2727 = vpack.c.b16 %v2490, %v2489
        %v2728 = vpack.c.b16 %v2492, %v2491
        %v2729 = vpack.c.b16 %v2494, %v2493
        %v2730 = vpack.c.b16 %v2496, %v2495
        %v2731 = vpack.c.b16 %v2498, %v2497
        %v2732 = vpack.c.b16 %v2500, %v2499
        %v2733 = vpack.c.b16 %v2502, %v2501
        %v2734 = vpack.c.b16 %v2504, %v2503
        %v2735 = vpack.c.b16 %v2506, %v2505
        %v2736 = vpack.c.b16 %v2508, %v2507
        %v2737 = vpack.c.b16 %v2510, %v2509
        %v2738 = vpack.c.b16 %v2512, %v2511
        %v2739 = vpack.c.b16 %v2514, %v2513
        %v2740 = vpack.c.b16 %v2516, %v2515
        %v2741 = vpack.c.b16 %v2518, %v2517
        %v2742 = vpack.c.b16 %v2520, %v2519
        %v2743 = vpack.c.b16 %v2522, %v2521
        %v2744 = vpack.c.b16 %v2524, %v2523
        %v2745 = vpack.c.b16 %v2526, %v2525
        %v2746 = vpack.c.b16 %v2528, %v2527
        %v2747 = vpack.c.b16 %v2530, %v2529
        %v2748 = vpack.c.b16 %v2532, %v2531
        %v2749 = vpack.c.b16 %v2534, %v2533
        %v2750 = vpack.c.b16 %v2536, %v2535
        %v2751 = vpack.c.b16 %v2538, %v2537
        %v2752 = vpack.c.b16 %v2540, %v2539
        %v2753 = vpack.c.b16 %v2542, %v2541
        %v2754 = vpack.c.b16 %v2544, %v2543
        %v2755 = vpack.c.b16 %v2546, %v2545
        %v2756 = vpack.c.b16 %v2548, %v2547
        %v2757 = vpack.c.b16 %v2550, %v2549
        %v2758 = vpack.c.b16 %v2552, %v2551
        %v2759 = vpack.c.b16 %v2554, %v2553
        %v2760 = vpack.c.b16 %v2556, %v2555
        %v2761 = vpack.c.b16 %v2558, %v2557
        %v2762 = vpack.c.b16 %v2560, %v2559
        %v2763 = vpack.c.b16 %v2562, %v2561
        %v2764 = vpack.c.b16 %v2564, %v2563
        %2965 = vmatprep.subr.bf16.mxu0 0
        %2966 = vmatpush1.bf16.msra.mxu0 %v2572
        %2967 = vmatprep.subr.bf16.mxu0 0
        %2968 = vmatpush1.bf16.msra.mxu0 %v2571
        %2969 = vmatprep.subr.bf16.mxu0 0
        %2970 = vmatpush1.bf16.msra.mxu0 %v2570
        %2971 = vmatprep.subr.bf16.mxu0 0
        %2972 = vmatpush1.bf16.msra.mxu0 %v2569
        %2973 = vmatprep.subr.bf16.mxu0 0
        %2974 = vmatpush1.bf16.msra.mxu0 %v2568
        %2975 = vmatprep.subr.bf16.mxu0 0
        %2976 = vmatpush1.bf16.msra.mxu0 %v2567
        %2977 = vmatprep.subr.bf16.mxu0 0
        %2978 = vmatpush1.bf16.msra.mxu0 %v2566
        %2979 = vmatprep.subr.bf16.mxu0 0
        %2980 = vmatpush1.bf16.msra.mxu0 %v2565
        %2981 = vmatprep.subr.bf16.mxu0 0
        %2982 = vmatpush2.bf16.msra.mxu0 %v2580
        %2983 = vmatprep.subr.bf16.mxu0 0
        %2984 = vmatpush2.bf16.msra.mxu0 %v2579
        %2985 = vmatprep.subr.bf16.mxu0 0
        %2986 = vmatpush2.bf16.msra.mxu0 %v2578
        %2987 = vmatprep.subr.bf16.mxu0 0
        %2988 = vmatpush2.bf16.msra.mxu0 %v2577
        %2989 = vmatprep.subr.bf16.mxu0 0
        %2990 = vmatpush2.bf16.msra.mxu0 %v2576
        %2991 = vmatprep.subr.bf16.mxu0 0
        %2992 = vmatpush2.bf16.msra.mxu0 %v2575
        %2993 = vmatprep.subr.bf16.mxu0 0
        %2994 = vmatpush2.bf16.msra.mxu0 %v2574
        %2995 = vmatprep.subr.bf16.mxu0 0
        %2996 = vmatpush2.bf16.msra.mxu0 %v2573
        %2997 = vmatprep.mubr.bf16.mxu0 %v1716
        %2998 = vmatmul.mubr.bf16.gmra.mxu0 %v1715
        %v2999 = vpop.f32.mrf.mxu0
        %v3000 = vadd.f32 0.0, %v2999
        %v3001 = vpop.f32.mrf.mxu0
        %v3002 = vpop.f32.mrf.mxu0
        %v3003 = vadd.f32 0.0, %v3002
        %v3004 = vpop.f32.mrf.mxu0
        %3005 = vdwg.mxu0
        %3006 = vmatprep.subr.bf16.mxu0 0
        %3007 = vmatpush1.bf16.msra.mxu0 %v2588
        %3008 = vmatprep.subr.bf16.mxu0 0
        %3009 = vmatpush1.bf16.msra.mxu0 %v2587
        %3010 = vmatprep.subr.bf16.mxu0 0
        %3011 = vmatpush1.bf16.msra.mxu0 %v2586
        %3012 = vmatprep.subr.bf16.mxu0 0
        %3013 = vmatpush1.bf16.msra.mxu0 %v2585
        %3014 = vmatprep.subr.bf16.mxu0 0
        %3015 = vmatpush1.bf16.msra.mxu0 %v2584
        %3016 = vmatprep.subr.bf16.mxu0 0
        %3017 = vmatpush1.bf16.msra.mxu0 %v2583
        %3018 = vmatprep.subr.bf16.mxu0 0
        %3019 = vmatpush1.bf16.msra.mxu0 %v2582
        %3020 = vmatprep.subr.bf16.mxu0 0
        %3021 = vmatpush1.bf16.msra.mxu0 %v2581
        %3022 = vmatprep.subr.bf16.mxu0 0
        %3023 = vmatpush2.bf16.msra.mxu0 %v2596
        %3024 = vmatprep.subr.bf16.mxu0 0
        %3025 = vmatpush2.bf16.msra.mxu0 %v2595
        %3026 = vmatprep.subr.bf16.mxu0 0
        %3027 = vmatpush2.bf16.msra.mxu0 %v2594
        %3028 = vmatprep.subr.bf16.mxu0 0
        %3029 = vmatpush2.bf16.msra.mxu0 %v2593
        %3030 = vmatprep.subr.bf16.mxu0 0
        %3031 = vmatpush2.bf16.msra.mxu0 %v2592
        %3032 = vmatprep.subr.bf16.mxu0 0
        %3033 = vmatpush2.bf16.msra.mxu0 %v2591
        %3034 = vmatprep.subr.bf16.mxu0 0
        %3035 = vmatpush2.bf16.msra.mxu0 %v2590
        %3036 = vmatprep.subr.bf16.mxu0 0
        %3037 = vmatpush2.bf16.msra.mxu0 %v2589
        %3038 = vmatprep.mubr.bf16.mxu0 %v1718
        %3039 = vmatmul.mubr.bf16.gmra.mxu0 %v1717
        %v3040 = vpop.f32.mrf.mxu0
        %v3041 = vadd.f32 %v3000, %v3040
        %v3042 = vpop.f32.mrf.mxu0
        %v3043 = vpop.f32.mrf.mxu0
        %v3044 = vadd.f32 %v3003, %v3043
        %v3045 = vpop.f32.mrf.mxu0
        %3046 = vdwg.mxu0
        %3047 = vmatprep.subr.bf16.mxu0 0
        %3048 = vmatpush1.bf16.msra.mxu0 %v2604
        %3049 = vmatprep.subr.bf16.mxu0 0
        %3050 = vmatpush1.bf16.msra.mxu0 %v2603
        %3051 = vmatprep.subr.bf16.mxu0 0
        %3052 = vmatpush1.bf16.msra.mxu0 %v2602
        %3053 = vmatprep.subr.bf16.mxu0 0
        %3054 = vmatpush1.bf16.msra.mxu0 %v2601
        %3055 = vmatprep.subr.bf16.mxu0 0
        %3056 = vmatpush1.bf16.msra.mxu0 %v2600
        %3057 = vmatprep.subr.bf16.mxu0 0
        %3058 = vmatpush1.bf16.msra.mxu0 %v2599
        %3059 = vmatprep.subr.bf16.mxu0 0
        %3060 = vmatpush1.bf16.msra.mxu0 %v2598
        %3061 = vmatprep.subr.bf16.mxu0 0
        %3062 = vmatpush1.bf16.msra.mxu0 %v2597
        %3063 = vmatprep.subr.bf16.mxu0 0
        %3064 = vmatpush2.bf16.msra.mxu0 %v2612
        %3065 = vmatprep.subr.bf16.mxu0 0
        %3066 = vmatpush2.bf16.msra.mxu0 %v2611
        %3067 = vmatprep.subr.bf16.mxu0 0
        %3068 = vmatpush2.bf16.msra.mxu0 %v2610
        %3069 = vmatprep.subr.bf16.mxu0 0
        %3070 = vmatpush2.bf16.msra.mxu0 %v2609
        %3071 = vmatprep.subr.bf16.mxu0 0
        %3072 = vmatpush2.bf16.msra.mxu0 %v2608
        %3073 = vmatprep.subr.bf16.mxu0 0
        %3074 = vmatpush2.bf16.msra.mxu0 %v2607
        %3075 = vmatprep.subr.bf16.mxu0 0
        %3076 = vmatpush2.bf16.msra.mxu0 %v2606
        %3077 = vmatprep.subr.bf16.mxu0 0
        %3078 = vmatpush2.bf16.msra.mxu0 %v2605
        %3079 = vmatprep.mubr.bf16.mxu0 %v1720
        %3080 = vmatmul.mubr.bf16.gmra.mxu0 %v1719
        %v3081 = vpop.f32.mrf.mxu0
        %v3082 = vadd.f32 %v3041, %v3081
        %v3083 = vpop.f32.mrf.mxu0
        %v3084 = vpop.f32.mrf.mxu0
        %v3085 = vadd.f32 %v3044, %v3084
        %v3086 = vpop.f32.mrf.mxu0
        %3087 = vdwg.mxu0
        %3088 = vmatprep.subr.bf16.mxu0 0
        %3089 = vmatpush1.bf16.msra.mxu0 %v2620
        %3090 = vmatprep.subr.bf16.mxu0 0
        %3091 = vmatpush1.bf16.msra.mxu0 %v2619
        %3092 = vmatprep.subr.bf16.mxu0 0
        %3093 = vmatpush1.bf16.msra.mxu0 %v2618
        %3094 = vmatprep.subr.bf16.mxu0 0
        %3095 = vmatpush1.bf16.msra.mxu0 %v2617
        %3096 = vmatprep.subr.bf16.mxu0 0
        %3097 = vmatpush1.bf16.msra.mxu0 %v2616
        %3098 = vmatprep.subr.bf16.mxu0 0
        %3099 = vmatpush1.bf16.msra.mxu0 %v2615
        %3100 = vmatprep.subr.bf16.mxu0 0
        %3101 = vmatpush1.bf16.msra.mxu0 %v2614
        %3102 = vmatprep.subr.bf16.mxu0 0
        %3103 = vmatpush1.bf16.msra.mxu0 %v2613
        %3104 = vmatprep.subr.bf16.mxu0 0
        %3105 = vmatpush2.bf16.msra.mxu0 %v2628
        %3106 = vmatprep.subr.bf16.mxu0 0
        %3107 = vmatpush2.bf16.msra.mxu0 %v2627
        %3108 = vmatprep.subr.bf16.mxu0 0
        %3109 = vmatpush2.bf16.msra.mxu0 %v2626
        %3110 = vmatprep.subr.bf16.mxu0 0
        %3111 = vmatpush2.bf16.msra.mxu0 %v2625
        %3112 = vmatprep.subr.bf16.mxu0 0
        %3113 = vmatpush2.bf16.msra.mxu0 %v2624
        %3114 = vmatprep.subr.bf16.mxu0 0
        %3115 = vmatpush2.bf16.msra.mxu0 %v2623
        %3116 = vmatprep.subr.bf16.mxu0 0
        %3117 = vmatpush2.bf16.msra.mxu0 %v2622
        %3118 = vmatprep.subr.bf16.mxu0 0
        %3119 = vmatpush2.bf16.msra.mxu0 %v2621
        %3120 = vmatprep.mubr.bf16.mxu0 %v1722
        %3121 = vmatmul.mubr.bf16.gmra.mxu0 %v1721
        %v3122 = vpop.f32.mrf.mxu0
        %v3123 = vadd.f32 %v3082, %v3122
        %v3124 = vpop.f32.mrf.mxu0
        %v3125 = vpop.f32.mrf.mxu0
        %v3126 = vadd.f32 %v3085, %v3125
        %v3127 = vpop.f32.mrf.mxu0
        %3128 = vdwg.mxu0
        %3129 = vmatprep.subr.bf16.mxu0 0
        %3130 = vmatpush1.bf16.msra.mxu0 %v2636
        %3131 = vmatprep.subr.bf16.mxu0 0
        %3132 = vmatpush1.bf16.msra.mxu0 %v2635
        %3133 = vmatprep.subr.bf16.mxu0 0
        %3134 = vmatpush1.bf16.msra.mxu0 %v2634
        %3135 = vmatprep.subr.bf16.mxu0 0
        %3136 = vmatpush1.bf16.msra.mxu0 %v2633
        %3137 = vmatprep.subr.bf16.mxu0 0
        %3138 = vmatpush1.bf16.msra.mxu0 %v2632
        %3139 = vmatprep.subr.bf16.mxu0 0
        %3140 = vmatpush1.bf16.msra.mxu0 %v2631
        %3141 = vmatprep.subr.bf16.mxu0 0
        %3142 = vmatpush1.bf16.msra.mxu0 %v2630
        %3143 = vmatprep.subr.bf16.mxu0 0
        %3144 = vmatpush1.bf16.msra.mxu0 %v2629
        %3145 = vmatprep.subr.bf16.mxu0 0
        %3146 = vmatpush2.bf16.msra.mxu0 %v2644
        %3147 = vmatprep.subr.bf16.mxu0 0
        %3148 = vmatpush2.bf16.msra.mxu0 %v2643
        %3149 = vmatprep.subr.bf16.mxu0 0
        %3150 = vmatpush2.bf16.msra.mxu0 %v2642
        %3151 = vmatprep.subr.bf16.mxu0 0
        %3152 = vmatpush2.bf16.msra.mxu0 %v2641
        %3153 = vmatprep.subr.bf16.mxu0 0
        %3154 = vmatpush2.bf16.msra.mxu0 %v2640
        %3155 = vmatprep.subr.bf16.mxu0 0
        %3156 = vmatpush2.bf16.msra.mxu0 %v2639
        %3157 = vmatprep.subr.bf16.mxu0 0
        %3158 = vmatpush2.bf16.msra.mxu0 %v2638
        %3159 = vmatprep.subr.bf16.mxu0 0
        %3160 = vmatpush2.bf16.msra.mxu0 %v2637
        %3161 = vmatprep.mubr.bf16.mxu0 %v1724
        %3162 = vmatmul.mubr.bf16.gmra.mxu0 %v1723
        %v3163 = vpop.f32.mrf.mxu0
        %v3164 = vadd.f32 %v3123, %v3163
        %v3165 = vpop.f32.mrf.mxu0
        %v3166 = vpop.f32.mrf.mxu0
        %v3167 = vadd.f32 %v3126, %v3166
        %v3168 = vpop.f32.mrf.mxu0
        %3169 = vdwg.mxu0
        %3170 = vmatprep.subr.bf16.mxu0 0
        %3171 = vmatpush1.bf16.msra.mxu0 %v2652
        %3172 = vmatprep.subr.bf16.mxu0 0
        %3173 = vmatpush1.bf16.msra.mxu0 %v2651
        %3174 = vmatprep.subr.bf16.mxu0 0
        %3175 = vmatpush1.bf16.msra.mxu0 %v2650
        %3176 = vmatprep.subr.bf16.mxu0 0
        %3177 = vmatpush1.bf16.msra.mxu0 %v2649
        %3178 = vmatprep.subr.bf16.mxu0 0
        %3179 = vmatpush1.bf16.msra.mxu0 %v2648
        %3180 = vmatprep.subr.bf16.mxu0 0
        %3181 = vmatpush1.bf16.msra.mxu0 %v2647
        %3182 = vmatprep.subr.bf16.mxu0 0
        %3183 = vmatpush1.bf16.msra.mxu0 %v2646
        %3184 = vmatprep.subr.bf16.mxu0 0
        %3185 = vmatpush1.bf16.msra.mxu0 %v2645
        %3186 = vmatprep.subr.bf16.mxu0 0
        %3187 = vmatpush2.bf16.msra.mxu0 %v2660
        %3188 = vmatprep.subr.bf16.mxu0 0
        %3189 = vmatpush2.bf16.msra.mxu0 %v2659
        %3190 = vmatprep.subr.bf16.mxu0 0
        %3191 = vmatpush2.bf16.msra.mxu0 %v2658
        %3192 = vmatprep.subr.bf16.mxu0 0
        %3193 = vmatpush2.bf16.msra.mxu0 %v2657
        %3194 = vmatprep.subr.bf16.mxu0 0
        %3195 = vmatpush2.bf16.msra.mxu0 %v2656
        %3196 = vmatprep.subr.bf16.mxu0 0
        %3197 = vmatpush2.bf16.msra.mxu0 %v2655
        %3198 = vmatprep.subr.bf16.mxu0 0
        %3199 = vmatpush2.bf16.msra.mxu0 %v2654
        %3200 = vmatprep.subr.bf16.mxu0 0
        %3201 = vmatpush2.bf16.msra.mxu0 %v2653
        %3202 = vmatprep.mubr.bf16.mxu0 %v1726
        %3203 = vmatmul.mubr.bf16.gmra.mxu0 %v1725
        %v3204 = vpop.f32.mrf.mxu0
        %v3205 = vadd.f32 %v3164, %v3204
        %v3206 = vpop.f32.mrf.mxu0
        %v3207 = vpop.f32.mrf.mxu0
        %v3208 = vadd.f32 %v3167, %v3207
        %v3209 = vpop.f32.mrf.mxu0
        %3210 = vdwg.mxu0
        %3211 = vmatprep.subr.bf16.mxu0 0
        %3212 = vmatpush1.bf16.msra.mxu0 %v2668
        %3213 = vmatprep.subr.bf16.mxu0 0
        %3214 = vmatpush1.bf16.msra.mxu0 %v2667
        %3215 = vmatprep.subr.bf16.mxu0 0
        %3216 = vmatpush1.bf16.msra.mxu0 %v2666
        %3217 = vmatprep.subr.bf16.mxu0 0
        %3218 = vmatpush1.bf16.msra.mxu0 %v2665
        %3219 = vmatprep.subr.bf16.mxu0 0
        %3220 = vmatpush1.bf16.msra.mxu0 %v2664
        %3221 = vmatprep.subr.bf16.mxu0 0
        %3222 = vmatpush1.bf16.msra.mxu0 %v2663
        %3223 = vmatprep.subr.bf16.mxu0 0
        %3224 = vmatpush1.bf16.msra.mxu0 %v2662
        %3225 = vmatprep.subr.bf16.mxu0 0
        %3226 = vmatpush1.bf16.msra.mxu0 %v2661
        %3227 = vmatprep.subr.bf16.mxu0 0
        %3228 = vmatpush2.bf16.msra.mxu0 %v2676
        %3229 = vmatprep.subr.bf16.mxu0 0
        %3230 = vmatpush2.bf16.msra.mxu0 %v2675
        %3231 = vmatprep.subr.bf16.mxu0 0
        %3232 = vmatpush2.bf16.msra.mxu0 %v2674
        %3233 = vmatprep.subr.bf16.mxu0 0
        %3234 = vmatpush2.bf16.msra.mxu0 %v2673
        %3235 = vmatprep.subr.bf16.mxu0 0
        %3236 = vmatpush2.bf16.msra.mxu0 %v2672
        %3237 = vmatprep.subr.bf16.mxu0 0
        %3238 = vmatpush2.bf16.msra.mxu0 %v2671
        %3239 = vmatprep.subr.bf16.mxu0 0
        %3240 = vmatpush2.bf16.msra.mxu0 %v2670
        %3241 = vmatprep.subr.bf16.mxu0 0
        %3242 = vmatpush2.bf16.msra.mxu0 %v2669
        %3243 = vmatprep.mubr.bf16.mxu0 %v1728
        %3244 = vmatmul.mubr.bf16.gmra.mxu0 %v1727
        %v3245 = vpop.f32.mrf.mxu0
        %v3246 = vadd.f32 %v3205, %v3245
        %v3247 = vpop.f32.mrf.mxu0
        %v3248 = vpop.f32.mrf.mxu0
        %v3249 = vadd.f32 %v3208, %v3248
        %v3250 = vpop.f32.mrf.mxu0
        %3251 = vdwg.mxu0
        %3252 = vmatprep.subr.bf16.mxu0 0
        %3253 = vmatpush1.bf16.msra.mxu0 %v2684
        %3254 = vmatprep.subr.bf16.mxu0 0
        %3255 = vmatpush1.bf16.msra.mxu0 %v2683
        %3256 = vmatprep.subr.bf16.mxu0 0
        %3257 = vmatpush1.bf16.msra.mxu0 %v2682
        %3258 = vmatprep.subr.bf16.mxu0 0
        %3259 = vmatpush1.bf16.msra.mxu0 %v2681
        %3260 = vmatprep.subr.bf16.mxu0 0
        %3261 = vmatpush1.bf16.msra.mxu0 %v2680
        %3262 = vmatprep.subr.bf16.mxu0 0
        %3263 = vmatpush1.bf16.msra.mxu0 %v2679
        %3264 = vmatprep.subr.bf16.mxu0 0
        %3265 = vmatpush1.bf16.msra.mxu0 %v2678
        %3266 = vmatprep.subr.bf16.mxu0 0
        %3267 = vmatpush1.bf16.msra.mxu0 %v2677
        %3268 = vmatprep.subr.bf16.mxu0 0
        %3269 = vmatpush2.bf16.msra.mxu0 %v2692
        %3270 = vmatprep.subr.bf16.mxu0 0
        %3271 = vmatpush2.bf16.msra.mxu0 %v2691
        %3272 = vmatprep.subr.bf16.mxu0 0
        %3273 = vmatpush2.bf16.msra.mxu0 %v2690
        %3274 = vmatprep.subr.bf16.mxu0 0
        %3275 = vmatpush2.bf16.msra.mxu0 %v2689
        %3276 = vmatprep.subr.bf16.mxu0 0
        %3277 = vmatpush2.bf16.msra.mxu0 %v2688
        %3278 = vmatprep.subr.bf16.mxu0 0
        %3279 = vmatpush2.bf16.msra.mxu0 %v2687
        %3280 = vmatprep.subr.bf16.mxu0 0
        %3281 = vmatpush2.bf16.msra.mxu0 %v2686
        %3282 = vmatprep.subr.bf16.mxu0 0
        %3283 = vmatpush2.bf16.msra.mxu0 %v2685
        %3284 = vmatprep.mubr.bf16.mxu0 %v1730
        %3285 = vmatmul.mubr.bf16.gmra.mxu0 %v1729
        %v3286 = vpop.f32.mrf.mxu0
        %v3287 = vadd.f32 %v3246, %v3286
        %v3288 = vpop.f32.mrf.mxu0
        %v3289 = vpop.f32.mrf.mxu0
        %v3290 = vadd.f32 %v3249, %v3289
        %v3291 = vpop.f32.mrf.mxu0
        %3292 = vdwg.mxu0
        %3293 = vmatprep.subr.bf16.mxu0 0
        %3294 = vmatpush1.bf16.msra.mxu0 %v2700
        %3295 = vmatprep.subr.bf16.mxu0 0
        %3296 = vmatpush1.bf16.msra.mxu0 %v2699
        %3297 = vmatprep.subr.bf16.mxu0 0
        %3298 = vmatpush1.bf16.msra.mxu0 %v2698
        %3299 = vmatprep.subr.bf16.mxu0 0
        %3300 = vmatpush1.bf16.msra.mxu0 %v2697
        %3301 = vmatprep.subr.bf16.mxu0 0
        %3302 = vmatpush1.bf16.msra.mxu0 %v2696
        %3303 = vmatprep.subr.bf16.mxu0 0
        %3304 = vmatpush1.bf16.msra.mxu0 %v2695
        %3305 = vmatprep.subr.bf16.mxu0 0
        %3306 = vmatpush1.bf16.msra.mxu0 %v2694
        %3307 = vmatprep.subr.bf16.mxu0 0
        %3308 = vmatpush1.bf16.msra.mxu0 %v2693
        %3309 = vmatprep.subr.bf16.mxu0 0
        %3310 = vmatpush2.bf16.msra.mxu0 %v2708
        %3311 = vmatprep.subr.bf16.mxu0 0
        %3312 = vmatpush2.bf16.msra.mxu0 %v2707
        %3313 = vmatprep.subr.bf16.mxu0 0
        %3314 = vmatpush2.bf16.msra.mxu0 %v2706
        %3315 = vmatprep.subr.bf16.mxu0 0
        %3316 = vmatpush2.bf16.msra.mxu0 %v2705
        %3317 = vmatprep.subr.bf16.mxu0 0
        %3318 = vmatpush2.bf16.msra.mxu0 %v2704
        %3319 = vmatprep.subr.bf16.mxu0 0
        %3320 = vmatpush2.bf16.msra.mxu0 %v2703
        %3321 = vmatprep.subr.bf16.mxu0 0
        %3322 = vmatpush2.bf16.msra.mxu0 %v2702
        %3323 = vmatprep.subr.bf16.mxu0 0
        %3324 = vmatpush2.bf16.msra.mxu0 %v2701
        %3325 = vmatprep.mubr.bf16.mxu0 %v1732
        %3326 = vmatmul.mubr.bf16.gmra.mxu0 %v1731
        %v3327 = vpop.f32.mrf.mxu0
        %v3328 = vadd.f32 %v3287, %v3327
        %v3329 = vpop.f32.mrf.mxu0
        %v3330 = vpop.f32.mrf.mxu0
        %v3331 = vadd.f32 %v3290, %v3330
        %v3332 = vpop.f32.mrf.mxu0
        %3333 = vdwg.mxu0
        %3334 = vmatprep.subr.bf16.mxu0 0
        %3335 = vmatpush1.bf16.msra.mxu0 %v2716
        %3336 = vmatprep.subr.bf16.mxu0 0
        %3337 = vmatpush1.bf16.msra.mxu0 %v2715
        %3338 = vmatprep.subr.bf16.mxu0 0
        %3339 = vmatpush1.bf16.msra.mxu0 %v2714
        %3340 = vmatprep.subr.bf16.mxu0 0
        %3341 = vmatpush1.bf16.msra.mxu0 %v2713
        %3342 = vmatprep.subr.bf16.mxu0 0
        %3343 = vmatpush1.bf16.msra.mxu0 %v2712
        %3344 = vmatprep.subr.bf16.mxu0 0
        %3345 = vmatpush1.bf16.msra.mxu0 %v2711
        %3346 = vmatprep.subr.bf16.mxu0 0
        %3347 = vmatpush1.bf16.msra.mxu0 %v2710
        %3348 = vmatprep.subr.bf16.mxu0 0
        %3349 = vmatpush1.bf16.msra.mxu0 %v2709
        %3350 = vmatprep.subr.bf16.mxu0 0
        %3351 = vmatpush2.bf16.msra.mxu0 %v2724
        %3352 = vmatprep.subr.bf16.mxu0 0
        %3353 = vmatpush2.bf16.msra.mxu0 %v2723
        %3354 = vmatprep.subr.bf16.mxu0 0
        %3355 = vmatpush2.bf16.msra.mxu0 %v2722
        %3356 = vmatprep.subr.bf16.mxu0 0
        %3357 = vmatpush2.bf16.msra.mxu0 %v2721
        %3358 = vmatprep.subr.bf16.mxu0 0
        %3359 = vmatpush2.bf16.msra.mxu0 %v2720
        %3360 = vmatprep.subr.bf16.mxu0 0
        %3361 = vmatpush2.bf16.msra.mxu0 %v2719
        %3362 = vmatprep.subr.bf16.mxu0 0
        %3363 = vmatpush2.bf16.msra.mxu0 %v2718
        %3364 = vmatprep.subr.bf16.mxu0 0
        %3365 = vmatpush2.bf16.msra.mxu0 %v2717
        %3366 = vmatprep.mubr.bf16.mxu0 %v1734
        %3367 = vmatmul.mubr.bf16.gmra.mxu0 %v1733
        %v3368 = vpop.f32.mrf.mxu0
        %v3369 = vadd.f32 %v3328, %v3368
        %v3370 = vpop.f32.mrf.mxu0
        %v3371 = vpop.f32.mrf.mxu0
        %v3372 = vadd.f32 %v3331, %v3371
        %v3373 = vpop.f32.mrf.mxu0
        %3374 = vdwg.mxu0
        %3375 = vmatprep.subr.bf16.mxu0 0
        %3376 = vmatpush1.bf16.msra.mxu0 %v2732
        %3377 = vmatprep.subr.bf16.mxu0 0
        %3378 = vmatpush1.bf16.msra.mxu0 %v2731
        %3379 = vmatprep.subr.bf16.mxu0 0
        %3380 = vmatpush1.bf16.msra.mxu0 %v2730
        %3381 = vmatprep.subr.bf16.mxu0 0
        %3382 = vmatpush1.bf16.msra.mxu0 %v2729
        %3383 = vmatprep.subr.bf16.mxu0 0
        %3384 = vmatpush1.bf16.msra.mxu0 %v2728
        %3385 = vmatprep.subr.bf16.mxu0 0
        %3386 = vmatpush1.bf16.msra.mxu0 %v2727
        %3387 = vmatprep.subr.bf16.mxu0 0
        %3388 = vmatpush1.bf16.msra.mxu0 %v2726
        %3389 = vmatprep.subr.bf16.mxu0 0
        %3390 = vmatpush1.bf16.msra.mxu0 %v2725
        %3391 = vmatprep.subr.bf16.mxu0 0
        %3392 = vmatpush2.bf16.msra.mxu0 %v2740
        %3393 = vmatprep.subr.bf16.mxu0 0
        %3394 = vmatpush2.bf16.msra.mxu0 %v2739
        %3395 = vmatprep.subr.bf16.mxu0 0
        %3396 = vmatpush2.bf16.msra.mxu0 %v2738
        %3397 = vmatprep.subr.bf16.mxu0 0
        %3398 = vmatpush2.bf16.msra.mxu0 %v2737
        %3399 = vmatprep.subr.bf16.mxu0 0
        %3400 = vmatpush2.bf16.msra.mxu0 %v2736
        %3401 = vmatprep.subr.bf16.mxu0 0
        %3402 = vmatpush2.bf16.msra.mxu0 %v2735
        %3403 = vmatprep.subr.bf16.mxu0 0
        %3404 = vmatpush2.bf16.msra.mxu0 %v2734
        %3405 = vmatprep.subr.bf16.mxu0 0
        %3406 = vmatpush2.bf16.msra.mxu0 %v2733
        %3407 = vmatprep.mubr.bf16.mxu0 %v1736
        %3408 = vmatmul.mubr.bf16.gmra.mxu0 %v1735
        %v3409 = vpop.f32.mrf.mxu0
        %v3410 = vadd.f32 %v3369, %v3409
        %v3411 = vpop.f32.mrf.mxu0
        %v3412 = vpop.f32.mrf.mxu0
        %v3413 = vadd.f32 %v3372, %v3412
        %v3414 = vpop.f32.mrf.mxu0
        %3415 = vdwg.mxu0
        %3416 = vmatprep.subr.bf16.mxu0 0
        %3417 = vmatpush1.bf16.msra.mxu0 %v2748
        %3418 = vmatprep.subr.bf16.mxu0 0
        %3419 = vmatpush1.bf16.msra.mxu0 %v2747
        %3420 = vmatprep.subr.bf16.mxu0 0
        %3421 = vmatpush1.bf16.msra.mxu0 %v2746
        %3422 = vmatprep.subr.bf16.mxu0 0
        %3423 = vmatpush1.bf16.msra.mxu0 %v2745
        %3424 = vmatprep.subr.bf16.mxu0 0
        %3425 = vmatpush1.bf16.msra.mxu0 %v2744
        %3426 = vmatprep.subr.bf16.mxu0 0
        %3427 = vmatpush1.bf16.msra.mxu0 %v2743
        %3428 = vmatprep.subr.bf16.mxu0 0
        %3429 = vmatpush1.bf16.msra.mxu0 %v2742
        %3430 = vmatprep.subr.bf16.mxu0 0
        %3431 = vmatpush1.bf16.msra.mxu0 %v2741
        %3432 = vmatprep.subr.bf16.mxu0 0
        %3433 = vmatpush2.bf16.msra.mxu0 %v2756
        %3434 = vmatprep.subr.bf16.mxu0 0
        %3435 = vmatpush2.bf16.msra.mxu0 %v2755
        %3436 = vmatprep.subr.bf16.mxu0 0
        %3437 = vmatpush2.bf16.msra.mxu0 %v2754
        %3438 = vmatprep.subr.bf16.mxu0 0
        %3439 = vmatpush2.bf16.msra.mxu0 %v2753
        %3440 = vmatprep.subr.bf16.mxu0 0
        %3441 = vmatpush2.bf16.msra.mxu0 %v2752
        %3442 = vmatprep.subr.bf16.mxu0 0
        %3443 = vmatpush2.bf16.msra.mxu0 %v2751
        %3444 = vmatprep.subr.bf16.mxu0 0
        %3445 = vmatpush2.bf16.msra.mxu0 %v2750
        %3446 = vmatprep.subr.bf16.mxu0 0
        %3447 = vmatpush2.bf16.msra.mxu0 %v2749
        %3448 = vmatprep.mubr.bf16.mxu0 %v1738
        %3449 = vmatmul.mubr.bf16.gmra.mxu0 %v1737
        %v3450 = vpop.f32.mrf.mxu0
        %v3451 = vadd.f32 %v3410, %v3450
        %v3452 = vpop.f32.mrf.mxu0
        %v3453 = vpop.f32.mrf.mxu0
        %v3454 = vadd.f32 %v3413, %v3453
        %v3455 = vpop.f32.mrf.mxu0
        %3456 = vdwg.mxu0
        %3457 = vmatprep.subr.bf16.mxu0 0
        %3458 = vmatpush1.bf16.msra.mxu0 %v2764
        %3459 = vmatprep.subr.bf16.mxu0 0
        %3460 = vmatpush1.bf16.msra.mxu0 %v2763
        %3461 = vmatprep.subr.bf16.mxu0 0
        %3462 = vmatpush1.bf16.msra.mxu0 %v2762
        %3463 = vmatprep.subr.bf16.mxu0 0
        %3464 = vmatpush1.bf16.msra.mxu0 %v2761
        %3465 = vmatprep.subr.bf16.mxu0 0
        %3466 = vmatpush1.bf16.msra.mxu0 %v2760
        %3467 = vmatprep.subr.bf16.mxu0 0
        %3468 = vmatpush1.bf16.msra.mxu0 %v2759
        %3469 = vmatprep.subr.bf16.mxu0 0
        %3470 = vmatpush1.bf16.msra.mxu0 %v2758
        %3471 = vmatprep.subr.bf16.mxu0 0
        %3472 = vmatpush1.bf16.msra.mxu0 %v2757
        %3473 = vmatprep.subr.bf16.mxu0 0
        %3474 = vmatpush2.bf16.msra.mxu0 0
        %3475 = vmatprep.subr.bf16.mxu0 0
        %3476 = vmatpush2.bf16.msra.mxu0 0
        %3477 = vmatprep.subr.bf16.mxu0 0
        %3478 = vmatpush2.bf16.msra.mxu0 0
        %3479 = vmatprep.subr.bf16.mxu0 0
        %3480 = vmatpush2.bf16.msra.mxu0 0
        %3481 = vmatprep.subr.bf16.mxu0 0
        %3482 = vmatpush2.bf16.msra.mxu0 0
        %3483 = vmatprep.subr.bf16.mxu0 0
        %3484 = vmatpush2.bf16.msra.mxu0 0
        %3485 = vmatprep.subr.bf16.mxu0 0
        %3486 = vmatpush2.bf16.msra.mxu0 0
        %3487 = vmatprep.subr.bf16.mxu0 0
        %3488 = vmatpush2.bf16.msra.mxu0 0
        %3489 = vmatprep.mubr.bf16.mxu0 0
        %3490 = vmatmul.mubr.bf16.gmra.mxu0 %v1739
        %v3491 = vpop.f32.mrf.mxu0
        %v3492 = vadd.f32 %v3451, %v3491
        %v3493 = vpop.f32.mrf.mxu0
        %v3494 = vpop.f32.mrf.mxu0
        %v3495 = vadd.f32 %v3454, %v3494
        %v3496 = vpop.f32.mrf.mxu0
        %3497 = vdwg.mxu0
        %v3498 = vpack.c.bf16 %v3495, %v3492
        %v3500 = vunpack.c.l.b16 %v3498
        %v3501 = vunpack.c.h.b16 %v3498
        %v3502 = vpack.c.b16 %v3500, %v3500
        %v3503 = vpack.c.b16 %v3501, %v3501
        %3506 = vst [vmem:[%s124] sm:$0xf] %v3502
        %3507 = vst [vmem:[%s124 + $0x4] sm:$0xf] %v3503
        %s3508 = sand.u32 %s60, 1
        %s3509 = scalar_lea.sflag [#allocation7], %s3508
        %s3510 = sand.u32 %s60, 1
        %s3511 = smul.addr %s3510, 8
        %s3512 = scalar_lea.vmem [#allocation8], %s3511
        // Predicated region
        $region45: #{tpu_custom_call.1} parent=23 // pred_check
          %p3513 = pneg %p70
        $region46: #{tpu_custom_call.1} parent=23 // pred_check_branch
          %3515 = sbr.rel (%p3513) target = $region48
        $region47: #{tpu_custom_call.1} parent=23 // pred_region
          %s3516 = smul.u32 2, %s22
          %s3518 = ssub.s32 128, 128
          %3519 = vsyncadd %s3509, %s3518
          %s3520 = smul.addr %s21, 4
          %s3521 = sadd.s32 %s3516, %s3520
          %s3522 = smul.addr %s3521, 64
          %s3523 = scalar_lea.hbm %s2, %s3522
          %s3524 = sshll.u32 %s3512, 4
          %s3525 = int_to_ptr.vmem [resolvable:$true] %s3524
          %3530 = dma.vmem_to_hbm [thread:$0]  %s3525, 128, %s3523, %s3509, 64, 64, 4
        $region48: #{tpu_custom_call.1} parent=23 // pred_fallthru
          _
      $region24: #{tpu_custom_call.1} parent=5 // pred_fallthru
        _
      %p3531 = scmp.le.s32.totalorder 2, %s12
      // Predicated region
      $region49: #{tpu_custom_call.1} parent=5 // pred_check
        %p3532 = pneg %p3531
      $region50: #{tpu_custom_call.1} parent=5 // pred_check_branch
        %3534 = sbr.rel (%p3532) target = $region52
      $region51: #{tpu_custom_call.1} parent=5 // pred_region
        %s3535 = ssub.s32 %s12, 2
        // Predicated region
        $region53: #{tpu_custom_call.1} parent=51 // pred_check
          %p3536 = pneg %p76
        $region54: #{tpu_custom_call.1} parent=51 // pred_check_branch
          %3538 = sbr.rel (%p3536) target = $region56
        $region55: #{tpu_custom_call.1} parent=51 // pred_region
          %s3539 = sand.u32 %s61, 1
          %s3540 = scalar_lea.sflag [#allocation7], %s3539
          %s3541 = sand.u32 %s61, 1
          %s3542 = smul.addr %s3541, 8
          %s3543 = scalar_lea.vmem [#allocation8], %s3542
          %3544 = dma.done %s3540, 128
        $region56: #{tpu_custom_call.1} parent=51 // pred_fallthru
          _
      $region52: #{tpu_custom_call.1} parent=5 // pred_fallthru
        _
    $region6: #{tpu_custom_call.1} parent=1 // loop_footer
      %s16 = sadd.s32 1, %s12
    $region7: #{tpu_custom_call.1} parent=1 // loop_footer_branch
      %11 = sbr.rel target = $region3
    $region8: #{tpu_custom_call.1} parent=1 // loop_exit
      _
    %3545 = vsyncpa [#allocation6], 1
    %s3546 = scalar_lea.sflag [#allocation6], 1
    %3547 = vsyncpa %s3546, 1
    %3548 = vsyncpa [#allocation7], 1
    %s3549 = scalar_lea.sflag [#allocation7], 1
    %3550 = vsyncpa %s3549, 1
  %3551 = vsyncmov [#allocation4]
  %s3552 = vpop.sfrf %3551
  %p3553 = scmp.eq.s32.totalorder %s3552, 0
  %p3554 = pneg %p3553
  %3556 = shalt.err (%p3554)
  %s3557 = scalar_lea.sflag [#allocation4], 1
  %3558 = vsyncmov %s3557
  %s3559 = vpop.sfrf %3558
  %p3560 = scmp.eq.s32.totalorder %s3559, 0
  %p3561 = pneg %p3560
  %3563 = shalt.err (%p3561)

</llo_original>
